<compile_context>
chip_gen: v5e
topology: v5e:2x2
jax: 0.10.0
libtpu: 0.0.40
codegen_flags: <defaults>
</compile_context>

<pallas_src>
import functools

import numpy as np

import jax
import jax.numpy as jnp
from jax.experimental import pallas as pl
from jax.experimental.pallas import tpu as pltpu


_VMEM_LIMIT_BYTES = 32 * 1024 * 1024   # safe on v5e/v6e (128 MiB) and v7x (64 MiB)
_TB_CONV = 32                          # images per grid step for the conv kernels
_TB_FC = 512                           # max rows per grid step for the FC kernel


def _round_up(x, m):
    return ((x + m - 1) // m) * m


# ----------------------------------------------------------------------------
# Pallas kernels
# ----------------------------------------------------------------------------
def _conv_pool_kernel(p_ref, w_ref, b_ref, o_ref, *, cout):
    """Fused 3x3 conv + bias + ReLU + 2x2 max-pool on a block of patch rows.

    p_ref : (R, 16*Cin) bf16  one row per *pooled* output position: the 4x4
                              stride-2 union window covering that position's
                              four pre-pool 3x3 receptive fields.
    w_ref : (16*Cin, 4*Cout)  bf16 block-diagonal weight; lane group d holds the
                              3x3 kernel scattered for pooling phase d.
    b_ref : (1, Cout) f32
    o_ref : (R, Cout) bf16
    """
    acc = jnp.dot(p_ref[...], w_ref[...], preferred_element_type=jnp.float32)
    # 2x2 max-pool == elementwise max over the 4 phase lane-groups (VPU).
    # Bias is constant over a pool window and ReLU is monotone, so
    # pool(relu(conv + b)) == relu(max_d(conv_d) + b).
    m = jnp.maximum(
        jnp.maximum(acc[:, 0 * cout:1 * cout], acc[:, 1 * cout:2 * cout]),
        jnp.maximum(acc[:, 2 * cout:3 * cout], acc[:, 3 * cout:4 * cout]),
    )
    o_ref[...] = jnp.maximum(m + b_ref[...], 0.0).astype(o_ref.dtype)


def conv_relu_pool(patches, wb, bias, *, cout, rows_per_step,
                   out_dtype=jnp.bfloat16):
    """patches: (B*Mp, 16*Cin) bf16; wb: (16*Cin, 4*Cout) bf16; bias: (1, Cout) f32."""
    rows, k = patches.shape
    n4 = wb.shape[1]
    assert wb.shape[0] == k and n4 == 4 * cout, (wb.shape, k, cout)
    assert rows_per_step % 8 == 0 and rows % 8 == 0, (rows_per_step, rows)
    return pl.pallas_call(
        functools.partial(_conv_pool_kernel, cout=cout),
        out_shape=jax.ShapeDtypeStruct((rows, cout), out_dtype),
        grid=(pl.cdiv(rows, rows_per_step),),
        in_specs=[
            pl.BlockSpec((rows_per_step, k), lambda i: (i, 0)),  # pipelined rows
            pl.BlockSpec((k, n4), lambda i: (0, 0)),             # resident weight
            pl.BlockSpec((1, cout), lambda i: (0, 0)),           # resident f32 bias
        ],
        out_specs=pl.BlockSpec((rows_per_step, cout), lambda i: (i, 0)),
        compiler_params=pltpu.CompilerParams(
            dimension_semantics=("parallel",),   # megacore-shard over row blocks
            vmem_limit_bytes=_VMEM_LIMIT_BYTES,
        ),
    )(patches, wb, bias)


def _fc_fused_kernel(x_ref, w1_ref, b1_ref, w2_ref, b2_ref, o_ref):
    h = jnp.dot(x_ref[...], w1_ref[...], preferred_element_type=jnp.float32)
    h = jnp.maximum(h + b1_ref[...], 0.0).astype(jnp.bfloat16)
    o = jnp.dot(h, w2_ref[...], preferred_element_type=jnp.float32) + b2_ref[...]
    o_ref[...] = o.astype(o_ref.dtype)


def fc_fused(x, w1, b1, w2, b2, *, rows_per_step=_TB_FC, out_dtype=jnp.float32):
    """Fused fc1 + ReLU + fc2; both weights resident, rows pipelined."""
    b, k = x.shape
    n1 = w1.shape[1]
    n2 = w2.shape[1]
    r = b if b <= rows_per_step else rows_per_step
    return pl.pallas_call(
        _fc_fused_kernel,
        out_shape=jax.ShapeDtypeStruct((b, n2), out_dtype),
        grid=(pl.cdiv(b, r),),
        in_specs=[
            pl.BlockSpec((r, k), lambda i: (i, 0)),
            pl.BlockSpec((k, n1), lambda i: (0, 0)),   # resident fc1 weight
            pl.BlockSpec((1, n1), lambda i: (0, 0)),
            pl.BlockSpec((n1, n2), lambda i: (0, 0)),  # resident fc2 weight
            pl.BlockSpec((1, n2), lambda i: (0, 0)),
        ],
        out_specs=pl.BlockSpec((r, n2), lambda i: (i, 0)),
        compiler_params=pltpu.CompilerParams(
            dimension_semantics=("parallel",),
            vmem_limit_bytes=_VMEM_LIMIT_BYTES,
        ),
    )(x, w1, b1, w2, b2)


# ----------------------------------------------------------------------------
# Wrapper-side glue: union-window patches (one row per pooled position)
# ----------------------------------------------------------------------------
def _pool_conv_patches(x_nhwc):
    """4x4 stride-2 union-window im2col grouped per pooled output position.

    x_nhwc: (B, H, W, C), H and W even.  Returns (patches, mp) where patches is
    (B*mp, 16*C) with mp = (H/2)*(W/2) rounded up to a multiple of 8; row
    b*mp + ph*(W/2) + pw holds x_pad[b, 2ph:2ph+4, 2pw:2pw+4, :] flattened in
    (di, dj, c) order -- the union of the four 3x3 receptive fields feeding the
    pooled position (ph, pw).  ~4x data expansion (vs 9x for per-phase im2col).
    """
    bsz, h, w, c = x_nhwc.shape
    ho, wo = h // 2, w // 2
    xp = jnp.pad(x_nhwc, ((0, 0), (1, 1), (1, 1), (0, 0)))
    taps = [xp[:, di:di + h:2, dj:dj + w:2, :]
            for di in range(4) for dj in range(4)]
    p = jnp.concatenate(taps, axis=-1).reshape(bsz, ho * wo, 16 * c)
    mp = _round_up(ho * wo, 8)
    if mp != ho * wo:
        p = jnp.pad(p, ((0, 0), (0, mp - ho * wo), (0, 0)))
    return p.reshape(bsz * mp, 16 * c), mp


# ----------------------------------------------------------------------------
# Parameters: PyTorch layouts + one-time conversion to kernel layouts
# ----------------------------------------------------------------------------
def _blockdiag_conv_weight(w_oihw):
    """(Cout, Cin, 3, 3) torch conv weight -> (16*Cin, 4*Cout) block matrix so
    that dot(union_window_row, Wb)[:, d*Cout:(d+1)*Cout] equals the pre-pool
    conv output for pooling phase d = 2*dh + dw."""
    w = np.asarray(w_oihw, np.float32)
    cout, cin = w.shape[0], w.shape[1]
    wb = np.zeros((16 * cin, 4 * cout), np.float32)
    for dh in range(2):
        for dw in range(2):
            d = 2 * dh + dw
            for kh in range(3):
                for kw in range(3):
                    di, dj = dh + kh, dw + kw
                    r0 = (4 * di + dj) * cin
                    wb[r0:r0 + cin, d * cout:(d + 1) * cout] = w[:, :, kh, kw].T
    return wb


def init_torch_params(key):
    """Random parameters in the PyTorch module's native layouts."""
    ks = jax.random.split(key, 8)
    s = 0.05
    return {
        "conv1_w": s * jax.random.normal(ks[0], (32, 1, 3, 3), jnp.float32),
        "conv1_b": s * jax.random.normal(ks[1], (32,), jnp.float32),
        "conv2_w": s * jax.random.normal(ks[2], (64, 32, 3, 3), jnp.float32),
        "conv2_b": s * jax.random.normal(ks[3], (64,), jnp.float32),
        "fc1_w": s * jax.random.normal(ks[4], (128, 64 * 7 * 7), jnp.float32),
        "fc1_b": s * jax.random.normal(ks[5], (128,), jnp.float32),
        "fc2_w": s * jax.random.normal(ks[6], (10, 128), jnp.float32),
        "fc2_b": s * jax.random.normal(ks[7], (10,), jnp.float32),
    }


def prepare_params(tp):
    """One-time conversion to kernel layouts: block-diagonal bf16 conv weights,
    fc1 rows permuted to NHWC (folds the NCHW view(-1, 64*7*7) flatten into the
    weight), fc2 transposed, all biases pre-cast to f32 (1, N)."""
    fc1 = np.asarray(tp["fc1_w"], np.float32).reshape(128, 64, 49)
    wfc1 = np.transpose(fc1, (2, 1, 0)).reshape(64 * 7 * 7, 128)   # row = hw*64 + c
    return {
        "wb1": jnp.asarray(_blockdiag_conv_weight(tp["conv1_w"]), jnp.bfloat16),
        "b1": jnp.asarray(tp["conv1_b"], jnp.float32).reshape(1, 32),
        "wb2": jnp.asarray(_blockdiag_conv_weight(tp["conv2_w"]), jnp.bfloat16),
        "b2": jnp.asarray(tp["conv2_b"], jnp.float32).reshape(1, 64),
        "wfc1": jnp.asarray(wfc1, jnp.bfloat16),
        "bfc1": jnp.asarray(tp["fc1_b"], jnp.float32).reshape(1, 128),
        "wfc2": jnp.asarray(np.asarray(tp["fc2_w"], np.float32).T, jnp.bfloat16),
        "bfc2": jnp.asarray(tp["fc2_b"], jnp.float32).reshape(1, 10),
    }


# ----------------------------------------------------------------------------
# Forward pass
# ----------------------------------------------------------------------------
def _images_per_step(bsz, tb):
    if bsz < 2:
        return 1
    return max(1, min(tb, bsz // 2))   # keep grid >= 2 so both v7x TCs get work


@jax.jit
def cnn_forward(x_nchw, kp):
    bsz = x_nchw.shape[0]
    x = jnp.transpose(x_nchw, (0, 2, 3, 1)).astype(jnp.bfloat16)   # (B, 28, 28, 1)

    # conv1 (3x3, pad 1) + ReLU + 2x2 max-pool: one dot per grid step.
    p1, mp1 = _pool_conv_patches(x)                                 # (B*200, 16)
    tb1 = _images_per_step(bsz, _TB_CONV)
    h1 = conv_relu_pool(p1, kp["wb1"], kp["b1"], cout=32,
                        rows_per_step=tb1 * mp1)                    # (B*200, 32)
    h1 = h1.reshape(bsz, mp1, 32)[:, :14 * 14, :].reshape(bsz, 14, 14, 32)

    # conv2 (3x3, pad 1) + ReLU + 2x2 max-pool.
    p2, mp2 = _pool_conv_patches(h1)                                # (B*56, 512)
    tb2 = _images_per_step(bsz, _TB_CONV)
    h2 = conv_relu_pool(p2, kp["wb2"], kp["b2"], cout=64,
                        rows_per_step=tb2 * mp2)                    # (B*56, 64)
    # NHWC flatten; the NCHW view(-1, 64*7*7) permutation is folded into wfc1.
    flat = h2.reshape(bsz, mp2, 64)[:, :7 * 7, :].reshape(bsz, 64 * 7 * 7)

    # fc1 + ReLU + fc2, fused in one kernel (both weights resident).
    return fc_fused(flat, kp["wfc1"], kp["bfc1"], kp["wfc2"], kp["bfc2"])


# ----------------------------------------------------------------------------
# Pure-XLA reference of the PyTorch forward (for a numerical cross-check)
# ----------------------------------------------------------------------------
def reference_forward(x_nchw, tp):
    rd = lambda a: a.astype(jnp.bfloat16).astype(jnp.float32)
    hi = jax.lax.Precision.HIGHEST

    def conv(x, w, b):
        y = jax.lax.conv_general_dilated(
            x, rd(w), window_strides=(1, 1), padding=((1, 1), (1, 1)),
            dimension_numbers=("NCHW", "OIHW", "NCHW"), precision=hi)
        return y + b.reshape(1, -1, 1, 1)

    def pool(x):
        return jax.lax.reduce_window(x, -jnp.inf, jax.lax.max,
                                     (1, 1, 2, 2), (1, 1, 2, 2), "VALID")

    h = pool(jax.nn.relu(conv(rd(x_nchw), tp["conv1_w"], tp["conv1_b"])))
    h = pool(jax.nn.relu(conv(h, tp["conv2_w"], tp["conv2_b"])))
    h = h.reshape(x_nchw.shape[0], -1)
    h = jax.nn.relu(jnp.dot(h, rd(tp["fc1_w"]).T, precision=hi) + tp["fc1_b"])
    return jnp.dot(h, rd(tp["fc2_w"]).T, precision=hi) + tp["fc2_b"]


if __name__ == "__main__":
    key = jax.random.PRNGKey(0)
    kx, kparam = jax.random.split(key)

    # 28x28 spatial size is required by fc1 (64*7*7 after two 2x2 pools).
    x = jax.random.normal(kx, (2, 1, 28, 28), jnp.float32)
    torch_params = init_torch_params(kparam)
    kernel_params = prepare_params(torch_params)

    logits = cnn_forward(x, kernel_params)
    jax.block_until_ready(logits)
    assert logits.shape == (2, 10), logits.shape

    # Numerical cross-check against the XLA reference (bf16-rounded weights).
    ref = reference_forward(x, torch_params)
    np.testing.assert_allclose(np.asarray(logits, np.float32),
                               np.asarray(ref, np.float32),
                               rtol=3e-2, atol=3e-2)
    print("KERNEL_OK")
</pallas_src>

<mosaic_0001>
module attributes {stable_mosaic.version = 11 : i64} {
  func.func @_conv_pool_kernel(%arg0: i32, %arg1: memref<200x16xbf16, #tpu.memory_space<vmem>>, %arg2: memref<16x128xbf16, #tpu.memory_space<vmem>>, %arg3: memref<1x32xf32, #tpu.memory_space<vmem>>, %arg4: memref<200x32xbf16, #tpu.memory_space<vmem>>) attributes {dimension_semantics = [#tpu.dimension_semantics<parallel>], iteration_bounds = array<i64: 2>, scalar_prefetch = 0 : i64, scratch_operands = 0 : i64, tpu.core_type = #tpu.core_type<tc>, window_params = [{transform_indices = @transform_0, window_bounds = array<i64: 200, 16>}, {pipeline_mode = #tpu.pipeline_mode<synchronous>, transform_indices = @transform_1, window_bounds = array<i64: 16, 128>}, {pipeline_mode = #tpu.pipeline_mode<synchronous>, transform_indices = @transform_2, window_bounds = array<i64: 1, 32>}, {transform_indices = @transform_3, window_bounds = array<i64: 200, 32>}]} {
    %c0 = arith.constant 0 : index
    %c0_0 = arith.constant 0 : index
    %0 = vector.load %arg1[%c0, %c0_0] : memref<200x16xbf16, #tpu.memory_space<vmem>>, vector<200x16xbf16>
    %c0_1 = arith.constant 0 : index
    %c0_2 = arith.constant 0 : index
    %1 = vector.load %arg2[%c0_1, %c0_2] : memref<16x128xbf16, #tpu.memory_space<vmem>>, vector<16x128xbf16>
    %cst = arith.constant dense<0.000000e+00> : vector<200x128xf32>
    %2 = tpu.matmul %0, %1, %cst {dimension_numbers = #tpu.dot_dimension_numbers<[1], [0], [0], [1], [0, 0, 1, 1], [], []>} : vector<200x16xbf16>, vector<16x128xbf16>, vector<200x128xf32> -> vector<200x128xf32>
    %3 = vector.extract_strided_slice %2 {offsets = [0, 0], sizes = [200, 32], strides = [1, 1]} : vector<200x128xf32> to vector<200x32xf32>
    %4 = vector.extract_strided_slice %2 {offsets = [0, 32], sizes = [200, 32], strides = [1, 1]} : vector<200x128xf32> to vector<200x32xf32>
    %5 = arith.maximumf %3, %4 : vector<200x32xf32>
    %6 = vector.extract_strided_slice %2 {offsets = [0, 64], sizes = [200, 32], strides = [1, 1]} : vector<200x128xf32> to vector<200x32xf32>
    %7 = vector.extract_strided_slice %2 {offsets = [0, 96], sizes = [200, 32], strides = [1, 1]} : vector<200x128xf32> to vector<200x32xf32>
    %8 = arith.maximumf %6, %7 : vector<200x32xf32>
    %9 = arith.maximumf %5, %8 : vector<200x32xf32>
    %c0_3 = arith.constant 0 : index
    %c0_4 = arith.constant 0 : index
    %10 = vector.load %arg3[%c0_3, %c0_4] : memref<1x32xf32, #tpu.memory_space<vmem>>, vector<1x32xf32>
    %11 = vector.broadcast %10 : vector<1x32xf32> to vector<200x32xf32>
    %12 = arith.addf %9, %11 : vector<200x32xf32>
    %cst_5 = arith.constant 0.000000e+00 : f32
    %13 = vector.broadcast %cst_5 : f32 to vector<200x32xf32>
    %14 = arith.maximumf %12, %13 : vector<200x32xf32>
    %15 = arith.truncf %14 : vector<200x32xf32> to vector<200x32xbf16>
    %c0_6 = arith.constant 0 : index
    %c0_7 = arith.constant 0 : index
    %16 = vector.load %arg4[%c0_6, %c0_7] : memref<200x32xbf16, #tpu.memory_space<vmem>>, vector<200x32xbf16>
    tpu.vector_store %arg4[%c0_6, %c0_7], %15 {strides = array<i32>} : memref<200x32xbf16, #tpu.memory_space<vmem>>, vector<200x32xbf16>,
    return
  }
  func.func @transform_0(%arg0: i32) -> (i32, i32) {
    %c0_i32 = arith.constant 0 : i32
    %c0_i32_0 = arith.constant 0 : i32
    return %arg0, %c0_i32 : i32, i32
  }
  func.func @transform_1(%arg0: i32) -> (i32, i32) {
    %c0_i32 = arith.constant 0 : i32
    %c0_i32_0 = arith.constant 0 : i32
    %c0_i32_1 = arith.constant 0 : i32
    return %c0_i32, %c0_i32_0 : i32, i32
  }
  func.func @transform_2(%arg0: i32) -> (i32, i32) {
    %c0_i32 = arith.constant 0 : i32
    %c0_i32_0 = arith.constant 0 : i32
    %c0_i32_1 = arith.constant 0 : i32
    return %c0_i32, %c0_i32_0 : i32, i32
  }
  func.func @transform_3(%arg0: i32) -> (i32, i32) {
    %c0_i32 = arith.constant 0 : i32
    %c0_i32_0 = arith.constant 0 : i32
    return %arg0, %c0_i32 : i32, i32
  }
}

module attributes {stable_mosaic.version = 11 : i64} {
  func.func @_conv_pool_kernel(%arg0: i32, %arg1: memref<56x512xbf16, #tpu.memory_space<vmem>>, %arg2: memref<512x256xbf16, #tpu.memory_space<vmem>>, %arg3: memref<1x64xf32, #tpu.memory_space<vmem>>, %arg4: memref<56x64xbf16, #tpu.memory_space<vmem>>) attributes {dimension_semantics = [#tpu.dimension_semantics<parallel>], iteration_bounds = array<i64: 2>, scalar_prefetch = 0 : i64, scratch_operands = 0 : i64, tpu.core_type = #tpu.core_type<tc>, window_params = [{transform_indices = @transform_0, window_bounds = array<i64: 56, 512>}, {pipeline_mode = #tpu.pipeline_mode<synchronous>, transform_indices = @transform_1, window_bounds = array<i64: 512, 256>}, {pipeline_mode = #tpu.pipeline_mode<synchronous>, transform_indices = @transform_2, window_bounds = array<i64: 1, 64>}, {transform_indices = @transform_3, window_bounds = array<i64: 56, 64>}]} {
    %c0 = arith.constant 0 : index
    %c0_0 = arith.constant 0 : index
    %0 = vector.load %arg1[%c0, %c0_0] : memref<56x512xbf16, #tpu.memory_space<vmem>>, vector<56x512xbf16>
    %c0_1 = arith.constant 0 : index
    %c0_2 = arith.constant 0 : index
    %1 = vector.load %arg2[%c0_1, %c0_2] : memref<512x256xbf16, #tpu.memory_space<vmem>>, vector<512x256xbf16>
    %cst = arith.constant dense<0.000000e+00> : vector<56x256xf32>
    %2 = tpu.matmul %0, %1, %cst {dimension_numbers = #tpu.dot_dimension_numbers<[1], [0], [0], [1], [0, 0, 1, 1], [], []>} : vector<56x512xbf16>, vector<512x256xbf16>, vector<56x256xf32> -> vector<56x256xf32>
    %3 = vector.extract_strided_slice %2 {offsets = [0, 0], sizes = [56, 64], strides = [1, 1]} : vector<56x256xf32> to vector<56x64xf32>
    %4 = vector.extract_strided_slice %2 {offsets = [0, 64], sizes = [56, 64], strides = [1, 1]} : vector<56x256xf32> to vector<56x64xf32>
    %5 = arith.maximumf %3, %4 : vector<56x64xf32>
    %6 = vector.extract_strided_slice %2 {offsets = [0, 128], sizes = [56, 64], strides = [1, 1]} : vector<56x256xf32> to vector<56x64xf32>
    %7 = vector.extract_strided_slice %2 {offsets = [0, 192], sizes = [56, 64], strides = [1, 1]} : vector<56x256xf32> to vector<56x64xf32>
    %8 = arith.maximumf %6, %7 : vector<56x64xf32>
    %9 = arith.maximumf %5, %8 : vector<56x64xf32>
    %c0_3 = arith.constant 0 : index
    %c0_4 = arith.constant 0 : index
    %10 = vector.load %arg3[%c0_3, %c0_4] : memref<1x64xf32, #tpu.memory_space<vmem>>, vector<1x64xf32>
    %11 = vector.broadcast %10 : vector<1x64xf32> to vector<56x64xf32>
    %12 = arith.addf %9, %11 : vector<56x64xf32>
    %cst_5 = arith.constant 0.000000e+00 : f32
    %13 = vector.broadcast %cst_5 : f32 to vector<56x64xf32>
    %14 = arith.maximumf %12, %13 : vector<56x64xf32>
    %15 = arith.truncf %14 : vector<56x64xf32> to vector<56x64xbf16>
    %c0_6 = arith.constant 0 : index
    %c0_7 = arith.constant 0 : index
    %16 = vector.load %arg4[%c0_6, %c0_7] : memref<56x64xbf16, #tpu.memory_space<vmem>>, vector<56x64xbf16>
    tpu.vector_store %arg4[%c0_6, %c0_7], %15 {strides = array<i32>} : memref<56x64xbf16, #tpu.memory_space<vmem>>, vector<56x64xbf16>,
    return
  }
  func.func @transform_0(%arg0: i32) -> (i32, i32) {
    %c0_i32 = arith.constant 0 : i32
    %c0_i32_0 = arith.constant 0 : i32
    return %arg0, %c0_i32 : i32, i32
  }
  func.func @transform_1(%arg0: i32) -> (i32, i32) {
    %c0_i32 = arith.constant 0 : i32
    %c0_i32_0 = arith.constant 0 : i32
    %c0_i32_1 = arith.constant 0 : i32
    return %c0_i32, %c0_i32_0 : i32, i32
  }
  func.func @transform_2(%arg0: i32) -> (i32, i32) {
    %c0_i32 = arith.constant 0 : i32
    %c0_i32_0 = arith.constant 0 : i32
    %c0_i32_1 = arith.constant 0 : i32
    return %c0_i32, %c0_i32_0 : i32, i32
  }
  func.func @transform_3(%arg0: i32) -> (i32, i32) {
    %c0_i32 = arith.constant 0 : i32
    %c0_i32_0 = arith.constant 0 : i32
    return %arg0, %c0_i32 : i32, i32
  }
}

module attributes {stable_mosaic.version = 11 : i64} {
  func.func @_fc_fused_kernel(%arg0: i32, %arg1: memref<2x3136xbf16, #tpu.memory_space<vmem>>, %arg2: memref<3136x128xbf16, #tpu.memory_space<vmem>>, %arg3: memref<1x128xf32, #tpu.memory_space<vmem>>, %arg4: memref<128x10xbf16, #tpu.memory_space<vmem>>, %arg5: memref<1x10xf32, #tpu.memory_space<vmem>>, %arg6: memref<2x10xf32, #tpu.memory_space<vmem>>) attributes {dimension_semantics = [#tpu.dimension_semantics<parallel>], iteration_bounds = array<i64: 1>, scalar_prefetch = 0 : i64, scratch_operands = 0 : i64, tpu.core_type = #tpu.core_type<tc>, window_params = [{transform_indices = @transform_0, window_bounds = array<i64: 2, 3136>}, {pipeline_mode = #tpu.pipeline_mode<synchronous>, transform_indices = @transform_1, window_bounds = array<i64: 3136, 128>}, {pipeline_mode = #tpu.pipeline_mode<synchronous>, transform_indices = @transform_2, window_bounds = array<i64: 1, 128>}, {pipeline_mode = #tpu.pipeline_mode<synchronous>, transform_indices = @transform_3, window_bounds = array<i64: 128, 10>}, {pipeline_mode = #tpu.pipeline_mode<synchronous>, transform_indices = @transform_4, window_bounds = array<i64: 1, 10>}, {transform_indices = @transform_5, window_bounds = array<i64: 2, 10>}]} {
    %c0 = arith.constant 0 : index
    %c0_0 = arith.constant 0 : index
    %0 = vector.load %arg1[%c0, %c0_0] : memref<2x3136xbf16, #tpu.memory_space<vmem>>, vector<2x3136xbf16>
    %c0_1 = arith.constant 0 : index
    %c0_2 = arith.constant 0 : index
    %1 = vector.load %arg2[%c0_1, %c0_2] : memref<3136x128xbf16, #tpu.memory_space<vmem>>, vector<3136x128xbf16>
    %cst = arith.constant dense<0.000000e+00> : vector<2x128xf32>
    %2 = tpu.matmul %0, %1, %cst {dimension_numbers = #tpu.dot_dimension_numbers<[1], [0], [0], [1], [0, 0, 1, 1], [], []>} : vector<2x3136xbf16>, vector<3136x128xbf16>, vector<2x128xf32> -> vector<2x128xf32>
    %c0_3 = arith.constant 0 : index
    %c0_4 = arith.constant 0 : index
    %3 = vector.load %arg3[%c0_3, %c0_4] : memref<1x128xf32, #tpu.memory_space<vmem>>, vector<1x128xf32>
    %4 = vector.broadcast %3 : vector<1x128xf32> to vector<2x128xf32>
    %5 = arith.addf %2, %4 : vector<2x128xf32>
    %cst_5 = arith.constant 0.000000e+00 : f32
    %6 = vector.broadcast %cst_5 : f32 to vector<2x128xf32>
    %7 = arith.maximumf %5, %6 : vector<2x128xf32>
    %8 = arith.truncf %7 : vector<2x128xf32> to vector<2x128xbf16>
    %c0_6 = arith.constant 0 : index
    %c0_7 = arith.constant 0 : index
    %9 = vector.load %arg4[%c0_6, %c0_7] : memref<128x10xbf16, #tpu.memory_space<vmem>>, vector<128x10xbf16>
    %cst_8 = arith.constant dense<0.000000e+00> : vector<2x10xf32>
    %10 = tpu.matmul %8, %9, %cst_8 {dimension_numbers = #tpu.dot_dimension_numbers<[1], [0], [0], [1], [0, 0, 1, 1], [], []>} : vector<2x128xbf16>, vector<128x10xbf16>, vector<2x10xf32> -> vector<2x10xf32>
    %c0_9 = arith.constant 0 : index
    %c0_10 = arith.constant 0 : index
    %11 = vector.load %arg5[%c0_9, %c0_10] : memref<1x10xf32, #tpu.memory_space<vmem>>, vector<1x10xf32>
    %12 = vector.broadcast %11 : vector<1x10xf32> to vector<2x10xf32>
    %13 = arith.addf %10, %12 : vector<2x10xf32>
    %c0_11 = arith.constant 0 : index
    %c0_12 = arith.constant 0 : index
    %14 = vector.load %arg6[%c0_11, %c0_12] : memref<2x10xf32, #tpu.memory_space<vmem>>, vector<2x10xf32>
    tpu.vector_store %arg6[%c0_11, %c0_12], %13 {strides = array<i32>} : memref<2x10xf32, #tpu.memory_space<vmem>>, vector<2x10xf32>,
    return
  }
  func.func @transform_0(%arg0: i32) -> (i32, i32) {
    %c0_i32 = arith.constant 0 : i32
    %c0_i32_0 = arith.constant 0 : i32
    return %arg0, %c0_i32 : i32, i32
  }
  func.func @transform_1(%arg0: i32) -> (i32, i32) {
    %c0_i32 = arith.constant 0 : i32
    %c0_i32_0 = arith.constant 0 : i32
    %c0_i32_1 = arith.constant 0 : i32
    return %c0_i32, %c0_i32_0 : i32, i32
  }
  func.func @transform_2(%arg0: i32) -> (i32, i32) {
    %c0_i32 = arith.constant 0 : i32
    %c0_i32_0 = arith.constant 0 : i32
    %c0_i32_1 = arith.constant 0 : i32
    return %c0_i32, %c0_i32_0 : i32, i32
  }
  func.func @transform_3(%arg0: i32) -> (i32, i32) {
    %c0_i32 = arith.constant 0 : i32
    %c0_i32_0 = arith.constant 0 : i32
    %c0_i32_1 = arith.constant 0 : i32
    return %c0_i32, %c0_i32_0 : i32, i32
  }
  func.func @transform_4(%arg0: i32) -> (i32, i32) {
    %c0_i32 = arith.constant 0 : i32
    %c0_i32_0 = arith.constant 0 : i32
    %c0_i32_1 = arith.constant 0 : i32
    return %c0_i32, %c0_i32_0 : i32, i32
  }
  func.func @transform_5(%arg0: i32) -> (i32, i32) {
    %c0_i32 = arith.constant 0 : i32
    %c0_i32_0 = arith.constant 0 : i32
    return %arg0, %c0_i32 : i32, i32
  }
}

</mosaic_0001>

<llo_original>
// kernel: cnn_forward.3
$region0: #{cnn_forward.3}
  #allocation0 [shape = 'u32[]', space=smem, size = 0x4, offset = 0x4, fixed_abs, tag = 'smem constant byte address 0x4 - core index']
  #allocation1 [shape = 'u32[72,128]{1,0:T(1,128)}', space=vmem, size = 0x9000, scoped, tag = 'internal scratch']
  %s0 = inlined_call_operand.vmem [shape: bf16[400,16], index: 0, kind: input, shape index: {}]
  %s1 = inlined_call_operand.vmem [shape: bf16[16,128], index: 1, kind: input, shape index: {}]
  %s2 = inlined_call_operand.vmem [shape: f32[1,32], index: 2, kind: input, shape index: {}]
  %s3 = inlined_call_operand.vmem [shape: bf16[400,32], index: 3, kind: output, shape index: {}]
  %s4 = sld [smem:[#allocation0]]
  $region45: #{cnn_forward.3} parent=0
    _
  %s6 = ssub.s32 1, %s4
  %s7 = scalar_select 0, %s6, %s4
  loop: start=0, step=1, limit=4
  $region2: #{cnn_forward.3} parent=0 // loop_pre_header
    _
  $region3: #{cnn_forward.3} parent=0 // loop_header
    %s9 = sphi 0, %s13
    %p10 = scmp.ge.s32.totalorder %s9, 4
    %s19 = sphi 0, %s21
    %s22 = sphi 0, %s19
    %s23 = sphi 0, %s22
    %s39 = sphi 0, %s23
    %s43 = sphi 0, %s43
    %s45 = sphi 0, %s43
    %s46 = sphi 0, %s45
    %s60 = sphi 0, %s46
    %s64 = sphi 0, %s64
    %s66 = sphi 0, %s64
    %s67 = sphi 0, %s66
    %s81 = sphi 0, %s67
    %s87 = sphi 0, %s89
    %s90 = sphi 0, %s87
    %s91 = sphi 0, %s90
    %s107 = sphi 0, %s91
  $region4: #{cnn_forward.3} parent=0 // loop_header_branch
    %12 = sbr.rel (%p10) target = $region8
  $region5: #{cnn_forward.3} parent=0 // loop_body
    %s14 = ssub.s32 %s9, 1
    %s15 = ssub.s32 %s9, 2
    %s16 = sadd.s32 %s9, 1
    %s17 = ssub.s32 %s9, %s16
    %p18 = scmp.eq.s32.totalorder %s17, 0
    %s20 = sadd.s32 %s19, 1
    %s21 = scalar_select %p18, %s19, %s20
    %p24 = pneg %p18
    %p25 = scmp.eq.s32.totalorder %s9, 1
    %p26 = por %p24, %p25
    %p27 = scmp.ne.s32.totalorder %s19, %s22
    %p28 = scmp.eq.s32.totalorder %s9, 0
    %p29 = por %p27, %p28
    %p30 = scmp.ne.s32.totalorder %s19, %s22
    %p31 = scmp.eq.s32.totalorder %s14, 1
    %p32 = por %p30, %p31
    %p33 = scmp.ne.s32.totalorder %s22, %s23
    %p34 = scmp.eq.s32.totalorder %s14, 0
    %p35 = por %p33, %p34
    %p36 = scmp.ne.s32.totalorder %s22, %s23
    %p37 = scmp.eq.s32.totalorder %s15, 1
    %p38 = por %p36, %p37
    %p40 = scmp.ne.s32.totalorder %s23, %s39
    %p41 = scmp.eq.s32.totalorder %s15, 0
    %p42 = por %p40, %p41
    %s44 = sadd.s32 %s43, 1
    %p47 = scmp.eq.s32.totalorder %s9, 1
    %p48 = scmp.ne.s32.totalorder %s43, %s45
    %p49 = scmp.eq.s32.totalorder %s9, 0
    %p50 = por %p48, %p49
    %p51 = scmp.ne.s32.totalorder %s43, %s45
    %p52 = scmp.eq.s32.totalorder %s14, 1
    %p53 = por %p51, %p52
    %p54 = scmp.ne.s32.totalorder %s45, %s46
    %p55 = scmp.eq.s32.totalorder %s14, 0
    %p56 = por %p54, %p55
    %p57 = scmp.ne.s32.totalorder %s45, %s46
    %p58 = scmp.eq.s32.totalorder %s15, 1
    %p59 = por %p57, %p58
    %p61 = scmp.ne.s32.totalorder %s46, %s60
    %p62 = scmp.eq.s32.totalorder %s15, 0
    %p63 = por %p61, %p62
    %s65 = sadd.s32 %s64, 1
    %p68 = scmp.eq.s32.totalorder %s9, 1
    %p69 = scmp.ne.s32.totalorder %s64, %s66
    %p70 = scmp.eq.s32.totalorder %s9, 0
    %p71 = por %p69, %p70
    %p72 = scmp.ne.s32.totalorder %s64, %s66
    %p73 = scmp.eq.s32.totalorder %s14, 1
    %p74 = por %p72, %p73
    %p75 = scmp.ne.s32.totalorder %s66, %s67
    %p76 = scmp.eq.s32.totalorder %s14, 0
    %p77 = por %p75, %p76
    %p78 = scmp.ne.s32.totalorder %s66, %s67
    %p79 = scmp.eq.s32.totalorder %s15, 1
    %p80 = por %p78, %p79
    %p82 = scmp.ne.s32.totalorder %s67, %s81
    %p83 = scmp.eq.s32.totalorder %s15, 0
    %p84 = por %p82, %p83
    %s85 = ssub.s32 %s9, %s16
    %p86 = scmp.eq.s32.totalorder %s85, 0
    %s88 = sadd.s32 %s87, 1
    %s89 = scalar_select %p86, %s87, %s88
    %p92 = pneg %p86
    %p93 = scmp.eq.s32.totalorder %s9, 1
    %p94 = por %p92, %p93
    %p95 = scmp.ne.s32.totalorder %s87, %s90
    %p96 = scmp.eq.s32.totalorder %s9, 0
    %p97 = por %p95, %p96
    %p98 = scmp.ne.s32.totalorder %s87, %s90
    %p99 = scmp.eq.s32.totalorder %s14, 1
    %p100 = por %p98, %p99
    %p101 = scmp.ne.s32.totalorder %s90, %s91
    %p102 = scmp.eq.s32.totalorder %s14, 0
    %p103 = por %p101, %p102
    %p104 = scmp.ne.s32.totalorder %s90, %s91
    %p105 = scmp.eq.s32.totalorder %s15, 1
    %p106 = por %p104, %p105
    %p108 = scmp.ne.s32.totalorder %s91, %s107
    %p109 = scmp.eq.s32.totalorder %s15, 0
    %p110 = por %p108, %p109
    %p111 = scmp.le.s32.totalorder 1, %s9
    %p112 = scmp.lt.s32.totalorder %s9, 3
    %p113 = pnand %p111, %p112
    %p114 = pneg %p113
    // Predicated region
    $region9: #{cnn_forward.3} parent=5 // pred_check
      _
    $region10: #{cnn_forward.3} parent=5 // pred_check_branch
      %116 = sbr.rel (%p113) target = $region12
    $region11: #{cnn_forward.3} parent=5 // pred_region
      %s117 = ssub.s32 %s9, 1
      // Predicated region
      $region13: #{cnn_forward.3} parent=11 // pred_check
        %p118 = pneg %p56
      $region14: #{cnn_forward.3} parent=11 // pred_check_branch
        %120 = sbr.rel (%p118) target = $region16
      $region15: #{cnn_forward.3} parent=11 // pred_region
        _
      $region16: #{cnn_forward.3} parent=11 // pred_fallthru
        _
      // Predicated region
      $region17: #{cnn_forward.3} parent=11 // pred_check
        %p121 = pneg %p77
      $region18: #{cnn_forward.3} parent=11 // pred_check_branch
        %123 = sbr.rel (%p121) target = $region20
      $region19: #{cnn_forward.3} parent=11 // pred_region
        _
      $region20: #{cnn_forward.3} parent=11 // pred_fallthru
        _
    $region12: #{cnn_forward.3} parent=5 // pred_fallthru
      _
    %p124 = scmp.lt.s32.totalorder %s9, 2
    // Predicated region
    $region21: #{cnn_forward.3} parent=5 // pred_check
      %p125 = pneg %p124
    $region22: #{cnn_forward.3} parent=5 // pred_check_branch
      %127 = sbr.rel (%p125) target = $region24
    $region23: #{cnn_forward.3} parent=5 // pred_region
      // Predicated region
      $region25: #{cnn_forward.3} parent=23 // pred_check
        %p128 = pneg %p29
      $region26: #{cnn_forward.3} parent=23 // pred_check_branch
        %130 = sbr.rel (%p128) target = $region28
      $region27: #{cnn_forward.3} parent=23 // pred_region
        %s131 = smul.u32 25, %s9
        %p132 = scmp.lt.s32.totalorder %s131, 49
        %s133 = scalar_select %p132, %s131, 49
        %s134 = smul.addr %s133, 4
        %s135 = scalar_lea.vmem %s0, %s134
        %s136 = smul.u32 25, %s9
      $region28: #{cnn_forward.3} parent=23 // pred_fallthru
        _
    $region24: #{cnn_forward.3} parent=5 // pred_fallthru
      _
    %p137 = scmp.le.s32.totalorder 1, %s9
    %p138 = scmp.lt.s32.totalorder %s9, 3
    %p139 = pnand %p137, %p138
    %p140 = pneg %p139
    // Predicated region
    $region29: #{cnn_forward.3} parent=5 // pred_check
      _
    $region30: #{cnn_forward.3} parent=5 // pred_check_branch
      %142 = sbr.rel (%p139) target = $region32
    $region31: #{cnn_forward.3} parent=5 // pred_region
      %s143 = ssub.s32 %s9, 1
      %s144 = smul.u32 25, %s14
      %p145 = scmp.lt.s32.totalorder %s144, 49
      %s146 = scalar_select %p145, %s144, 49
      %s147 = smul.addr %s146, 4
      %s148 = scalar_lea.vmem %s0, %s147
      %p149 = pneg %p35
      %p150 = pneg %p32
      %p151 = pneg %p56
      %p152 = pneg %p53
      %p153 = pneg %p77
      %p154 = pneg %p74
      %p155 = pneg %p103
      %p156 = pneg %p100
      %s157 = smul.u32 25, %s14
      %p158 = scmp.lt.s32.totalorder %s157, 49
      %s159 = scalar_select %p158, %s157, 49
      %s160 = smul.addr %s159, 4
      %s161 = scalar_lea.vmem %s3, %s160
      %s162 = smul.u32 25, %s14
      %p163 = scmp.lt.s32.totalorder %s162, 49
      %s164 = scalar_select %p163, %s162, 49
      %s165 = smul.addr %s164, 4
      %s166 = scalar_lea.vmem %s0, %s165
      %s167 = smul.u32 25, %s14
      %s168 = smul.u32 25, %s14
      %p169 = scmp.lt.s32.totalorder %s168, 49
      %s170 = scalar_select %p169, %s168, 49
      %s171 = smul.addr %s170, 4
      %s172 = scalar_lea.vmem %s3, %s171
      %s173 = smul.u32 25, %s14
      %v175 = vld [vmem:[%s166] sm:$0xf]
      %v176 = vld [vmem:[%s166 + $0x4] sm:$0xf]
      %v177 = vld [vmem:[%s166 + $0x8] sm:$0xf]
      %v178 = vld [vmem:[%s166 + $0xc] sm:$0xf]
      %v179 = vld [vmem:[%s166 + $0x10] sm:$0xf]
      %v180 = vld [vmem:[%s166 + $0x14] sm:$0xf]
      %v181 = vld [vmem:[%s166 + $0x18] sm:$0xf]
      %v182 = vld [vmem:[%s166 + $0x1c] sm:$0xf]
      %v183 = vld [vmem:[%s166 + $0x20] sm:$0xf]
      %v184 = vld [vmem:[%s166 + $0x24] sm:$0xf]
      %v185 = vld [vmem:[%s166 + $0x28] sm:$0xf]
      %v186 = vld [vmem:[%s166 + $0x2c] sm:$0xf]
      %v187 = vld [vmem:[%s166 + $0x30] sm:$0xf]
      %v188 = vld [vmem:[%s166 + $0x34] sm:$0xf]
      %v189 = vld [vmem:[%s166 + $0x38] sm:$0xf]
      %v190 = vld [vmem:[%s166 + $0x3c] sm:$0xf]
      %v191 = vld [vmem:[%s166 + $0x40] sm:$0xf]
      %v192 = vld [vmem:[%s166 + $0x44] sm:$0xf]
      %v193 = vld [vmem:[%s166 + $0x48] sm:$0xf]
      %v194 = vld [vmem:[%s166 + $0x4c] sm:$0xf]
      %v195 = vld [vmem:[%s166 + $0x50] sm:$0xf]
      %v196 = vld [vmem:[%s166 + $0x54] sm:$0xf]
      %v197 = vld [vmem:[%s166 + $0x58] sm:$0xf]
      %v198 = vld [vmem:[%s166 + $0x5c] sm:$0xf]
      %v199 = vld [vmem:[%s166 + $0x60] sm:$0xf]
      %v200 = vld [vmem:[%s1] sm:$0xf]
      %v201 = vld [vmem:[%s1 + $0x4] sm:$0xf]
      %v227 = vunpack.c.l.b16 %v175
      %v228 = vunpack.c.l.b16 %v176
      %v229 = vunpack.c.l.b16 %v177
      %v230 = vunpack.c.l.b16 %v178
      %v231 = vunpack.c.l.b16 %v179
      %v232 = vunpack.c.l.b16 %v180
      %v233 = vunpack.c.l.b16 %v181
      %v234 = vunpack.c.l.b16 %v182
      %v235 = vunpack.c.l.b16 %v183
      %v236 = vunpack.c.l.b16 %v184
      %v237 = vunpack.c.l.b16 %v185
      %v238 = vunpack.c.l.b16 %v186
      %v239 = vunpack.c.l.b16 %v187
      %v240 = vunpack.c.l.b16 %v188
      %v241 = vunpack.c.l.b16 %v189
      %v242 = vunpack.c.l.b16 %v190
      %v243 = vunpack.c.l.b16 %v191
      %v244 = vunpack.c.l.b16 %v192
      %v245 = vunpack.c.l.b16 %v193
      %v246 = vunpack.c.l.b16 %v194
      %v247 = vunpack.c.l.b16 %v195
      %v248 = vunpack.c.l.b16 %v196
      %v249 = vunpack.c.l.b16 %v197
      %v250 = vunpack.c.l.b16 %v198
      %v251 = vunpack.c.l.b16 %v199
      %v252 = vpack.c.b16 %v228, %v227
      %v253 = vpack.c.b16 %v230, %v229
      %v254 = vpack.c.b16 %v232, %v231
      %v255 = vpack.c.b16 %v234, %v233
      %v256 = vpack.c.b16 %v236, %v235
      %v257 = vpack.c.b16 %v238, %v237
      %v258 = vpack.c.b16 %v240, %v239
      %v259 = vpack.c.b16 %v242, %v241
      %v260 = vpack.c.b16 %v244, %v243
      %v261 = vpack.c.b16 %v246, %v245
      %v262 = vpack.c.b16 %v248, %v247
      %v263 = vpack.c.b16 %v250, %v249
      %v264 = vpack.c.b16 %v251, %v251
      %v267 = vunpack.c.l.b16 %v200
      %v268 = vunpack.c.l.b16 %v201
      %v269 = vpack.c.b16 %v268, %v267
      %vm271 = vcmask 130048
      %v273 = vsel %vm271, %v252, 0
      %v276 = vsel %vm271, %v253, 0
      %v279 = vsel %vm271, %v254, 0
      %v282 = vsel %vm271, %v255, 0
      %v285 = vsel %vm271, %v256, 0
      %v288 = vsel %vm271, %v257, 0
      %v291 = vsel %vm271, %v258, 0
      %v294 = vsel %vm271, %v259, 0
      %v297 = vsel %vm271, %v260, 0
      %v300 = vsel %vm271, %v261, 0
      %v303 = vsel %vm271, %v262, 0
      %v306 = vsel %vm271, %v263, 0
      %v309 = vsel %vm271, %v264, 0
      %311 = vmatpush.bf16.msra.mxu0 0
      %312 = vmatpush.bf16.msra.mxu0 0
      %313 = vmatpush.bf16.msra.mxu0 0
      %314 = vmatpush.bf16.msra.mxu0 0
      %315 = vmatpush.bf16.msra.mxu0 0
      %316 = vmatpush.bf16.msra.mxu0 0
      %317 = vmatpush.bf16.msra.mxu0 0
      %318 = vmatpush.bf16.msra.mxu0 %v269
      %319 = vmatmul.bf16.gmra.mxu0 %v273
      %v320 = vpop.f32.mrf.mxu0
      %v321 = vadd.f32 0.0, %v320
      %v322 = vpop.f32.mrf.mxu0
      %v323 = vadd.f32 0.0, %v322
      %324 = vmatmul.bf16.gmra.mxu0 %v276
      %v325 = vpop.f32.mrf.mxu0
      %v326 = vadd.f32 0.0, %v325
      %v327 = vpop.f32.mrf.mxu0
      %v328 = vadd.f32 0.0, %v327
      %329 = vmatmul.bf16.gmra.mxu0 %v279
      %v330 = vpop.f32.mrf.mxu0
      %v331 = vadd.f32 0.0, %v330
      %v332 = vpop.f32.mrf.mxu0
      %v333 = vadd.f32 0.0, %v332
      %334 = vmatmul.bf16.gmra.mxu0 %v282
      %v335 = vpop.f32.mrf.mxu0
      %v336 = vadd.f32 0.0, %v335
      %v337 = vpop.f32.mrf.mxu0
      %v338 = vadd.f32 0.0, %v337
      %339 = vmatmul.bf16.gmra.mxu0 %v285
      %v340 = vpop.f32.mrf.mxu0
      %v341 = vadd.f32 0.0, %v340
      %v342 = vpop.f32.mrf.mxu0
      %v343 = vadd.f32 0.0, %v342
      %344 = vmatmul.bf16.gmra.mxu0 %v288
      %v345 = vpop.f32.mrf.mxu0
      %v346 = vadd.f32 0.0, %v345
      %v347 = vpop.f32.mrf.mxu0
      %v348 = vadd.f32 0.0, %v347
      %349 = vmatmul.bf16.gmra.mxu0 %v291
      %v350 = vpop.f32.mrf.mxu0
      %v351 = vadd.f32 0.0, %v350
      %v352 = vpop.f32.mrf.mxu0
      %v353 = vadd.f32 0.0, %v352
      %354 = vmatmul.bf16.gmra.mxu0 %v294
      %v355 = vpop.f32.mrf.mxu0
      %v356 = vadd.f32 0.0, %v355
      %v357 = vpop.f32.mrf.mxu0
      %v358 = vadd.f32 0.0, %v357
      %359 = vmatmul.bf16.gmra.mxu0 %v297
      %v360 = vpop.f32.mrf.mxu0
      %v361 = vadd.f32 0.0, %v360
      %v362 = vpop.f32.mrf.mxu0
      %v363 = vadd.f32 0.0, %v362
      %364 = vmatmul.bf16.gmra.mxu0 %v300
      %v365 = vpop.f32.mrf.mxu0
      %v366 = vadd.f32 0.0, %v365
      %v367 = vpop.f32.mrf.mxu0
      %v368 = vadd.f32 0.0, %v367
      %369 = vmatmul.bf16.gmra.mxu0 %v303
      %v370 = vpop.f32.mrf.mxu0
      %v371 = vadd.f32 0.0, %v370
      %v372 = vpop.f32.mrf.mxu0
      %v373 = vadd.f32 0.0, %v372
      %374 = vmatmul.bf16.gmra.mxu0 %v306
      %v375 = vpop.f32.mrf.mxu0
      %v376 = vadd.f32 0.0, %v375
      %v377 = vpop.f32.mrf.mxu0
      %v378 = vadd.f32 0.0, %v377
      %379 = vmatmul.bf16.gmra.mxu0 %v309
      %v380 = vpop.f32.mrf.mxu0
      %v381 = vadd.f32 0.0, %v380
      %v382 = vpop.f32.mrf.mxu0
      %383 = vdwg.mxu0
      %409 = vrot.lane.b32.xlu0 %v321, 96
      %v410 = vpop.permute.xlu0 %409
      %411 = vrot.lane.b32.xlu0 %v323, 96
      %v412 = vpop.permute.xlu0 %411
      %413 = vrot.lane.b32.xlu0 %v326, 96
      %v414 = vpop.permute.xlu0 %413
      %415 = vrot.lane.b32.xlu0 %v328, 96
      %v416 = vpop.permute.xlu0 %415
      %417 = vrot.lane.b32.xlu0 %v331, 96
      %v418 = vpop.permute.xlu0 %417
      %419 = vrot.lane.b32.xlu0 %v333, 96
      %v420 = vpop.permute.xlu0 %419
      %421 = vrot.lane.b32.xlu0 %v336, 96
      %v422 = vpop.permute.xlu0 %421
      %423 = vrot.lane.b32.xlu0 %v338, 96
      %v424 = vpop.permute.xlu0 %423
      %425 = vrot.lane.b32.xlu0 %v341, 96
      %v426 = vpop.permute.xlu0 %425
      %427 = vrot.lane.b32.xlu0 %v343, 96
      %v428 = vpop.permute.xlu0 %427
      %429 = vrot.lane.b32.xlu0 %v346, 96
      %v430 = vpop.permute.xlu0 %429
      %431 = vrot.lane.b32.xlu0 %v348, 96
      %v432 = vpop.permute.xlu0 %431
      %433 = vrot.lane.b32.xlu0 %v351, 96
      %v434 = vpop.permute.xlu0 %433
      %435 = vrot.lane.b32.xlu0 %v353, 96
      %v436 = vpop.permute.xlu0 %435
      %437 = vrot.lane.b32.xlu0 %v356, 96
      %v438 = vpop.permute.xlu0 %437
      %439 = vrot.lane.b32.xlu0 %v358, 96
      %v440 = vpop.permute.xlu0 %439
      %441 = vrot.lane.b32.xlu0 %v361, 96
      %v442 = vpop.permute.xlu0 %441
      %443 = vrot.lane.b32.xlu0 %v363, 96
      %v444 = vpop.permute.xlu0 %443
      %445 = vrot.lane.b32.xlu0 %v366, 96
      %v446 = vpop.permute.xlu0 %445
      %447 = vrot.lane.b32.xlu0 %v368, 96
      %v448 = vpop.permute.xlu0 %447
      %449 = vrot.lane.b32.xlu0 %v371, 96
      %v450 = vpop.permute.xlu0 %449
      %451 = vrot.lane.b32.xlu0 %v373, 96
      %v452 = vpop.permute.xlu0 %451
      %453 = vrot.lane.b32.xlu0 %v376, 96
      %v454 = vpop.permute.xlu0 %453
      %455 = vrot.lane.b32.xlu0 %v378, 96
      %v456 = vpop.permute.xlu0 %455
      %457 = vrot.lane.b32.xlu0 %v381, 96
      %v458 = vpop.permute.xlu0 %457
      %v484 = vmax.f32 %v321, %v410
      %v485 = vmax.f32 %v323, %v412
      %v486 = vmax.f32 %v326, %v414
      %v487 = vmax.f32 %v328, %v416
      %v488 = vmax.f32 %v331, %v418
      %v489 = vmax.f32 %v333, %v420
      %v490 = vmax.f32 %v336, %v422
      %v491 = vmax.f32 %v338, %v424
      %v492 = vmax.f32 %v341, %v426
      %v493 = vmax.f32 %v343, %v428
      %v494 = vmax.f32 %v346, %v430
      %v495 = vmax.f32 %v348, %v432
      %v496 = vmax.f32 %v351, %v434
      %v497 = vmax.f32 %v353, %v436
      %v498 = vmax.f32 %v356, %v438
      %v499 = vmax.f32 %v358, %v440
      %v500 = vmax.f32 %v361, %v442
      %v501 = vmax.f32 %v363, %v444
      %v502 = vmax.f32 %v366, %v446
      %v503 = vmax.f32 %v368, %v448
      %v504 = vmax.f32 %v371, %v450
      %v505 = vmax.f32 %v373, %v452
      %v506 = vmax.f32 %v376, %v454
      %v507 = vmax.f32 %v378, %v456
      %v508 = vmax.f32 %v381, %v458
      %534 = vrot.lane.b32.xlu0 %v484, 64
      %v535 = vpop.permute.xlu0 %534
      %536 = vrot.lane.b32.xlu0 %v485, 64
      %v537 = vpop.permute.xlu0 %536
      %538 = vrot.lane.b32.xlu0 %v486, 64
      %v539 = vpop.permute.xlu0 %538
      %540 = vrot.lane.b32.xlu0 %v487, 64
      %v541 = vpop.permute.xlu0 %540
      %542 = vrot.lane.b32.xlu0 %v488, 64
      %v543 = vpop.permute.xlu0 %542
      %544 = vrot.lane.b32.xlu0 %v489, 64
      %v545 = vpop.permute.xlu0 %544
      %546 = vrot.lane.b32.xlu0 %v490, 64
      %v547 = vpop.permute.xlu0 %546
      %548 = vrot.lane.b32.xlu0 %v491, 64
      %v549 = vpop.permute.xlu0 %548
      %550 = vrot.lane.b32.xlu0 %v492, 64
      %v551 = vpop.permute.xlu0 %550
      %552 = vrot.lane.b32.xlu0 %v493, 64
      %v553 = vpop.permute.xlu0 %552
      %554 = vrot.lane.b32.xlu0 %v494, 64
      %v555 = vpop.permute.xlu0 %554
      %556 = vrot.lane.b32.xlu0 %v495, 64
      %v557 = vpop.permute.xlu0 %556
      %558 = vrot.lane.b32.xlu0 %v496, 64
      %v559 = vpop.permute.xlu0 %558
      %560 = vrot.lane.b32.xlu0 %v497, 64
      %v561 = vpop.permute.xlu0 %560
      %562 = vrot.lane.b32.xlu0 %v498, 64
      %v563 = vpop.permute.xlu0 %562
      %564 = vrot.lane.b32.xlu0 %v499, 64
      %v565 = vpop.permute.xlu0 %564
      %566 = vrot.lane.b32.xlu0 %v500, 64
      %v567 = vpop.permute.xlu0 %566
      %568 = vrot.lane.b32.xlu0 %v501, 64
      %v569 = vpop.permute.xlu0 %568
      %570 = vrot.lane.b32.xlu0 %v502, 64
      %v571 = vpop.permute.xlu0 %570
      %572 = vrot.lane.b32.xlu0 %v503, 64
      %v573 = vpop.permute.xlu0 %572
      %574 = vrot.lane.b32.xlu0 %v504, 64
      %v575 = vpop.permute.xlu0 %574
      %576 = vrot.lane.b32.xlu0 %v505, 64
      %v577 = vpop.permute.xlu0 %576
      %578 = vrot.lane.b32.xlu0 %v506, 64
      %v579 = vpop.permute.xlu0 %578
      %580 = vrot.lane.b32.xlu0 %v507, 64
      %v581 = vpop.permute.xlu0 %580
      %582 = vrot.lane.b32.xlu0 %v508, 64
      %v583 = vpop.permute.xlu0 %582
      %v609 = vmax.f32 %v484, %v535
      %v610 = vmax.f32 %v485, %v537
      %v611 = vmax.f32 %v486, %v539
      %v612 = vmax.f32 %v487, %v541
      %v613 = vmax.f32 %v488, %v543
      %v614 = vmax.f32 %v489, %v545
      %v615 = vmax.f32 %v490, %v547
      %v616 = vmax.f32 %v491, %v549
      %v617 = vmax.f32 %v492, %v551
      %v618 = vmax.f32 %v493, %v553
      %v619 = vmax.f32 %v494, %v555
      %v620 = vmax.f32 %v495, %v557
      %v621 = vmax.f32 %v496, %v559
      %v622 = vmax.f32 %v497, %v561
      %v623 = vmax.f32 %v498, %v563
      %v624 = vmax.f32 %v499, %v565
      %v625 = vmax.f32 %v500, %v567
      %v626 = vmax.f32 %v501, %v569
      %v627 = vmax.f32 %v502, %v571
      %v628 = vmax.f32 %v503, %v573
      %v629 = vmax.f32 %v504, %v575
      %v630 = vmax.f32 %v505, %v577
      %v631 = vmax.f32 %v506, %v579
      %v632 = vmax.f32 %v507, %v581
      %v633 = vmax.f32 %v508, %v583
      %v634 = vld [vmem:[%s2] sm:$0x1]
      %v636 = vperm.slane %v634, 0
      %v638 = vadd.f32 %v609, %v636
      %v639 = vadd.f32 %v610, %v636
      %v640 = vadd.f32 %v611, %v636
      %v641 = vadd.f32 %v612, %v636
      %v642 = vadd.f32 %v613, %v636
      %v643 = vadd.f32 %v614, %v636
      %v644 = vadd.f32 %v615, %v636
      %v645 = vadd.f32 %v616, %v636
      %v646 = vadd.f32 %v617, %v636
      %v647 = vadd.f32 %v618, %v636
      %v648 = vadd.f32 %v619, %v636
      %v649 = vadd.f32 %v620, %v636
      %v650 = vadd.f32 %v621, %v636
      %v651 = vadd.f32 %v622, %v636
      %v652 = vadd.f32 %v623, %v636
      %v653 = vadd.f32 %v624, %v636
      %v654 = vadd.f32 %v625, %v636
      %v655 = vadd.f32 %v626, %v636
      %v656 = vadd.f32 %v627, %v636
      %v657 = vadd.f32 %v628, %v636
      %v658 = vadd.f32 %v629, %v636
      %v659 = vadd.f32 %v630, %v636
      %v660 = vadd.f32 %v631, %v636
      %v661 = vadd.f32 %v632, %v636
      %v662 = vadd.f32 %v633, %v636
      %v663 = vmax.f32 %v638, 0.0
      %v664 = vmax.f32 %v639, 0.0
      %v665 = vmax.f32 %v640, 0.0
      %v666 = vmax.f32 %v641, 0.0
      %v667 = vmax.f32 %v642, 0.0
      %v668 = vmax.f32 %v643, 0.0
      %v669 = vmax.f32 %v644, 0.0
      %v670 = vmax.f32 %v645, 0.0
      %v671 = vmax.f32 %v646, 0.0
      %v672 = vmax.f32 %v647, 0.0
      %v673 = vmax.f32 %v648, 0.0
      %v674 = vmax.f32 %v649, 0.0
      %v675 = vmax.f32 %v650, 0.0
      %v676 = vmax.f32 %v651, 0.0
      %v677 = vmax.f32 %v652, 0.0
      %v678 = vmax.f32 %v653, 0.0
      %v679 = vmax.f32 %v654, 0.0
      %v680 = vmax.f32 %v655, 0.0
      %v681 = vmax.f32 %v656, 0.0
      %v682 = vmax.f32 %v657, 0.0
      %v683 = vmax.f32 %v658, 0.0
      %v684 = vmax.f32 %v659, 0.0
      %v685 = vmax.f32 %v660, 0.0
      %v686 = vmax.f32 %v661, 0.0
      %v687 = vmax.f32 %v662, 0.0
      %v688 = vpack.c.bf16 %v663, %v663
      %v689 = vpack.c.bf16 %v664, %v664
      %v690 = vpack.c.bf16 %v665, %v665
      %v691 = vpack.c.bf16 %v666, %v666
      %v692 = vpack.c.bf16 %v667, %v667
      %v693 = vpack.c.bf16 %v668, %v668
      %v694 = vpack.c.bf16 %v669, %v669
      %v695 = vpack.c.bf16 %v670, %v670
      %v696 = vpack.c.bf16 %v671, %v671
      %v697 = vpack.c.bf16 %v672, %v672
      %v698 = vpack.c.bf16 %v673, %v673
      %v699 = vpack.c.bf16 %v674, %v674
      %v700 = vpack.c.bf16 %v675, %v675
      %v701 = vpack.c.bf16 %v676, %v676
      %v702 = vpack.c.bf16 %v677, %v677
      %v703 = vpack.c.bf16 %v678, %v678
      %v704 = vpack.c.bf16 %v679, %v679
      %v705 = vpack.c.bf16 %v680, %v680
      %v706 = vpack.c.bf16 %v681, %v681
      %v707 = vpack.c.bf16 %v682, %v682
      %v708 = vpack.c.bf16 %v683, %v683
      %v709 = vpack.c.bf16 %v684, %v684
      %v710 = vpack.c.bf16 %v685, %v685
      %v711 = vpack.c.bf16 %v686, %v686
      %v712 = vpack.c.bf16 %v687, %v687
      %vm713 = vcmask 257024
      %714 = vst.msk [vmem:[%s172] sm:$0xf] %vm713, %v688
      %715 = vst.msk [vmem:[%s172 + $0x4] sm:$0xf] %vm713, %v689
      %716 = vst.msk [vmem:[%s172 + $0x8] sm:$0xf] %vm713, %v690
      %717 = vst.msk [vmem:[%s172 + $0xc] sm:$0xf] %vm713, %v691
      %718 = vst.msk [vmem:[%s172 + $0x10] sm:$0xf] %vm713, %v692
      %719 = vst.msk [vmem:[%s172 + $0x14] sm:$0xf] %vm713, %v693
      %720 = vst.msk [vmem:[%s172 + $0x18] sm:$0xf] %vm713, %v694
      %721 = vst.msk [vmem:[%s172 + $0x1c] sm:$0xf] %vm713, %v695
      %722 = vst.msk [vmem:[%s172 + $0x20] sm:$0xf] %vm713, %v696
      %723 = vst.msk [vmem:[%s172 + $0x24] sm:$0xf] %vm713, %v697
      %724 = vst.msk [vmem:[%s172 + $0x28] sm:$0xf] %vm713, %v698
      %725 = vst.msk [vmem:[%s172 + $0x2c] sm:$0xf] %vm713, %v699
      %726 = vst.msk [vmem:[%s172 + $0x30] sm:$0xf] %vm713, %v700
      %727 = vst.msk [vmem:[%s172 + $0x34] sm:$0xf] %vm713, %v701
      %728 = vst.msk [vmem:[%s172 + $0x38] sm:$0xf] %vm713, %v702
      %729 = vst.msk [vmem:[%s172 + $0x3c] sm:$0xf] %vm713, %v703
      %730 = vst.msk [vmem:[%s172 + $0x40] sm:$0xf] %vm713, %v704
      %731 = vst.msk [vmem:[%s172 + $0x44] sm:$0xf] %vm713, %v705
      %732 = vst.msk [vmem:[%s172 + $0x48] sm:$0xf] %vm713, %v706
      %733 = vst.msk [vmem:[%s172 + $0x4c] sm:$0xf] %vm713, %v707
      %734 = vst.msk [vmem:[%s172 + $0x50] sm:$0xf] %vm713, %v708
      %735 = vst.msk [vmem:[%s172 + $0x54] sm:$0xf] %vm713, %v709
      %736 = vst.msk [vmem:[%s172 + $0x58] sm:$0xf] %vm713, %v710
      %737 = vst.msk [vmem:[%s172 + $0x5c] sm:$0xf] %vm713, %v711
      %738 = vst.msk [vmem:[%s172 + $0x60] sm:$0xf] %vm713, %v712
      %s739 = smul.u32 25, %s14
      %p740 = scmp.lt.s32.totalorder %s739, 49
      %s741 = scalar_select %p740, %s739, 49
      %s742 = smul.addr %s741, 4
      %s743 = scalar_lea.vmem %s3, %s742
      // Predicated region
      $region33: #{cnn_forward.3} parent=31 // pred_check
        %p744 = pneg %p100
      $region34: #{cnn_forward.3} parent=31 // pred_check_branch
        %746 = sbr.rel (%p744) target = $region36
      $region35: #{cnn_forward.3} parent=31 // pred_region
        %s747 = smul.u32 25, %s14
      $region36: #{cnn_forward.3} parent=31 // pred_fallthru
        _
    $region32: #{cnn_forward.3} parent=5 // pred_fallthru
      _
    %p748 = scmp.le.s32.totalorder 2, %s9
    // Predicated region
    $region37: #{cnn_forward.3} parent=5 // pred_check
      %p749 = pneg %p748
    $region38: #{cnn_forward.3} parent=5 // pred_check_branch
      %751 = sbr.rel (%p749) target = $region40
    $region39: #{cnn_forward.3} parent=5 // pred_region
      %s752 = ssub.s32 %s9, 2
      // Predicated region
      $region41: #{cnn_forward.3} parent=39 // pred_check
        %p753 = pneg %p106
      $region42: #{cnn_forward.3} parent=39 // pred_check_branch
        %755 = sbr.rel (%p753) target = $region44
      $region43: #{cnn_forward.3} parent=39 // pred_region
        %s756 = smul.u32 25, %s15
        %p757 = scmp.lt.s32.totalorder %s756, 49
        %s758 = scalar_select %p757, %s756, 49
        %s759 = smul.addr %s758, 4
        %s760 = scalar_lea.vmem %s3, %s759
      $region44: #{cnn_forward.3} parent=39 // pred_fallthru
        _
    $region40: #{cnn_forward.3} parent=5 // pred_fallthru
      _
  $region6: #{cnn_forward.3} parent=0 // loop_footer
    %s13 = sadd.s32 1, %s9
  $region7: #{cnn_forward.3} parent=0 // loop_footer_branch
    %8 = sbr.rel target = $region3
  $region8: #{cnn_forward.3} parent=0 // loop_exit
    _

// kernel: cnn_forward.4
$region0: #{cnn_forward.4}
  #allocation0 [shape = 'u32[]', space=smem, size = 0x4, offset = 0x4, fixed_abs, tag = 'smem constant byte address 0x4 - core index']
  #allocation1 [shape = 'u32[72,128]{1,0:T(1,128)}', space=vmem, size = 0x9000, scoped, tag = 'internal scratch']
  %s0 = inlined_call_operand.vmem [shape: bf16[112,512], index: 0, kind: input, shape index: {}]
  %s1 = inlined_call_operand.vmem [shape: bf16[512,256], index: 1, kind: input, shape index: {}]
  %s2 = inlined_call_operand.vmem [shape: f32[1,64], index: 2, kind: input, shape index: {}]
  %s3 = inlined_call_operand.vmem [shape: bf16[112,64], index: 3, kind: output, shape index: {}]
  %s4 = sld [smem:[#allocation0]]
  $region45: #{cnn_forward.4} parent=0
    _
  %s6 = ssub.s32 1, %s4
  %s7 = scalar_select 0, %s6, %s4
  loop: start=0, step=1, limit=4
  $region2: #{cnn_forward.4} parent=0 // loop_pre_header
    _
  $region3: #{cnn_forward.4} parent=0 // loop_header
    %s9 = sphi 0, %s13
    %p10 = scmp.ge.s32.totalorder %s9, 4
    %s19 = sphi 0, %s21
    %s22 = sphi 0, %s19
    %s23 = sphi 0, %s22
    %s39 = sphi 0, %s23
    %s43 = sphi 0, %s43
    %s45 = sphi 0, %s43
    %s46 = sphi 0, %s45
    %s60 = sphi 0, %s46
    %s64 = sphi 0, %s64
    %s66 = sphi 0, %s64
    %s67 = sphi 0, %s66
    %s81 = sphi 0, %s67
    %s87 = sphi 0, %s89
    %s90 = sphi 0, %s87
    %s91 = sphi 0, %s90
    %s107 = sphi 0, %s91
  $region4: #{cnn_forward.4} parent=0 // loop_header_branch
    %12 = sbr.rel (%p10) target = $region8
  $region5: #{cnn_forward.4} parent=0 // loop_body
    %s14 = ssub.s32 %s9, 1
    %s15 = ssub.s32 %s9, 2
    %s16 = sadd.s32 %s9, 1
    %s17 = ssub.s32 %s9, %s16
    %p18 = scmp.eq.s32.totalorder %s17, 0
    %s20 = sadd.s32 %s19, 1
    %s21 = scalar_select %p18, %s19, %s20
    %p24 = pneg %p18
    %p25 = scmp.eq.s32.totalorder %s9, 1
    %p26 = por %p24, %p25
    %p27 = scmp.ne.s32.totalorder %s19, %s22
    %p28 = scmp.eq.s32.totalorder %s9, 0
    %p29 = por %p27, %p28
    %p30 = scmp.ne.s32.totalorder %s19, %s22
    %p31 = scmp.eq.s32.totalorder %s14, 1
    %p32 = por %p30, %p31
    %p33 = scmp.ne.s32.totalorder %s22, %s23
    %p34 = scmp.eq.s32.totalorder %s14, 0
    %p35 = por %p33, %p34
    %p36 = scmp.ne.s32.totalorder %s22, %s23
    %p37 = scmp.eq.s32.totalorder %s15, 1
    %p38 = por %p36, %p37
    %p40 = scmp.ne.s32.totalorder %s23, %s39
    %p41 = scmp.eq.s32.totalorder %s15, 0
    %p42 = por %p40, %p41
    %s44 = sadd.s32 %s43, 1
    %p47 = scmp.eq.s32.totalorder %s9, 1
    %p48 = scmp.ne.s32.totalorder %s43, %s45
    %p49 = scmp.eq.s32.totalorder %s9, 0
    %p50 = por %p48, %p49
    %p51 = scmp.ne.s32.totalorder %s43, %s45
    %p52 = scmp.eq.s32.totalorder %s14, 1
    %p53 = por %p51, %p52
    %p54 = scmp.ne.s32.totalorder %s45, %s46
    %p55 = scmp.eq.s32.totalorder %s14, 0
    %p56 = por %p54, %p55
    %p57 = scmp.ne.s32.totalorder %s45, %s46
    %p58 = scmp.eq.s32.totalorder %s15, 1
    %p59 = por %p57, %p58
    %p61 = scmp.ne.s32.totalorder %s46, %s60
    %p62 = scmp.eq.s32.totalorder %s15, 0
    %p63 = por %p61, %p62
    %s65 = sadd.s32 %s64, 1
    %p68 = scmp.eq.s32.totalorder %s9, 1
    %p69 = scmp.ne.s32.totalorder %s64, %s66
    %p70 = scmp.eq.s32.totalorder %s9, 0
    %p71 = por %p69, %p70
    %p72 = scmp.ne.s32.totalorder %s64, %s66
    %p73 = scmp.eq.s32.totalorder %s14, 1
    %p74 = por %p72, %p73
    %p75 = scmp.ne.s32.totalorder %s66, %s67
    %p76 = scmp.eq.s32.totalorder %s14, 0
    %p77 = por %p75, %p76
    %p78 = scmp.ne.s32.totalorder %s66, %s67
    %p79 = scmp.eq.s32.totalorder %s15, 1
    %p80 = por %p78, %p79
    %p82 = scmp.ne.s32.totalorder %s67, %s81
    %p83 = scmp.eq.s32.totalorder %s15, 0
    %p84 = por %p82, %p83
    %s85 = ssub.s32 %s9, %s16
    %p86 = scmp.eq.s32.totalorder %s85, 0
    %s88 = sadd.s32 %s87, 1
    %s89 = scalar_select %p86, %s87, %s88
    %p92 = pneg %p86
    %p93 = scmp.eq.s32.totalorder %s9, 1
    %p94 = por %p92, %p93
    %p95 = scmp.ne.s32.totalorder %s87, %s90
    %p96 = scmp.eq.s32.totalorder %s9, 0
    %p97 = por %p95, %p96
    %p98 = scmp.ne.s32.totalorder %s87, %s90
    %p99 = scmp.eq.s32.totalorder %s14, 1
    %p100 = por %p98, %p99
    %p101 = scmp.ne.s32.totalorder %s90, %s91
    %p102 = scmp.eq.s32.totalorder %s14, 0
    %p103 = por %p101, %p102
    %p104 = scmp.ne.s32.totalorder %s90, %s91
    %p105 = scmp.eq.s32.totalorder %s15, 1
    %p106 = por %p104, %p105
    %p108 = scmp.ne.s32.totalorder %s91, %s107
    %p109 = scmp.eq.s32.totalorder %s15, 0
    %p110 = por %p108, %p109
    %p111 = scmp.le.s32.totalorder 1, %s9
    %p112 = scmp.lt.s32.totalorder %s9, 3
    %p113 = pnand %p111, %p112
    %p114 = pneg %p113
    // Predicated region
    $region9: #{cnn_forward.4} parent=5 // pred_check
      _
    $region10: #{cnn_forward.4} parent=5 // pred_check_branch
      %116 = sbr.rel (%p113) target = $region12
    $region11: #{cnn_forward.4} parent=5 // pred_region
      %s117 = ssub.s32 %s9, 1
      // Predicated region
      $region13: #{cnn_forward.4} parent=11 // pred_check
        %p118 = pneg %p56
      $region14: #{cnn_forward.4} parent=11 // pred_check_branch
        %120 = sbr.rel (%p118) target = $region16
      $region15: #{cnn_forward.4} parent=11 // pred_region
        _
      $region16: #{cnn_forward.4} parent=11 // pred_fallthru
        _
      // Predicated region
      $region17: #{cnn_forward.4} parent=11 // pred_check
        %p121 = pneg %p77
      $region18: #{cnn_forward.4} parent=11 // pred_check_branch
        %123 = sbr.rel (%p121) target = $region20
      $region19: #{cnn_forward.4} parent=11 // pred_region
        _
      $region20: #{cnn_forward.4} parent=11 // pred_fallthru
        _
    $region12: #{cnn_forward.4} parent=5 // pred_fallthru
      _
    %p124 = scmp.lt.s32.totalorder %s9, 2
    // Predicated region
    $region21: #{cnn_forward.4} parent=5 // pred_check
      %p125 = pneg %p124
    $region22: #{cnn_forward.4} parent=5 // pred_check_branch
      %127 = sbr.rel (%p125) target = $region24
    $region23: #{cnn_forward.4} parent=5 // pred_region
      // Predicated region
      $region25: #{cnn_forward.4} parent=23 // pred_check
        %p128 = pneg %p29
      $region26: #{cnn_forward.4} parent=23 // pred_check_branch
        %130 = sbr.rel (%p128) target = $region28
      $region27: #{cnn_forward.4} parent=23 // pred_region
        %s131 = smul.u32 7, %s9
        %p132 = scmp.lt.s32.totalorder %s131, 13
        %s133 = scalar_select %p132, %s131, 13
        %s134 = smul.addr %s133, 4
        %s135 = smul.addr %s134, 4
        %s136 = scalar_lea.vmem %s0, %s135
        %s137 = smul.u32 7, %s9
      $region28: #{cnn_forward.4} parent=23 // pred_fallthru
        _
    $region24: #{cnn_forward.4} parent=5 // pred_fallthru
      _
    %p138 = scmp.le.s32.totalorder 1, %s9
    %p139 = scmp.lt.s32.totalorder %s9, 3
    %p140 = pnand %p138, %p139
    %p141 = pneg %p140
    // Predicated region
    $region29: #{cnn_forward.4} parent=5 // pred_check
      _
    $region30: #{cnn_forward.4} parent=5 // pred_check_branch
      %143 = sbr.rel (%p140) target = $region32
    $region31: #{cnn_forward.4} parent=5 // pred_region
      %s144 = ssub.s32 %s9, 1
      %s145 = smul.u32 7, %s14
      %p146 = scmp.lt.s32.totalorder %s145, 13
      %s147 = scalar_select %p146, %s145, 13
      %s148 = smul.addr %s147, 4
      %s149 = smul.addr %s148, 4
      %s150 = scalar_lea.vmem %s0, %s149
      %p151 = pneg %p35
      %p152 = pneg %p32
      %p153 = pneg %p56
      %p154 = pneg %p53
      %p155 = pneg %p77
      %p156 = pneg %p74
      %p157 = pneg %p103
      %p158 = pneg %p100
      %s159 = smul.u32 7, %s14
      %p160 = scmp.lt.s32.totalorder %s159, 13
      %s161 = scalar_select %p160, %s159, 13
      %s162 = smul.addr %s161, 4
      %s163 = scalar_lea.vmem %s3, %s162
      %s164 = smul.u32 7, %s14
      %p165 = scmp.lt.s32.totalorder %s164, 13
      %s166 = scalar_select %p165, %s164, 13
      %s167 = smul.addr %s166, 4
      %s168 = smul.addr %s167, 4
      %s169 = scalar_lea.vmem %s0, %s168
      %s170 = smul.u32 7, %s14
      %s171 = smul.u32 7, %s14
      %p172 = scmp.lt.s32.totalorder %s171, 13
      %s173 = scalar_select %p172, %s171, 13
      %s174 = smul.addr %s173, 4
      %s175 = scalar_lea.vmem %s3, %s174
      %s176 = smul.u32 7, %s14
      %v177 = vld [vmem:[%s169] sm:$0xff]
      %v178 = vld [vmem:[%s169 + $0x8] sm:$0xff]
      %v179 = vld [vmem:[%s169 + $0x10] sm:$0xff]
      %v180 = vld [vmem:[%s169 + $0x18] sm:$0xff]
      %v181 = vld [vmem:[%s169 + $0x20] sm:$0xff]
      %v182 = vld [vmem:[%s169 + $0x28] sm:$0xff]
      %v183 = vld [vmem:[%s169 + $0x30] sm:$0xff]
      %v184 = vld [vmem:[%s169 + $0x38] sm:$0xff]
      %v185 = vld [vmem:[%s169 + $0x40] sm:$0xff]
      %v186 = vld [vmem:[%s169 + $0x48] sm:$0xff]
      %v187 = vld [vmem:[%s169 + $0x50] sm:$0xff]
      %v188 = vld [vmem:[%s169 + $0x58] sm:$0xff]
      %v189 = vld [vmem:[%s169 + $0x60] sm:$0xff]
      %v190 = vld [vmem:[%s169 + $0x68] sm:$0xff]
      %v191 = vld [vmem:[%s1] sm:$0xff]
      %v192 = vld [vmem:[%s1 + $0x8] sm:$0xff]
      %v193 = vld [vmem:[%s1 + $0x10] sm:$0xff]
      %v194 = vld [vmem:[%s1 + $0x18] sm:$0xff]
      %v195 = vld [vmem:[%s1 + $0x20] sm:$0xff]
      %v196 = vld [vmem:[%s1 + $0x28] sm:$0xff]
      %v197 = vld [vmem:[%s1 + $0x30] sm:$0xff]
      %v198 = vld [vmem:[%s1 + $0x38] sm:$0xff]
      %v199 = vld [vmem:[%s1 + $0x40] sm:$0xff]
      %v200 = vld [vmem:[%s1 + $0x48] sm:$0xff]
      %v201 = vld [vmem:[%s1 + $0x50] sm:$0xff]
      %v202 = vld [vmem:[%s1 + $0x58] sm:$0xff]
      %v203 = vld [vmem:[%s1 + $0x60] sm:$0xff]
      %v204 = vld [vmem:[%s1 + $0x68] sm:$0xff]
      %v205 = vld [vmem:[%s1 + $0x70] sm:$0xff]
      %v206 = vld [vmem:[%s1 + $0x78] sm:$0xff]
      %v207 = vld [vmem:[%s1 + $0x80] sm:$0xff]
      %v208 = vld [vmem:[%s1 + $0x88] sm:$0xff]
      %v209 = vld [vmem:[%s1 + $0x90] sm:$0xff]
      %v210 = vld [vmem:[%s1 + $0x98] sm:$0xff]
      %v211 = vld [vmem:[%s1 + $0xa0] sm:$0xff]
      %v212 = vld [vmem:[%s1 + $0xa8] sm:$0xff]
      %v213 = vld [vmem:[%s1 + $0xb0] sm:$0xff]
      %v214 = vld [vmem:[%s1 + $0xb8] sm:$0xff]
      %v215 = vld [vmem:[%s1 + $0xc0] sm:$0xff]
      %v216 = vld [vmem:[%s1 + $0xc8] sm:$0xff]
      %v217 = vld [vmem:[%s1 + $0xd0] sm:$0xff]
      %v218 = vld [vmem:[%s1 + $0xd8] sm:$0xff]
      %v219 = vld [vmem:[%s1 + $0xe0] sm:$0xff]
      %v220 = vld [vmem:[%s1 + $0xe8] sm:$0xff]
      %v221 = vld [vmem:[%s1 + $0xf0] sm:$0xff]
      %v222 = vld [vmem:[%s1 + $0xf8] sm:$0xff]
      %v223 = vld [vmem:[%s1 + $0x100] sm:$0xff]
      %v224 = vld [vmem:[%s1 + $0x108] sm:$0xff]
      %v225 = vld [vmem:[%s1 + $0x110] sm:$0xff]
      %v226 = vld [vmem:[%s1 + $0x118] sm:$0xff]
      %v227 = vld [vmem:[%s1 + $0x120] sm:$0xff]
      %v228 = vld [vmem:[%s1 + $0x128] sm:$0xff]
      %v229 = vld [vmem:[%s1 + $0x130] sm:$0xff]
      %v230 = vld [vmem:[%s1 + $0x138] sm:$0xff]
      %v231 = vld [vmem:[%s1 + $0x140] sm:$0xff]
      %v232 = vld [vmem:[%s1 + $0x148] sm:$0xff]
      %v233 = vld [vmem:[%s1 + $0x150] sm:$0xff]
      %v234 = vld [vmem:[%s1 + $0x158] sm:$0xff]
      %v235 = vld [vmem:[%s1 + $0x160] sm:$0xff]
      %v236 = vld [vmem:[%s1 + $0x168] sm:$0xff]
      %v237 = vld [vmem:[%s1 + $0x170] sm:$0xff]
      %v238 = vld [vmem:[%s1 + $0x178] sm:$0xff]
      %v239 = vld [vmem:[%s1 + $0x180] sm:$0xff]
      %v240 = vld [vmem:[%s1 + $0x188] sm:$0xff]
      %v241 = vld [vmem:[%s1 + $0x190] sm:$0xff]
      %v242 = vld [vmem:[%s1 + $0x198] sm:$0xff]
      %v243 = vld [vmem:[%s1 + $0x1a0] sm:$0xff]
      %v244 = vld [vmem:[%s1 + $0x1a8] sm:$0xff]
      %v245 = vld [vmem:[%s1 + $0x1b0] sm:$0xff]
      %v246 = vld [vmem:[%s1 + $0x1b8] sm:$0xff]
      %v247 = vld [vmem:[%s1 + $0x1c0] sm:$0xff]
      %v248 = vld [vmem:[%s1 + $0x1c8] sm:$0xff]
      %v249 = vld [vmem:[%s1 + $0x1d0] sm:$0xff]
      %v250 = vld [vmem:[%s1 + $0x1d8] sm:$0xff]
      %v251 = vld [vmem:[%s1 + $0x1e0] sm:$0xff]
      %v252 = vld [vmem:[%s1 + $0x1e8] sm:$0xff]
      %v253 = vld [vmem:[%s1 + $0x1f0] sm:$0xff]
      %v254 = vld [vmem:[%s1 + $0x1f8] sm:$0xff]
      %v269 = vunpack.c.l.b16 %v177
      %v270 = vunpack.c.h.b16 %v177
      %v271 = vunpack.c.l.b16 %v178
      %v272 = vunpack.c.h.b16 %v178
      %v273 = vunpack.c.l.b16 %v179
      %v274 = vunpack.c.h.b16 %v179
      %v275 = vunpack.c.l.b16 %v180
      %v276 = vunpack.c.h.b16 %v180
      %v277 = vunpack.c.l.b16 %v181
      %v278 = vunpack.c.h.b16 %v181
      %v279 = vunpack.c.l.b16 %v182
      %v280 = vunpack.c.h.b16 %v182
      %v281 = vunpack.c.l.b16 %v183
      %v282 = vunpack.c.h.b16 %v183
      %v283 = vunpack.c.l.b16 %v184
      %v284 = vunpack.c.h.b16 %v184
      %v285 = vunpack.c.l.b16 %v185
      %v286 = vunpack.c.h.b16 %v185
      %v287 = vunpack.c.l.b16 %v186
      %v288 = vunpack.c.h.b16 %v186
      %v289 = vunpack.c.l.b16 %v187
      %v290 = vunpack.c.h.b16 %v187
      %v291 = vunpack.c.l.b16 %v188
      %v292 = vunpack.c.h.b16 %v188
      %v293 = vunpack.c.l.b16 %v189
      %v294 = vunpack.c.h.b16 %v189
      %v295 = vunpack.c.l.b16 %v190
      %v296 = vunpack.c.h.b16 %v190
      %v297 = vpack.c.b16 %v273, %v269
      %v298 = vpack.c.b16 %v274, %v270
      %v299 = vpack.c.b16 %v275, %v271
      %v300 = vpack.c.b16 %v276, %v272
      %v301 = vpack.c.b16 %v281, %v277
      %v302 = vpack.c.b16 %v282, %v278
      %v303 = vpack.c.b16 %v283, %v279
      %v304 = vpack.c.b16 %v284, %v280
      %v305 = vpack.c.b16 %v289, %v285
      %v306 = vpack.c.b16 %v290, %v286
      %v307 = vpack.c.b16 %v291, %v287
      %v308 = vpack.c.b16 %v292, %v288
      %v309 = vpack.c.b16 %v293, %v293
      %v310 = vpack.c.b16 %v294, %v294
      %v311 = vpack.c.b16 %v295, %v295
      %v312 = vpack.c.b16 %v296, %v296
      %v393 = vunpack.c.l.b16 %v191
      %v394 = vunpack.c.h.b16 %v191
      %v395 = vunpack.c.l.b16 %v192
      %v396 = vunpack.c.h.b16 %v192
      %v397 = vunpack.c.l.b16 %v193
      %v398 = vunpack.c.h.b16 %v193
      %v399 = vunpack.c.l.b16 %v194
      %v400 = vunpack.c.h.b16 %v194
      %v401 = vunpack.c.l.b16 %v195
      %v402 = vunpack.c.h.b16 %v195
      %v403 = vunpack.c.l.b16 %v196
      %v404 = vunpack.c.h.b16 %v196
      %v405 = vunpack.c.l.b16 %v197
      %v406 = vunpack.c.h.b16 %v197
      %v407 = vunpack.c.l.b16 %v198
      %v408 = vunpack.c.h.b16 %v198
      %v409 = vunpack.c.l.b16 %v199
      %v410 = vunpack.c.h.b16 %v199
      %v411 = vunpack.c.l.b16 %v200
      %v412 = vunpack.c.h.b16 %v200
      %v413 = vunpack.c.l.b16 %v201
      %v414 = vunpack.c.h.b16 %v201
      %v415 = vunpack.c.l.b16 %v202
      %v416 = vunpack.c.h.b16 %v202
      %v417 = vunpack.c.l.b16 %v203
      %v418 = vunpack.c.h.b16 %v203
      %v419 = vunpack.c.l.b16 %v204
      %v420 = vunpack.c.h.b16 %v204
      %v421 = vunpack.c.l.b16 %v205
      %v422 = vunpack.c.h.b16 %v205
      %v423 = vunpack.c.l.b16 %v206
      %v424 = vunpack.c.h.b16 %v206
      %v425 = vunpack.c.l.b16 %v207
      %v426 = vunpack.c.h.b16 %v207
      %v427 = vunpack.c.l.b16 %v208
      %v428 = vunpack.c.h.b16 %v208
      %v429 = vunpack.c.l.b16 %v209
      %v430 = vunpack.c.h.b16 %v209
      %v431 = vunpack.c.l.b16 %v210
      %v432 = vunpack.c.h.b16 %v210
      %v433 = vunpack.c.l.b16 %v211
      %v434 = vunpack.c.h.b16 %v211
      %v435 = vunpack.c.l.b16 %v212
      %v436 = vunpack.c.h.b16 %v212
      %v437 = vunpack.c.l.b16 %v213
      %v438 = vunpack.c.h.b16 %v213
      %v439 = vunpack.c.l.b16 %v214
      %v440 = vunpack.c.h.b16 %v214
      %v441 = vunpack.c.l.b16 %v215
      %v442 = vunpack.c.h.b16 %v215
      %v443 = vunpack.c.l.b16 %v216
      %v444 = vunpack.c.h.b16 %v216
      %v445 = vunpack.c.l.b16 %v217
      %v446 = vunpack.c.h.b16 %v217
      %v447 = vunpack.c.l.b16 %v218
      %v448 = vunpack.c.h.b16 %v218
      %v449 = vunpack.c.l.b16 %v219
      %v450 = vunpack.c.h.b16 %v219
      %v451 = vunpack.c.l.b16 %v220
      %v452 = vunpack.c.h.b16 %v220
      %v453 = vunpack.c.l.b16 %v221
      %v454 = vunpack.c.h.b16 %v221
      %v455 = vunpack.c.l.b16 %v222
      %v456 = vunpack.c.h.b16 %v222
      %v457 = vunpack.c.l.b16 %v223
      %v458 = vunpack.c.h.b16 %v223
      %v459 = vunpack.c.l.b16 %v224
      %v460 = vunpack.c.h.b16 %v224
      %v461 = vunpack.c.l.b16 %v225
      %v462 = vunpack.c.h.b16 %v225
      %v463 = vunpack.c.l.b16 %v226
      %v464 = vunpack.c.h.b16 %v226
      %v465 = vunpack.c.l.b16 %v227
      %v466 = vunpack.c.h.b16 %v227
      %v467 = vunpack.c.l.b16 %v228
      %v468 = vunpack.c.h.b16 %v228
      %v469 = vunpack.c.l.b16 %v229
      %v470 = vunpack.c.h.b16 %v229
      %v471 = vunpack.c.l.b16 %v230
      %v472 = vunpack.c.h.b16 %v230
      %v473 = vunpack.c.l.b16 %v231
      %v474 = vunpack.c.h.b16 %v231
      %v475 = vunpack.c.l.b16 %v232
      %v476 = vunpack.c.h.b16 %v232
      %v477 = vunpack.c.l.b16 %v233
      %v478 = vunpack.c.h.b16 %v233
      %v479 = vunpack.c.l.b16 %v234
      %v480 = vunpack.c.h.b16 %v234
      %v481 = vunpack.c.l.b16 %v235
      %v482 = vunpack.c.h.b16 %v235
      %v483 = vunpack.c.l.b16 %v236
      %v484 = vunpack.c.h.b16 %v236
      %v485 = vunpack.c.l.b16 %v237
      %v486 = vunpack.c.h.b16 %v237
      %v487 = vunpack.c.l.b16 %v238
      %v488 = vunpack.c.h.b16 %v238
      %v489 = vunpack.c.l.b16 %v239
      %v490 = vunpack.c.h.b16 %v239
      %v491 = vunpack.c.l.b16 %v240
      %v492 = vunpack.c.h.b16 %v240
      %v493 = vunpack.c.l.b16 %v241
      %v494 = vunpack.c.h.b16 %v241
      %v495 = vunpack.c.l.b16 %v242
      %v496 = vunpack.c.h.b16 %v242
      %v497 = vunpack.c.l.b16 %v243
      %v498 = vunpack.c.h.b16 %v243
      %v499 = vunpack.c.l.b16 %v244
      %v500 = vunpack.c.h.b16 %v244
      %v501 = vunpack.c.l.b16 %v245
      %v502 = vunpack.c.h.b16 %v245
      %v503 = vunpack.c.l.b16 %v246
      %v504 = vunpack.c.h.b16 %v246
      %v505 = vunpack.c.l.b16 %v247
      %v506 = vunpack.c.h.b16 %v247
      %v507 = vunpack.c.l.b16 %v248
      %v508 = vunpack.c.h.b16 %v248
      %v509 = vunpack.c.l.b16 %v249
      %v510 = vunpack.c.h.b16 %v249
      %v511 = vunpack.c.l.b16 %v250
      %v512 = vunpack.c.h.b16 %v250
      %v513 = vunpack.c.l.b16 %v251
      %v514 = vunpack.c.h.b16 %v251
      %v515 = vunpack.c.l.b16 %v252
      %v516 = vunpack.c.h.b16 %v252
      %v517 = vunpack.c.l.b16 %v253
      %v518 = vunpack.c.h.b16 %v253
      %v519 = vunpack.c.l.b16 %v254
      %v520 = vunpack.c.h.b16 %v254
      %v521 = vpack.c.b16 %v395, %v393
      %v522 = vpack.c.b16 %v396, %v394
      %v523 = vpack.c.b16 %v399, %v397
      %v524 = vpack.c.b16 %v400, %v398
      %v525 = vpack.c.b16 %v403, %v401
      %v526 = vpack.c.b16 %v404, %v402
      %v527 = vpack.c.b16 %v407, %v405
      %v528 = vpack.c.b16 %v408, %v406
      %v529 = vpack.c.b16 %v411, %v409
      %v530 = vpack.c.b16 %v412, %v410
      %v531 = vpack.c.b16 %v415, %v413
      %v532 = vpack.c.b16 %v416, %v414
      %v533 = vpack.c.b16 %v419, %v417
      %v534 = vpack.c.b16 %v420, %v418
      %v535 = vpack.c.b16 %v423, %v421
      %v536 = vpack.c.b16 %v424, %v422
      %v537 = vpack.c.b16 %v427, %v425
      %v538 = vpack.c.b16 %v428, %v426
      %v539 = vpack.c.b16 %v431, %v429
      %v540 = vpack.c.b16 %v432, %v430
      %v541 = vpack.c.b16 %v435, %v433
      %v542 = vpack.c.b16 %v436, %v434
      %v543 = vpack.c.b16 %v439, %v437
      %v544 = vpack.c.b16 %v440, %v438
      %v545 = vpack.c.b16 %v443, %v441
      %v546 = vpack.c.b16 %v444, %v442
      %v547 = vpack.c.b16 %v447, %v445
      %v548 = vpack.c.b16 %v448, %v446
      %v549 = vpack.c.b16 %v451, %v449
      %v550 = vpack.c.b16 %v452, %v450
      %v551 = vpack.c.b16 %v455, %v453
      %v552 = vpack.c.b16 %v456, %v454
      %v553 = vpack.c.b16 %v459, %v457
      %v554 = vpack.c.b16 %v460, %v458
      %v555 = vpack.c.b16 %v463, %v461
      %v556 = vpack.c.b16 %v464, %v462
      %v557 = vpack.c.b16 %v467, %v465
      %v558 = vpack.c.b16 %v468, %v466
      %v559 = vpack.c.b16 %v471, %v469
      %v560 = vpack.c.b16 %v472, %v470
      %v561 = vpack.c.b16 %v475, %v473
      %v562 = vpack.c.b16 %v476, %v474
      %v563 = vpack.c.b16 %v479, %v477
      %v564 = vpack.c.b16 %v480, %v478
      %v565 = vpack.c.b16 %v483, %v481
      %v566 = vpack.c.b16 %v484, %v482
      %v567 = vpack.c.b16 %v487, %v485
      %v568 = vpack.c.b16 %v488, %v486
      %v569 = vpack.c.b16 %v491, %v489
      %v570 = vpack.c.b16 %v492, %v490
      %v571 = vpack.c.b16 %v495, %v493
      %v572 = vpack.c.b16 %v496, %v494
      %v573 = vpack.c.b16 %v499, %v497
      %v574 = vpack.c.b16 %v500, %v498
      %v575 = vpack.c.b16 %v503, %v501
      %v576 = vpack.c.b16 %v504, %v502
      %v577 = vpack.c.b16 %v507, %v505
      %v578 = vpack.c.b16 %v508, %v506
      %v579 = vpack.c.b16 %v511, %v509
      %v580 = vpack.c.b16 %v512, %v510
      %v581 = vpack.c.b16 %v515, %v513
      %v582 = vpack.c.b16 %v516, %v514
      %v583 = vpack.c.b16 %v519, %v517
      %v584 = vpack.c.b16 %v520, %v518
      %649 = vmatpush.bf16.msra.mxu0 %v535
      %650 = vmatpush.bf16.msra.mxu0 %v533
      %651 = vmatpush.bf16.msra.mxu0 %v531
      %652 = vmatpush.bf16.msra.mxu0 %v529
      %653 = vmatpush.bf16.msra.mxu0 %v527
      %654 = vmatpush.bf16.msra.mxu0 %v525
      %655 = vmatpush.bf16.msra.mxu0 %v523
      %656 = vmatpush.bf16.msra.mxu0 %v521
      %657 = vmatmul.bf16.gmra.mxu0 %v297
      %v658 = vpop.f32.mrf.mxu0
      %v659 = vadd.f32 0.0, %v658
      %v660 = vpop.f32.mrf.mxu0
      %v661 = vadd.f32 0.0, %v660
      %662 = vmatmul.bf16.gmra.mxu0 %v301
      %v663 = vpop.f32.mrf.mxu0
      %v664 = vadd.f32 0.0, %v663
      %v665 = vpop.f32.mrf.mxu0
      %v666 = vadd.f32 0.0, %v665
      %667 = vmatmul.bf16.gmra.mxu0 %v305
      %v668 = vpop.f32.mrf.mxu0
      %v669 = vadd.f32 0.0, %v668
      %v670 = vpop.f32.mrf.mxu0
      %v671 = vadd.f32 0.0, %v670
      %672 = vmatmul.bf16.gmra.mxu0 %v309
      %v673 = vpop.f32.mrf.mxu0
      %v674 = vadd.f32 0.0, %v673
      %v675 = vpop.f32.mrf.mxu0
      %676 = vdwg.mxu0
      %677 = vmatpush.bf16.msra.mxu0 %v551
      %678 = vmatpush.bf16.msra.mxu0 %v549
      %679 = vmatpush.bf16.msra.mxu0 %v547
      %680 = vmatpush.bf16.msra.mxu0 %v545
      %681 = vmatpush.bf16.msra.mxu0 %v543
      %682 = vmatpush.bf16.msra.mxu0 %v541
      %683 = vmatpush.bf16.msra.mxu0 %v539
      %684 = vmatpush.bf16.msra.mxu0 %v537
      %685 = vmatmul.bf16.gmra.mxu0 %v298
      %v686 = vpop.f32.mrf.mxu0
      %v687 = vadd.f32 %v659, %v686
      %v688 = vpop.f32.mrf.mxu0
      %v689 = vadd.f32 %v661, %v688
      %690 = vmatmul.bf16.gmra.mxu0 %v302
      %v691 = vpop.f32.mrf.mxu0
      %v692 = vadd.f32 %v664, %v691
      %v693 = vpop.f32.mrf.mxu0
      %v694 = vadd.f32 %v666, %v693
      %695 = vmatmul.bf16.gmra.mxu0 %v306
      %v696 = vpop.f32.mrf.mxu0
      %v697 = vadd.f32 %v669, %v696
      %v698 = vpop.f32.mrf.mxu0
      %v699 = vadd.f32 %v671, %v698
      %700 = vmatmul.bf16.gmra.mxu0 %v310
      %v701 = vpop.f32.mrf.mxu0
      %v702 = vadd.f32 %v674, %v701
      %v703 = vpop.f32.mrf.mxu0
      %704 = vdwg.mxu0
      %705 = vmatpush.bf16.msra.mxu0 %v567
      %706 = vmatpush.bf16.msra.mxu0 %v565
      %707 = vmatpush.bf16.msra.mxu0 %v563
      %708 = vmatpush.bf16.msra.mxu0 %v561
      %709 = vmatpush.bf16.msra.mxu0 %v559
      %710 = vmatpush.bf16.msra.mxu0 %v557
      %711 = vmatpush.bf16.msra.mxu0 %v555
      %712 = vmatpush.bf16.msra.mxu0 %v553
      %713 = vmatmul.bf16.gmra.mxu0 %v299
      %v714 = vpop.f32.mrf.mxu0
      %v715 = vadd.f32 %v687, %v714
      %v716 = vpop.f32.mrf.mxu0
      %v717 = vadd.f32 %v689, %v716
      %718 = vmatmul.bf16.gmra.mxu0 %v303
      %v719 = vpop.f32.mrf.mxu0
      %v720 = vadd.f32 %v692, %v719
      %v721 = vpop.f32.mrf.mxu0
      %v722 = vadd.f32 %v694, %v721
      %723 = vmatmul.bf16.gmra.mxu0 %v307
      %v724 = vpop.f32.mrf.mxu0
      %v725 = vadd.f32 %v697, %v724
      %v726 = vpop.f32.mrf.mxu0
      %v727 = vadd.f32 %v699, %v726
      %728 = vmatmul.bf16.gmra.mxu0 %v311
      %v729 = vpop.f32.mrf.mxu0
      %v730 = vadd.f32 %v702, %v729
      %v731 = vpop.f32.mrf.mxu0
      %732 = vdwg.mxu0
      %733 = vmatpush.bf16.msra.mxu0 %v583
      %734 = vmatpush.bf16.msra.mxu0 %v581
      %735 = vmatpush.bf16.msra.mxu0 %v579
      %736 = vmatpush.bf16.msra.mxu0 %v577
      %737 = vmatpush.bf16.msra.mxu0 %v575
      %738 = vmatpush.bf16.msra.mxu0 %v573
      %739 = vmatpush.bf16.msra.mxu0 %v571
      %740 = vmatpush.bf16.msra.mxu0 %v569
      %741 = vmatmul.bf16.gmra.mxu0 %v300
      %v742 = vpop.f32.mrf.mxu0
      %v743 = vadd.f32 %v715, %v742
      %v744 = vpop.f32.mrf.mxu0
      %v745 = vadd.f32 %v717, %v744
      %746 = vmatmul.bf16.gmra.mxu0 %v304
      %v747 = vpop.f32.mrf.mxu0
      %v748 = vadd.f32 %v720, %v747
      %v749 = vpop.f32.mrf.mxu0
      %v750 = vadd.f32 %v722, %v749
      %751 = vmatmul.bf16.gmra.mxu0 %v308
      %v752 = vpop.f32.mrf.mxu0
      %v753 = vadd.f32 %v725, %v752
      %v754 = vpop.f32.mrf.mxu0
      %v755 = vadd.f32 %v727, %v754
      %756 = vmatmul.bf16.gmra.mxu0 %v312
      %v757 = vpop.f32.mrf.mxu0
      %v758 = vadd.f32 %v730, %v757
      %v759 = vpop.f32.mrf.mxu0
      %760 = vdwg.mxu0
      %761 = vmatpush.bf16.msra.mxu0 %v536
      %762 = vmatpush.bf16.msra.mxu0 %v534
      %763 = vmatpush.bf16.msra.mxu0 %v532
      %764 = vmatpush.bf16.msra.mxu0 %v530
      %765 = vmatpush.bf16.msra.mxu0 %v528
      %766 = vmatpush.bf16.msra.mxu0 %v526
      %767 = vmatpush.bf16.msra.mxu0 %v524
      %768 = vmatpush.bf16.msra.mxu0 %v522
      %769 = vmatmul.bf16.gmra.mxu0 %v297
      %v770 = vpop.f32.mrf.mxu0
      %v771 = vadd.f32 0.0, %v770
      %v772 = vpop.f32.mrf.mxu0
      %v773 = vadd.f32 0.0, %v772
      %774 = vmatmul.bf16.gmra.mxu0 %v301
      %v775 = vpop.f32.mrf.mxu0
      %v776 = vadd.f32 0.0, %v775
      %v777 = vpop.f32.mrf.mxu0
      %v778 = vadd.f32 0.0, %v777
      %779 = vmatmul.bf16.gmra.mxu0 %v305
      %v780 = vpop.f32.mrf.mxu0
      %v781 = vadd.f32 0.0, %v780
      %v782 = vpop.f32.mrf.mxu0
      %v783 = vadd.f32 0.0, %v782
      %784 = vmatmul.bf16.gmra.mxu0 %v309
      %v785 = vpop.f32.mrf.mxu0
      %v786 = vadd.f32 0.0, %v785
      %v787 = vpop.f32.mrf.mxu0
      %788 = vdwg.mxu0
      %789 = vmatpush.bf16.msra.mxu0 %v552
      %790 = vmatpush.bf16.msra.mxu0 %v550
      %791 = vmatpush.bf16.msra.mxu0 %v548
      %792 = vmatpush.bf16.msra.mxu0 %v546
      %793 = vmatpush.bf16.msra.mxu0 %v544
      %794 = vmatpush.bf16.msra.mxu0 %v542
      %795 = vmatpush.bf16.msra.mxu0 %v540
      %796 = vmatpush.bf16.msra.mxu0 %v538
      %797 = vmatmul.bf16.gmra.mxu0 %v298
      %v798 = vpop.f32.mrf.mxu0
      %v799 = vadd.f32 %v771, %v798
      %v800 = vpop.f32.mrf.mxu0
      %v801 = vadd.f32 %v773, %v800
      %802 = vmatmul.bf16.gmra.mxu0 %v302
      %v803 = vpop.f32.mrf.mxu0
      %v804 = vadd.f32 %v776, %v803
      %v805 = vpop.f32.mrf.mxu0
      %v806 = vadd.f32 %v778, %v805
      %807 = vmatmul.bf16.gmra.mxu0 %v306
      %v808 = vpop.f32.mrf.mxu0
      %v809 = vadd.f32 %v781, %v808
      %v810 = vpop.f32.mrf.mxu0
      %v811 = vadd.f32 %v783, %v810
      %812 = vmatmul.bf16.gmra.mxu0 %v310
      %v813 = vpop.f32.mrf.mxu0
      %v814 = vadd.f32 %v786, %v813
      %v815 = vpop.f32.mrf.mxu0
      %816 = vdwg.mxu0
      %817 = vmatpush.bf16.msra.mxu0 %v568
      %818 = vmatpush.bf16.msra.mxu0 %v566
      %819 = vmatpush.bf16.msra.mxu0 %v564
      %820 = vmatpush.bf16.msra.mxu0 %v562
      %821 = vmatpush.bf16.msra.mxu0 %v560
      %822 = vmatpush.bf16.msra.mxu0 %v558
      %823 = vmatpush.bf16.msra.mxu0 %v556
      %824 = vmatpush.bf16.msra.mxu0 %v554
      %825 = vmatmul.bf16.gmra.mxu0 %v299
      %v826 = vpop.f32.mrf.mxu0
      %v827 = vadd.f32 %v799, %v826
      %v828 = vpop.f32.mrf.mxu0
      %v829 = vadd.f32 %v801, %v828
      %830 = vmatmul.bf16.gmra.mxu0 %v303
      %v831 = vpop.f32.mrf.mxu0
      %v832 = vadd.f32 %v804, %v831
      %v833 = vpop.f32.mrf.mxu0
      %v834 = vadd.f32 %v806, %v833
      %835 = vmatmul.bf16.gmra.mxu0 %v307
      %v836 = vpop.f32.mrf.mxu0
      %v837 = vadd.f32 %v809, %v836
      %v838 = vpop.f32.mrf.mxu0
      %v839 = vadd.f32 %v811, %v838
      %840 = vmatmul.bf16.gmra.mxu0 %v311
      %v841 = vpop.f32.mrf.mxu0
      %v842 = vadd.f32 %v814, %v841
      %v843 = vpop.f32.mrf.mxu0
      %844 = vdwg.mxu0
      %845 = vmatpush.bf16.msra.mxu0 %v584
      %846 = vmatpush.bf16.msra.mxu0 %v582
      %847 = vmatpush.bf16.msra.mxu0 %v580
      %848 = vmatpush.bf16.msra.mxu0 %v578
      %849 = vmatpush.bf16.msra.mxu0 %v576
      %850 = vmatpush.bf16.msra.mxu0 %v574
      %851 = vmatpush.bf16.msra.mxu0 %v572
      %852 = vmatpush.bf16.msra.mxu0 %v570
      %853 = vmatmul.bf16.gmra.mxu0 %v300
      %v854 = vpop.f32.mrf.mxu0
      %v855 = vadd.f32 %v827, %v854
      %v856 = vpop.f32.mrf.mxu0
      %v857 = vadd.f32 %v829, %v856
      %858 = vmatmul.bf16.gmra.mxu0 %v304
      %v859 = vpop.f32.mrf.mxu0
      %v860 = vadd.f32 %v832, %v859
      %v861 = vpop.f32.mrf.mxu0
      %v862 = vadd.f32 %v834, %v861
      %863 = vmatmul.bf16.gmra.mxu0 %v308
      %v864 = vpop.f32.mrf.mxu0
      %v865 = vadd.f32 %v837, %v864
      %v866 = vpop.f32.mrf.mxu0
      %v867 = vadd.f32 %v839, %v866
      %868 = vmatmul.bf16.gmra.mxu0 %v312
      %v869 = vpop.f32.mrf.mxu0
      %v870 = vadd.f32 %v842, %v869
      %v871 = vpop.f32.mrf.mxu0
      %872 = vdwg.mxu0
      %880 = vrot.lane.b32.xlu0 %v743, 64
      %v881 = vpop.permute.xlu0 %880
      %882 = vrot.lane.b32.xlu0 %v745, 64
      %v883 = vpop.permute.xlu0 %882
      %884 = vrot.lane.b32.xlu0 %v748, 64
      %v885 = vpop.permute.xlu0 %884
      %886 = vrot.lane.b32.xlu0 %v750, 64
      %v887 = vpop.permute.xlu0 %886
      %888 = vrot.lane.b32.xlu0 %v753, 64
      %v889 = vpop.permute.xlu0 %888
      %890 = vrot.lane.b32.xlu0 %v755, 64
      %v891 = vpop.permute.xlu0 %890
      %892 = vrot.lane.b32.xlu0 %v758, 64
      %v893 = vpop.permute.xlu0 %892
      %v901 = vmax.f32 %v743, %v881
      %v902 = vmax.f32 %v745, %v883
      %v903 = vmax.f32 %v748, %v885
      %v904 = vmax.f32 %v750, %v887
      %v905 = vmax.f32 %v753, %v889
      %v906 = vmax.f32 %v755, %v891
      %v907 = vmax.f32 %v758, %v893
      %915 = vrot.lane.b32.xlu0 %v855, 64
      %v916 = vpop.permute.xlu0 %915
      %917 = vrot.lane.b32.xlu0 %v857, 64
      %v918 = vpop.permute.xlu0 %917
      %919 = vrot.lane.b32.xlu0 %v860, 64
      %v920 = vpop.permute.xlu0 %919
      %921 = vrot.lane.b32.xlu0 %v862, 64
      %v922 = vpop.permute.xlu0 %921
      %923 = vrot.lane.b32.xlu0 %v865, 64
      %v924 = vpop.permute.xlu0 %923
      %925 = vrot.lane.b32.xlu0 %v867, 64
      %v926 = vpop.permute.xlu0 %925
      %927 = vrot.lane.b32.xlu0 %v870, 64
      %v928 = vpop.permute.xlu0 %927
      %v936 = vmax.f32 %v855, %v916
      %v937 = vmax.f32 %v857, %v918
      %v938 = vmax.f32 %v860, %v920
      %v939 = vmax.f32 %v862, %v922
      %v940 = vmax.f32 %v865, %v924
      %v941 = vmax.f32 %v867, %v926
      %v942 = vmax.f32 %v870, %v928
      %v943 = vmax.f32 %v901, %v936
      %v944 = vmax.f32 %v902, %v937
      %v945 = vmax.f32 %v903, %v938
      %v946 = vmax.f32 %v904, %v939
      %v947 = vmax.f32 %v905, %v940
      %v948 = vmax.f32 %v906, %v941
      %v949 = vmax.f32 %v907, %v942
      %v950 = vld [vmem:[%s2] sm:$0x1]
      %v952 = vperm.slane %v950, 0
      %v954 = vadd.f32 %v943, %v952
      %v955 = vadd.f32 %v944, %v952
      %v956 = vadd.f32 %v945, %v952
      %v957 = vadd.f32 %v946, %v952
      %v958 = vadd.f32 %v947, %v952
      %v959 = vadd.f32 %v948, %v952
      %v960 = vadd.f32 %v949, %v952
      %v961 = vmax.f32 %v954, 0.0
      %v962 = vmax.f32 %v955, 0.0
      %v963 = vmax.f32 %v956, 0.0
      %v964 = vmax.f32 %v957, 0.0
      %v965 = vmax.f32 %v958, 0.0
      %v966 = vmax.f32 %v959, 0.0
      %v967 = vmax.f32 %v960, 0.0
      %v968 = vpack.c.bf16 %v961, %v961
      %v969 = vpack.c.bf16 %v962, %v962
      %v970 = vpack.c.bf16 %v963, %v963
      %v971 = vpack.c.bf16 %v964, %v964
      %v972 = vpack.c.bf16 %v965, %v965
      %v973 = vpack.c.bf16 %v966, %v966
      %v974 = vpack.c.bf16 %v967, %v967
      %vm975 = vcmask 519168
      %976 = vst.msk [vmem:[%s175] sm:$0xf] %vm975, %v968
      %977 = vst.msk [vmem:[%s175 + $0x4] sm:$0xf] %vm975, %v969
      %978 = vst.msk [vmem:[%s175 + $0x8] sm:$0xf] %vm975, %v970
      %979 = vst.msk [vmem:[%s175 + $0xc] sm:$0xf] %vm975, %v971
      %980 = vst.msk [vmem:[%s175 + $0x10] sm:$0xf] %vm975, %v972
      %981 = vst.msk [vmem:[%s175 + $0x14] sm:$0xf] %vm975, %v973
      %982 = vst.msk [vmem:[%s175 + $0x18] sm:$0xf] %vm975, %v974
      %s983 = smul.u32 7, %s14
      %p984 = scmp.lt.s32.totalorder %s983, 13
      %s985 = scalar_select %p984, %s983, 13
      %s986 = smul.addr %s985, 4
      %s987 = scalar_lea.vmem %s3, %s986
      // Predicated region
      $region33: #{cnn_forward.4} parent=31 // pred_check
        %p988 = pneg %p100
      $region34: #{cnn_forward.4} parent=31 // pred_check_branch
        %990 = sbr.rel (%p988) target = $region36
      $region35: #{cnn_forward.4} parent=31 // pred_region
        %s991 = smul.u32 7, %s14
      $region36: #{cnn_forward.4} parent=31 // pred_fallthru
        _
    $region32: #{cnn_forward.4} parent=5 // pred_fallthru
      _
    %p992 = scmp.le.s32.totalorder 2, %s9
    // Predicated region
    $region37: #{cnn_forward.4} parent=5 // pred_check
      %p993 = pneg %p992
    $region38: #{cnn_forward.4} parent=5 // pred_check_branch
      %995 = sbr.rel (%p993) target = $region40
    $region39: #{cnn_forward.4} parent=5 // pred_region
      %s996 = ssub.s32 %s9, 2
      // Predicated region
      $region41: #{cnn_forward.4} parent=39 // pred_check
        %p997 = pneg %p106
      $region42: #{cnn_forward.4} parent=39 // pred_check_branch
        %999 = sbr.rel (%p997) target = $region44
      $region43: #{cnn_forward.4} parent=39 // pred_region
        %s1000 = smul.u32 7, %s15
        %p1001 = scmp.lt.s32.totalorder %s1000, 13
        %s1002 = scalar_select %p1001, %s1000, 13
        %s1003 = smul.addr %s1002, 4
        %s1004 = scalar_lea.vmem %s3, %s1003
      $region44: #{cnn_forward.4} parent=39 // pred_fallthru
        _
    $region40: #{cnn_forward.4} parent=5 // pred_fallthru
      _
  $region6: #{cnn_forward.4} parent=0 // loop_footer
    %s13 = sadd.s32 1, %s9
  $region7: #{cnn_forward.4} parent=0 // loop_footer_branch
    %8 = sbr.rel target = $region3
  $region8: #{cnn_forward.4} parent=0 // loop_exit
    _

// kernel: cnn_forward.5
$region0: #{cnn_forward.5}
  #allocation0 [shape = 'u32[]', space=smem, size = 0x4, offset = 0x4, fixed_abs, tag = 'smem constant byte address 0x4 - core index']
  #allocation1 [shape = 'u32[72,128]{1,0:T(1,128)}', space=vmem, size = 0x9000, scoped, tag = 'internal scratch']
  %s0 = inlined_call_operand.vmem [shape: bf16[2,3136], index: 0, kind: input, shape index: {}]
  %s1 = inlined_call_operand.vmem [shape: bf16[3136,128], index: 1, kind: input, shape index: {}]
  %s2 = inlined_call_operand.vmem [shape: f32[1,128], index: 2, kind: input, shape index: {}]
  %s3 = inlined_call_operand.vmem [shape: bf16[128,10], index: 3, kind: input, shape index: {}]
  %s4 = inlined_call_operand.vmem [shape: f32[1,10], index: 4, kind: input, shape index: {}]
  %s5 = inlined_call_operand.hbm [shape: f32[2,10], index: 5, kind: output, shape index: {}]
  %s6 = sld [smem:[#allocation0]]
  $region30: #{cnn_forward.5} parent=0
    _
  %s8 = ssub.s32 1, %s6
  %s9 = scalar_select 0, %s8, %s6
  $region1: #{cnn_forward.5} parent=0
    #allocation2 [shape = 'u8[1024]{0}', space=vmem, size = 0x400, scoped, tag = 'output window, operand 0, single buffered']
    #allocation3 [shape = 's32[1]{0}', space=sflag, size = 0x4, scoped, tag = 'scoped memory for cnn_forward.5']
    %10 = vsyncpa [#allocation3], 0
    // Predicated region
    $region2: #{cnn_forward.5} parent=1 // pred_check
      _
    $region3: #{cnn_forward.5} parent=1 // pred_check_branch
      %12 = sbr.rel (0) target = $region5
    $region4: #{cnn_forward.5} parent=1 // pred_region
      _
    $region5: #{cnn_forward.5} parent=1 // pred_fallthru
      _
    // Predicated region
    $region6: #{cnn_forward.5} parent=1 // pred_check
      _
    $region7: #{cnn_forward.5} parent=1 // pred_check_branch
      %14 = sbr.rel (0) target = $region9
    $region8: #{cnn_forward.5} parent=1 // pred_region
      _
    $region9: #{cnn_forward.5} parent=1 // pred_fallthru
      _
    // Predicated region
    $region10: #{cnn_forward.5} parent=1 // pred_check
      _
    $region11: #{cnn_forward.5} parent=1 // pred_check_branch
      %16 = sbr.rel (0) target = $region13
    $region12: #{cnn_forward.5} parent=1 // pred_region
      _
    $region13: #{cnn_forward.5} parent=1 // pred_fallthru
      _
    // Predicated region
    $region14: #{cnn_forward.5} parent=1 // pred_check
      _
    $region15: #{cnn_forward.5} parent=1 // pred_check_branch
      %18 = sbr.rel (0) target = $region17
    $region16: #{cnn_forward.5} parent=1 // pred_region
      _
    $region17: #{cnn_forward.5} parent=1 // pred_fallthru
      _
    // Predicated region
    $region18: #{cnn_forward.5} parent=1 // pred_check
      _
    $region19: #{cnn_forward.5} parent=1 // pred_check_branch
      %20 = sbr.rel (0) target = $region21
    $region20: #{cnn_forward.5} parent=1 // pred_region
      _
    $region21: #{cnn_forward.5} parent=1 // pred_fallthru
      _
    %v22 = vld [vmem:[%s0] sm:$0xff]
    %v23 = vld [vmem:[%s0 + $0x8] sm:$0xff]
    %v24 = vld [vmem:[%s0 + $0x10] sm:$0xff]
    %v25 = vld [vmem:[%s0 + $0x18] sm:$0x1]
    %v26 = vld [vmem:[%s1] sm:$0xf]
    %v27 = vld [vmem:[%s1 + $0x4] sm:$0xf]
    %v28 = vld [vmem:[%s1 + $0x8] sm:$0xf]
    %v29 = vld [vmem:[%s1 + $0xc] sm:$0xf]
    %v30 = vld [vmem:[%s1 + $0x10] sm:$0xf]
    %v31 = vld [vmem:[%s1 + $0x14] sm:$0xf]
    %v32 = vld [vmem:[%s1 + $0x18] sm:$0xf]
    %v33 = vld [vmem:[%s1 + $0x1c] sm:$0xf]
    %v34 = vld [vmem:[%s1 + $0x20] sm:$0xf]
    %v35 = vld [vmem:[%s1 + $0x24] sm:$0xf]
    %v36 = vld [vmem:[%s1 + $0x28] sm:$0xf]
    %v37 = vld [vmem:[%s1 + $0x2c] sm:$0xf]
    %v38 = vld [vmem:[%s1 + $0x30] sm:$0xf]
    %v39 = vld [vmem:[%s1 + $0x34] sm:$0xf]
    %v40 = vld [vmem:[%s1 + $0x38] sm:$0xf]
    %v41 = vld [vmem:[%s1 + $0x3c] sm:$0xf]
    %v42 = vld [vmem:[%s1 + $0x40] sm:$0xf]
    %v43 = vld [vmem:[%s1 + $0x44] sm:$0xf]
    %v44 = vld [vmem:[%s1 + $0x48] sm:$0xf]
    %v45 = vld [vmem:[%s1 + $0x4c] sm:$0xf]
    %v46 = vld [vmem:[%s1 + $0x50] sm:$0xf]
    %v47 = vld [vmem:[%s1 + $0x54] sm:$0xf]
    %v48 = vld [vmem:[%s1 + $0x58] sm:$0xf]
    %v49 = vld [vmem:[%s1 + $0x5c] sm:$0xf]
    %v50 = vld [vmem:[%s1 + $0x60] sm:$0xf]
    %v51 = vld [vmem:[%s1 + $0x64] sm:$0xf]
    %v52 = vld [vmem:[%s1 + $0x68] sm:$0xf]
    %v53 = vld [vmem:[%s1 + $0x6c] sm:$0xf]
    %v54 = vld [vmem:[%s1 + $0x70] sm:$0xf]
    %v55 = vld [vmem:[%s1 + $0x74] sm:$0xf]
    %v56 = vld [vmem:[%s1 + $0x78] sm:$0xf]
    %v57 = vld [vmem:[%s1 + $0x7c] sm:$0xf]
    %v58 = vld [vmem:[%s1 + $0x80] sm:$0xf]
    %v59 = vld [vmem:[%s1 + $0x84] sm:$0xf]
    %v60 = vld [vmem:[%s1 + $0x88] sm:$0xf]
    %v61 = vld [vmem:[%s1 + $0x8c] sm:$0xf]
    %v62 = vld [vmem:[%s1 + $0x90] sm:$0xf]
    %v63 = vld [vmem:[%s1 + $0x94] sm:$0xf]
    %v64 = vld [vmem:[%s1 + $0x98] sm:$0xf]
    %v65 = vld [vmem:[%s1 + $0x9c] sm:$0xf]
    %v66 = vld [vmem:[%s1 + $0xa0] sm:$0xf]
    %v67 = vld [vmem:[%s1 + $0xa4] sm:$0xf]
    %v68 = vld [vmem:[%s1 + $0xa8] sm:$0xf]
    %v69 = vld [vmem:[%s1 + $0xac] sm:$0xf]
    %v70 = vld [vmem:[%s1 + $0xb0] sm:$0xf]
    %v71 = vld [vmem:[%s1 + $0xb4] sm:$0xf]
    %v72 = vld [vmem:[%s1 + $0xb8] sm:$0xf]
    %v73 = vld [vmem:[%s1 + $0xbc] sm:$0xf]
    %v74 = vld [vmem:[%s1 + $0xc0] sm:$0xf]
    %v75 = vld [vmem:[%s1 + $0xc4] sm:$0xf]
    %v76 = vld [vmem:[%s1 + $0xc8] sm:$0xf]
    %v77 = vld [vmem:[%s1 + $0xcc] sm:$0xf]
    %v78 = vld [vmem:[%s1 + $0xd0] sm:$0xf]
    %v79 = vld [vmem:[%s1 + $0xd4] sm:$0xf]
    %v80 = vld [vmem:[%s1 + $0xd8] sm:$0xf]
    %v81 = vld [vmem:[%s1 + $0xdc] sm:$0xf]
    %v82 = vld [vmem:[%s1 + $0xe0] sm:$0xf]
    %v83 = vld [vmem:[%s1 + $0xe4] sm:$0xf]
    %v84 = vld [vmem:[%s1 + $0xe8] sm:$0xf]
    %v85 = vld [vmem:[%s1 + $0xec] sm:$0xf]
    %v86 = vld [vmem:[%s1 + $0xf0] sm:$0xf]
    %v87 = vld [vmem:[%s1 + $0xf4] sm:$0xf]
    %v88 = vld [vmem:[%s1 + $0xf8] sm:$0xf]
    %v89 = vld [vmem:[%s1 + $0xfc] sm:$0xf]
    %v90 = vld [vmem:[%s1 + $0x100] sm:$0xf]
    %v91 = vld [vmem:[%s1 + $0x104] sm:$0xf]
    %v92 = vld [vmem:[%s1 + $0x108] sm:$0xf]
    %v93 = vld [vmem:[%s1 + $0x10c] sm:$0xf]
    %v94 = vld [vmem:[%s1 + $0x110] sm:$0xf]
    %v95 = vld [vmem:[%s1 + $0x114] sm:$0xf]
    %v96 = vld [vmem:[%s1 + $0x118] sm:$0xf]
    %v97 = vld [vmem:[%s1 + $0x11c] sm:$0xf]
    %v98 = vld [vmem:[%s1 + $0x120] sm:$0xf]
    %v99 = vld [vmem:[%s1 + $0x124] sm:$0xf]
    %v100 = vld [vmem:[%s1 + $0x128] sm:$0xf]
    %v101 = vld [vmem:[%s1 + $0x12c] sm:$0xf]
    %v102 = vld [vmem:[%s1 + $0x130] sm:$0xf]
    %v103 = vld [vmem:[%s1 + $0x134] sm:$0xf]
    %v104 = vld [vmem:[%s1 + $0x138] sm:$0xf]
    %v105 = vld [vmem:[%s1 + $0x13c] sm:$0xf]
    %v106 = vld [vmem:[%s1 + $0x140] sm:$0xf]
    %v107 = vld [vmem:[%s1 + $0x144] sm:$0xf]
    %v108 = vld [vmem:[%s1 + $0x148] sm:$0xf]
    %v109 = vld [vmem:[%s1 + $0x14c] sm:$0xf]
    %v110 = vld [vmem:[%s1 + $0x150] sm:$0xf]
    %v111 = vld [vmem:[%s1 + $0x154] sm:$0xf]
    %v112 = vld [vmem:[%s1 + $0x158] sm:$0xf]
    %v113 = vld [vmem:[%s1 + $0x15c] sm:$0xf]
    %v114 = vld [vmem:[%s1 + $0x160] sm:$0xf]
    %v115 = vld [vmem:[%s1 + $0x164] sm:$0xf]
    %v116 = vld [vmem:[%s1 + $0x168] sm:$0xf]
    %v117 = vld [vmem:[%s1 + $0x16c] sm:$0xf]
    %v118 = vld [vmem:[%s1 + $0x170] sm:$0xf]
    %v119 = vld [vmem:[%s1 + $0x174] sm:$0xf]
    %v120 = vld [vmem:[%s1 + $0x178] sm:$0xf]
    %v121 = vld [vmem:[%s1 + $0x17c] sm:$0xf]
    %v122 = vld [vmem:[%s1 + $0x180] sm:$0xf]
    %v123 = vld [vmem:[%s1 + $0x184] sm:$0xf]
    %v124 = vld [vmem:[%s1 + $0x188] sm:$0xf]
    %v125 = vld [vmem:[%s1 + $0x18c] sm:$0xf]
    %v126 = vld [vmem:[%s1 + $0x190] sm:$0xf]
    %v127 = vld [vmem:[%s1 + $0x194] sm:$0xf]
    %v128 = vld [vmem:[%s1 + $0x198] sm:$0xf]
    %v129 = vld [vmem:[%s1 + $0x19c] sm:$0xf]
    %v130 = vld [vmem:[%s1 + $0x1a0] sm:$0xf]
    %v131 = vld [vmem:[%s1 + $0x1a4] sm:$0xf]
    %v132 = vld [vmem:[%s1 + $0x1a8] sm:$0xf]
    %v133 = vld [vmem:[%s1 + $0x1ac] sm:$0xf]
    %v134 = vld [vmem:[%s1 + $0x1b0] sm:$0xf]
    %v135 = vld [vmem:[%s1 + $0x1b4] sm:$0xf]
    %v136 = vld [vmem:[%s1 + $0x1b8] sm:$0xf]
    %v137 = vld [vmem:[%s1 + $0x1bc] sm:$0xf]
    %v138 = vld [vmem:[%s1 + $0x1c0] sm:$0xf]
    %v139 = vld [vmem:[%s1 + $0x1c4] sm:$0xf]
    %v140 = vld [vmem:[%s1 + $0x1c8] sm:$0xf]
    %v141 = vld [vmem:[%s1 + $0x1cc] sm:$0xf]
    %v142 = vld [vmem:[%s1 + $0x1d0] sm:$0xf]
    %v143 = vld [vmem:[%s1 + $0x1d4] sm:$0xf]
    %v144 = vld [vmem:[%s1 + $0x1d8] sm:$0xf]
    %v145 = vld [vmem:[%s1 + $0x1dc] sm:$0xf]
    %v146 = vld [vmem:[%s1 + $0x1e0] sm:$0xf]
    %v147 = vld [vmem:[%s1 + $0x1e4] sm:$0xf]
    %v148 = vld [vmem:[%s1 + $0x1e8] sm:$0xf]
    %v149 = vld [vmem:[%s1 + $0x1ec] sm:$0xf]
    %v150 = vld [vmem:[%s1 + $0x1f0] sm:$0xf]
    %v151 = vld [vmem:[%s1 + $0x1f4] sm:$0xf]
    %v152 = vld [vmem:[%s1 + $0x1f8] sm:$0xf]
    %v153 = vld [vmem:[%s1 + $0x1fc] sm:$0xf]
    %v154 = vld [vmem:[%s1 + $0x200] sm:$0xf]
    %v155 = vld [vmem:[%s1 + $0x204] sm:$0xf]
    %v156 = vld [vmem:[%s1 + $0x208] sm:$0xf]
    %v157 = vld [vmem:[%s1 + $0x20c] sm:$0xf]
    %v158 = vld [vmem:[%s1 + $0x210] sm:$0xf]
    %v159 = vld [vmem:[%s1 + $0x214] sm:$0xf]
    %v160 = vld [vmem:[%s1 + $0x218] sm:$0xf]
    %v161 = vld [vmem:[%s1 + $0x21c] sm:$0xf]
    %v162 = vld [vmem:[%s1 + $0x220] sm:$0xf]
    %v163 = vld [vmem:[%s1 + $0x224] sm:$0xf]
    %v164 = vld [vmem:[%s1 + $0x228] sm:$0xf]
    %v165 = vld [vmem:[%s1 + $0x22c] sm:$0xf]
    %v166 = vld [vmem:[%s1 + $0x230] sm:$0xf]
    %v167 = vld [vmem:[%s1 + $0x234] sm:$0xf]
    %v168 = vld [vmem:[%s1 + $0x238] sm:$0xf]
    %v169 = vld [vmem:[%s1 + $0x23c] sm:$0xf]
    %v170 = vld [vmem:[%s1 + $0x240] sm:$0xf]
    %v171 = vld [vmem:[%s1 + $0x244] sm:$0xf]
    %v172 = vld [vmem:[%s1 + $0x248] sm:$0xf]
    %v173 = vld [vmem:[%s1 + $0x24c] sm:$0xf]
    %v174 = vld [vmem:[%s1 + $0x250] sm:$0xf]
    %v175 = vld [vmem:[%s1 + $0x254] sm:$0xf]
    %v176 = vld [vmem:[%s1 + $0x258] sm:$0xf]
    %v177 = vld [vmem:[%s1 + $0x25c] sm:$0xf]
    %v178 = vld [vmem:[%s1 + $0x260] sm:$0xf]
    %v179 = vld [vmem:[%s1 + $0x264] sm:$0xf]
    %v180 = vld [vmem:[%s1 + $0x268] sm:$0xf]
    %v181 = vld [vmem:[%s1 + $0x26c] sm:$0xf]
    %v182 = vld [vmem:[%s1 + $0x270] sm:$0xf]
    %v183 = vld [vmem:[%s1 + $0x274] sm:$0xf]
    %v184 = vld [vmem:[%s1 + $0x278] sm:$0xf]
    %v185 = vld [vmem:[%s1 + $0x27c] sm:$0xf]
    %v186 = vld [vmem:[%s1 + $0x280] sm:$0xf]
    %v187 = vld [vmem:[%s1 + $0x284] sm:$0xf]
    %v188 = vld [vmem:[%s1 + $0x288] sm:$0xf]
    %v189 = vld [vmem:[%s1 + $0x28c] sm:$0xf]
    %v190 = vld [vmem:[%s1 + $0x290] sm:$0xf]
    %v191 = vld [vmem:[%s1 + $0x294] sm:$0xf]
    %v192 = vld [vmem:[%s1 + $0x298] sm:$0xf]
    %v193 = vld [vmem:[%s1 + $0x29c] sm:$0xf]
    %v194 = vld [vmem:[%s1 + $0x2a0] sm:$0xf]
    %v195 = vld [vmem:[%s1 + $0x2a4] sm:$0xf]
    %v196 = vld [vmem:[%s1 + $0x2a8] sm:$0xf]
    %v197 = vld [vmem:[%s1 + $0x2ac] sm:$0xf]
    %v198 = vld [vmem:[%s1 + $0x2b0] sm:$0xf]
    %v199 = vld [vmem:[%s1 + $0x2b4] sm:$0xf]
    %v200 = vld [vmem:[%s1 + $0x2b8] sm:$0xf]
    %v201 = vld [vmem:[%s1 + $0x2bc] sm:$0xf]
    %v202 = vld [vmem:[%s1 + $0x2c0] sm:$0xf]
    %v203 = vld [vmem:[%s1 + $0x2c4] sm:$0xf]
    %v204 = vld [vmem:[%s1 + $0x2c8] sm:$0xf]
    %v205 = vld [vmem:[%s1 + $0x2cc] sm:$0xf]
    %v206 = vld [vmem:[%s1 + $0x2d0] sm:$0xf]
    %v207 = vld [vmem:[%s1 + $0x2d4] sm:$0xf]
    %v208 = vld [vmem:[%s1 + $0x2d8] sm:$0xf]
    %v209 = vld [vmem:[%s1 + $0x2dc] sm:$0xf]
    %v210 = vld [vmem:[%s1 + $0x2e0] sm:$0xf]
    %v211 = vld [vmem:[%s1 + $0x2e4] sm:$0xf]
    %v212 = vld [vmem:[%s1 + $0x2e8] sm:$0xf]
    %v213 = vld [vmem:[%s1 + $0x2ec] sm:$0xf]
    %v214 = vld [vmem:[%s1 + $0x2f0] sm:$0xf]
    %v215 = vld [vmem:[%s1 + $0x2f4] sm:$0xf]
    %v216 = vld [vmem:[%s1 + $0x2f8] sm:$0xf]
    %v217 = vld [vmem:[%s1 + $0x2fc] sm:$0xf]
    %v218 = vld [vmem:[%s1 + $0x300] sm:$0xf]
    %v219 = vld [vmem:[%s1 + $0x304] sm:$0xf]
    %v220 = vld [vmem:[%s1 + $0x308] sm:$0xf]
    %v221 = vld [vmem:[%s1 + $0x30c] sm:$0xf]
    %v222 = vld [vmem:[%s1 + $0x310] sm:$0xf]
    %v223 = vld [vmem:[%s1 + $0x314] sm:$0xf]
    %v224 = vld [vmem:[%s1 + $0x318] sm:$0xf]
    %v225 = vld [vmem:[%s1 + $0x31c] sm:$0xf]
    %v226 = vld [vmem:[%s1 + $0x320] sm:$0xf]
    %v227 = vld [vmem:[%s1 + $0x324] sm:$0xf]
    %v228 = vld [vmem:[%s1 + $0x328] sm:$0xf]
    %v229 = vld [vmem:[%s1 + $0x32c] sm:$0xf]
    %v230 = vld [vmem:[%s1 + $0x330] sm:$0xf]
    %v231 = vld [vmem:[%s1 + $0x334] sm:$0xf]
    %v232 = vld [vmem:[%s1 + $0x338] sm:$0xf]
    %v233 = vld [vmem:[%s1 + $0x33c] sm:$0xf]
    %v234 = vld [vmem:[%s1 + $0x340] sm:$0xf]
    %v235 = vld [vmem:[%s1 + $0x344] sm:$0xf]
    %v236 = vld [vmem:[%s1 + $0x348] sm:$0xf]
    %v237 = vld [vmem:[%s1 + $0x34c] sm:$0xf]
    %v238 = vld [vmem:[%s1 + $0x350] sm:$0xf]
    %v239 = vld [vmem:[%s1 + $0x354] sm:$0xf]
    %v240 = vld [vmem:[%s1 + $0x358] sm:$0xf]
    %v241 = vld [vmem:[%s1 + $0x35c] sm:$0xf]
    %v242 = vld [vmem:[%s1 + $0x360] sm:$0xf]
    %v243 = vld [vmem:[%s1 + $0x364] sm:$0xf]
    %v244 = vld [vmem:[%s1 + $0x368] sm:$0xf]
    %v245 = vld [vmem:[%s1 + $0x36c] sm:$0xf]
    %v246 = vld [vmem:[%s1 + $0x370] sm:$0xf]
    %v247 = vld [vmem:[%s1 + $0x374] sm:$0xf]
    %v248 = vld [vmem:[%s1 + $0x378] sm:$0xf]
    %v249 = vld [vmem:[%s1 + $0x37c] sm:$0xf]
    %v250 = vld [vmem:[%s1 + $0x380] sm:$0xf]
    %v251 = vld [vmem:[%s1 + $0x384] sm:$0xf]
    %v252 = vld [vmem:[%s1 + $0x388] sm:$0xf]
    %v253 = vld [vmem:[%s1 + $0x38c] sm:$0xf]
    %v254 = vld [vmem:[%s1 + $0x390] sm:$0xf]
    %v255 = vld [vmem:[%s1 + $0x394] sm:$0xf]
    %v256 = vld [vmem:[%s1 + $0x398] sm:$0xf]
    %v257 = vld [vmem:[%s1 + $0x39c] sm:$0xf]
    %v258 = vld [vmem:[%s1 + $0x3a0] sm:$0xf]
    %v259 = vld [vmem:[%s1 + $0x3a4] sm:$0xf]
    %v260 = vld [vmem:[%s1 + $0x3a8] sm:$0xf]
    %v261 = vld [vmem:[%s1 + $0x3ac] sm:$0xf]
    %v262 = vld [vmem:[%s1 + $0x3b0] sm:$0xf]
    %v263 = vld [vmem:[%s1 + $0x3b4] sm:$0xf]
    %v264 = vld [vmem:[%s1 + $0x3b8] sm:$0xf]
    %v265 = vld [vmem:[%s1 + $0x3bc] sm:$0xf]
    %v266 = vld [vmem:[%s1 + $0x3c0] sm:$0xf]
    %v267 = vld [vmem:[%s1 + $0x3c4] sm:$0xf]
    %v268 = vld [vmem:[%s1 + $0x3c8] sm:$0xf]
    %v269 = vld [vmem:[%s1 + $0x3cc] sm:$0xf]
    %v270 = vld [vmem:[%s1 + $0x3d0] sm:$0xf]
    %v271 = vld [vmem:[%s1 + $0x3d4] sm:$0xf]
    %v272 = vld [vmem:[%s1 + $0x3d8] sm:$0xf]
    %v273 = vld [vmem:[%s1 + $0x3dc] sm:$0xf]
    %v274 = vld [vmem:[%s1 + $0x3e0] sm:$0xf]
    %v275 = vld [vmem:[%s1 + $0x3e4] sm:$0xf]
    %v276 = vld [vmem:[%s1 + $0x3e8] sm:$0xf]
    %v277 = vld [vmem:[%s1 + $0x3ec] sm:$0xf]
    %v278 = vld [vmem:[%s1 + $0x3f0] sm:$0xf]
    %v279 = vld [vmem:[%s1 + $0x3f4] sm:$0xf]
    %v280 = vld [vmem:[%s1 + $0x3f8] sm:$0xf]
    %v281 = vld [vmem:[%s1 + $0x3fc] sm:$0xf]
    %v282 = vld [vmem:[%s1 + $0x400] sm:$0xf]
    %v283 = vld [vmem:[%s1 + $0x404] sm:$0xf]
    %v284 = vld [vmem:[%s1 + $0x408] sm:$0xf]
    %v285 = vld [vmem:[%s1 + $0x40c] sm:$0xf]
    %v286 = vld [vmem:[%s1 + $0x410] sm:$0xf]
    %v287 = vld [vmem:[%s1 + $0x414] sm:$0xf]
    %v288 = vld [vmem:[%s1 + $0x418] sm:$0xf]
    %v289 = vld [vmem:[%s1 + $0x41c] sm:$0xf]
    %v290 = vld [vmem:[%s1 + $0x420] sm:$0xf]
    %v291 = vld [vmem:[%s1 + $0x424] sm:$0xf]
    %v292 = vld [vmem:[%s1 + $0x428] sm:$0xf]
    %v293 = vld [vmem:[%s1 + $0x42c] sm:$0xf]
    %v294 = vld [vmem:[%s1 + $0x430] sm:$0xf]
    %v295 = vld [vmem:[%s1 + $0x434] sm:$0xf]
    %v296 = vld [vmem:[%s1 + $0x438] sm:$0xf]
    %v297 = vld [vmem:[%s1 + $0x43c] sm:$0xf]
    %v298 = vld [vmem:[%s1 + $0x440] sm:$0xf]
    %v299 = vld [vmem:[%s1 + $0x444] sm:$0xf]
    %v300 = vld [vmem:[%s1 + $0x448] sm:$0xf]
    %v301 = vld [vmem:[%s1 + $0x44c] sm:$0xf]
    %v302 = vld [vmem:[%s1 + $0x450] sm:$0xf]
    %v303 = vld [vmem:[%s1 + $0x454] sm:$0xf]
    %v304 = vld [vmem:[%s1 + $0x458] sm:$0xf]
    %v305 = vld [vmem:[%s1 + $0x45c] sm:$0xf]
    %v306 = vld [vmem:[%s1 + $0x460] sm:$0xf]
    %v307 = vld [vmem:[%s1 + $0x464] sm:$0xf]
    %v308 = vld [vmem:[%s1 + $0x468] sm:$0xf]
    %v309 = vld [vmem:[%s1 + $0x46c] sm:$0xf]
    %v310 = vld [vmem:[%s1 + $0x470] sm:$0xf]
    %v311 = vld [vmem:[%s1 + $0x474] sm:$0xf]
    %v312 = vld [vmem:[%s1 + $0x478] sm:$0xf]
    %v313 = vld [vmem:[%s1 + $0x47c] sm:$0xf]
    %v314 = vld [vmem:[%s1 + $0x480] sm:$0xf]
    %v315 = vld [vmem:[%s1 + $0x484] sm:$0xf]
    %v316 = vld [vmem:[%s1 + $0x488] sm:$0xf]
    %v317 = vld [vmem:[%s1 + $0x48c] sm:$0xf]
    %v318 = vld [vmem:[%s1 + $0x490] sm:$0xf]
    %v319 = vld [vmem:[%s1 + $0x494] sm:$0xf]
    %v320 = vld [vmem:[%s1 + $0x498] sm:$0xf]
    %v321 = vld [vmem:[%s1 + $0x49c] sm:$0xf]
    %v322 = vld [vmem:[%s1 + $0x4a0] sm:$0xf]
    %v323 = vld [vmem:[%s1 + $0x4a4] sm:$0xf]
    %v324 = vld [vmem:[%s1 + $0x4a8] sm:$0xf]
    %v325 = vld [vmem:[%s1 + $0x4ac] sm:$0xf]
    %v326 = vld [vmem:[%s1 + $0x4b0] sm:$0xf]
    %v327 = vld [vmem:[%s1 + $0x4b4] sm:$0xf]
    %v328 = vld [vmem:[%s1 + $0x4b8] sm:$0xf]
    %v329 = vld [vmem:[%s1 + $0x4bc] sm:$0xf]
    %v330 = vld [vmem:[%s1 + $0x4c0] sm:$0xf]
    %v331 = vld [vmem:[%s1 + $0x4c4] sm:$0xf]
    %v332 = vld [vmem:[%s1 + $0x4c8] sm:$0xf]
    %v333 = vld [vmem:[%s1 + $0x4cc] sm:$0xf]
    %v334 = vld [vmem:[%s1 + $0x4d0] sm:$0xf]
    %v335 = vld [vmem:[%s1 + $0x4d4] sm:$0xf]
    %v336 = vld [vmem:[%s1 + $0x4d8] sm:$0xf]
    %v337 = vld [vmem:[%s1 + $0x4dc] sm:$0xf]
    %v338 = vld [vmem:[%s1 + $0x4e0] sm:$0xf]
    %v339 = vld [vmem:[%s1 + $0x4e4] sm:$0xf]
    %v340 = vld [vmem:[%s1 + $0x4e8] sm:$0xf]
    %v341 = vld [vmem:[%s1 + $0x4ec] sm:$0xf]
    %v342 = vld [vmem:[%s1 + $0x4f0] sm:$0xf]
    %v343 = vld [vmem:[%s1 + $0x4f4] sm:$0xf]
    %v344 = vld [vmem:[%s1 + $0x4f8] sm:$0xf]
    %v345 = vld [vmem:[%s1 + $0x4fc] sm:$0xf]
    %v346 = vld [vmem:[%s1 + $0x500] sm:$0xf]
    %v347 = vld [vmem:[%s1 + $0x504] sm:$0xf]
    %v348 = vld [vmem:[%s1 + $0x508] sm:$0xf]
    %v349 = vld [vmem:[%s1 + $0x50c] sm:$0xf]
    %v350 = vld [vmem:[%s1 + $0x510] sm:$0xf]
    %v351 = vld [vmem:[%s1 + $0x514] sm:$0xf]
    %v352 = vld [vmem:[%s1 + $0x518] sm:$0xf]
    %v353 = vld [vmem:[%s1 + $0x51c] sm:$0xf]
    %v354 = vld [vmem:[%s1 + $0x520] sm:$0xf]
    %v355 = vld [vmem:[%s1 + $0x524] sm:$0xf]
    %v356 = vld [vmem:[%s1 + $0x528] sm:$0xf]
    %v357 = vld [vmem:[%s1 + $0x52c] sm:$0xf]
    %v358 = vld [vmem:[%s1 + $0x530] sm:$0xf]
    %v359 = vld [vmem:[%s1 + $0x534] sm:$0xf]
    %v360 = vld [vmem:[%s1 + $0x538] sm:$0xf]
    %v361 = vld [vmem:[%s1 + $0x53c] sm:$0xf]
    %v362 = vld [vmem:[%s1 + $0x540] sm:$0xf]
    %v363 = vld [vmem:[%s1 + $0x544] sm:$0xf]
    %v364 = vld [vmem:[%s1 + $0x548] sm:$0xf]
    %v365 = vld [vmem:[%s1 + $0x54c] sm:$0xf]
    %v366 = vld [vmem:[%s1 + $0x550] sm:$0xf]
    %v367 = vld [vmem:[%s1 + $0x554] sm:$0xf]
    %v368 = vld [vmem:[%s1 + $0x558] sm:$0xf]
    %v369 = vld [vmem:[%s1 + $0x55c] sm:$0xf]
    %v370 = vld [vmem:[%s1 + $0x560] sm:$0xf]
    %v371 = vld [vmem:[%s1 + $0x564] sm:$0xf]
    %v372 = vld [vmem:[%s1 + $0x568] sm:$0xf]
    %v373 = vld [vmem:[%s1 + $0x56c] sm:$0xf]
    %v374 = vld [vmem:[%s1 + $0x570] sm:$0xf]
    %v375 = vld [vmem:[%s1 + $0x574] sm:$0xf]
    %v376 = vld [vmem:[%s1 + $0x578] sm:$0xf]
    %v377 = vld [vmem:[%s1 + $0x57c] sm:$0xf]
    %v378 = vld [vmem:[%s1 + $0x580] sm:$0xf]
    %v379 = vld [vmem:[%s1 + $0x584] sm:$0xf]
    %v380 = vld [vmem:[%s1 + $0x588] sm:$0xf]
    %v381 = vld [vmem:[%s1 + $0x58c] sm:$0xf]
    %v382 = vld [vmem:[%s1 + $0x590] sm:$0xf]
    %v383 = vld [vmem:[%s1 + $0x594] sm:$0xf]
    %v384 = vld [vmem:[%s1 + $0x598] sm:$0xf]
    %v385 = vld [vmem:[%s1 + $0x59c] sm:$0xf]
    %v386 = vld [vmem:[%s1 + $0x5a0] sm:$0xf]
    %v387 = vld [vmem:[%s1 + $0x5a4] sm:$0xf]
    %v388 = vld [vmem:[%s1 + $0x5a8] sm:$0xf]
    %v389 = vld [vmem:[%s1 + $0x5ac] sm:$0xf]
    %v390 = vld [vmem:[%s1 + $0x5b0] sm:$0xf]
    %v391 = vld [vmem:[%s1 + $0x5b4] sm:$0xf]
    %v392 = vld [vmem:[%s1 + $0x5b8] sm:$0xf]
    %v393 = vld [vmem:[%s1 + $0x5bc] sm:$0xf]
    %v394 = vld [vmem:[%s1 + $0x5c0] sm:$0xf]
    %v395 = vld [vmem:[%s1 + $0x5c4] sm:$0xf]
    %v396 = vld [vmem:[%s1 + $0x5c8] sm:$0xf]
    %v397 = vld [vmem:[%s1 + $0x5cc] sm:$0xf]
    %v398 = vld [vmem:[%s1 + $0x5d0] sm:$0xf]
    %v399 = vld [vmem:[%s1 + $0x5d4] sm:$0xf]
    %v400 = vld [vmem:[%s1 + $0x5d8] sm:$0xf]
    %v401 = vld [vmem:[%s1 + $0x5dc] sm:$0xf]
    %v402 = vld [vmem:[%s1 + $0x5e0] sm:$0xf]
    %v403 = vld [vmem:[%s1 + $0x5e4] sm:$0xf]
    %v404 = vld [vmem:[%s1 + $0x5e8] sm:$0xf]
    %v405 = vld [vmem:[%s1 + $0x5ec] sm:$0xf]
    %v406 = vld [vmem:[%s1 + $0x5f0] sm:$0xf]
    %v407 = vld [vmem:[%s1 + $0x5f4] sm:$0xf]
    %v408 = vld [vmem:[%s1 + $0x5f8] sm:$0xf]
    %v409 = vld [vmem:[%s1 + $0x5fc] sm:$0xf]
    %v410 = vld [vmem:[%s1 + $0x600] sm:$0xf]
    %v411 = vld [vmem:[%s1 + $0x604] sm:$0xf]
    %v412 = vld [vmem:[%s1 + $0x608] sm:$0xf]
    %v413 = vld [vmem:[%s1 + $0x60c] sm:$0xf]
    %v414 = vld [vmem:[%s1 + $0x610] sm:$0xf]
    %v415 = vld [vmem:[%s1 + $0x614] sm:$0xf]
    %v416 = vld [vmem:[%s1 + $0x618] sm:$0xf]
    %v417 = vld [vmem:[%s1 + $0x61c] sm:$0xf]
    %v418 = vld [vmem:[%s2] sm:$0x1]
    %v420 = vperm.slane %v418, 0
    %423 = vst [vmem:[#allocation1] ss:$9 sm:$0xff] %v22
    %v424 = vld [vmem:[#allocation1] sm:$0xff]
    %v425 = vld [vmem:[#allocation1 + $0x9] sm:$0xff]
    %v426 = vld [vmem:[#allocation1 + $0x12] sm:$0xff]
    %v427 = vld [vmem:[#allocation1 + $0x1b] sm:$0xff]
    %v428 = vld [vmem:[#allocation1 + $0x24] sm:$0xff]
    %v429 = vld [vmem:[#allocation1 + $0x2d] sm:$0xff]
    %v430 = vld [vmem:[#allocation1 + $0x36] sm:$0xff]
    %v431 = vld [vmem:[#allocation1 + $0x3f] sm:$0xff]
    %433 = vst [vmem:[#allocation1] ss:$9 sm:$0xff] %v23
    %v434 = vld [vmem:[#allocation1] sm:$0xff]
    %v435 = vld [vmem:[#allocation1 + $0x9] sm:$0xff]
    %v436 = vld [vmem:[#allocation1 + $0x12] sm:$0xff]
    %v437 = vld [vmem:[#allocation1 + $0x1b] sm:$0xff]
    %v438 = vld [vmem:[#allocation1 + $0x24] sm:$0xff]
    %v439 = vld [vmem:[#allocation1 + $0x2d] sm:$0xff]
    %v440 = vld [vmem:[#allocation1 + $0x36] sm:$0xff]
    %v441 = vld [vmem:[#allocation1 + $0x3f] sm:$0xff]
    %443 = vst [vmem:[#allocation1] ss:$9 sm:$0xff] %v24
    %v444 = vld [vmem:[#allocation1] sm:$0xff]
    %v445 = vld [vmem:[#allocation1 + $0x9] sm:$0xff]
    %v446 = vld [vmem:[#allocation1 + $0x12] sm:$0xff]
    %v447 = vld [vmem:[#allocation1 + $0x1b] sm:$0xff]
    %v448 = vld [vmem:[#allocation1 + $0x24] sm:$0xff]
    %v449 = vld [vmem:[#allocation1 + $0x2d] sm:$0xff]
    %v450 = vld [vmem:[#allocation1 + $0x36] sm:$0xff]
    %v451 = vld [vmem:[#allocation1 + $0x3f] sm:$0xff]
    %453 = vst [vmem:[#allocation1] ss:$9 sm:$0xff] %v25
    %v454 = vld [vmem:[#allocation1] sm:$0xff]
    %v871 = vunpack.c.l.b16 %v26
    %v872 = vunpack.c.l.b16 %v27
    %v873 = vunpack.c.l.b16 %v28
    %v874 = vunpack.c.l.b16 %v29
    %v875 = vunpack.c.l.b16 %v30
    %v876 = vunpack.c.l.b16 %v31
    %v877 = vunpack.c.l.b16 %v32
    %v878 = vunpack.c.l.b16 %v33
    %v879 = vunpack.c.l.b16 %v34
    %v880 = vunpack.c.l.b16 %v35
    %v881 = vunpack.c.l.b16 %v36
    %v882 = vunpack.c.l.b16 %v37
    %v883 = vunpack.c.l.b16 %v38
    %v884 = vunpack.c.l.b16 %v39
    %v885 = vunpack.c.l.b16 %v40
    %v886 = vunpack.c.l.b16 %v41
    %v887 = vunpack.c.l.b16 %v42
    %v888 = vunpack.c.l.b16 %v43
    %v889 = vunpack.c.l.b16 %v44
    %v890 = vunpack.c.l.b16 %v45
    %v891 = vunpack.c.l.b16 %v46
    %v892 = vunpack.c.l.b16 %v47
    %v893 = vunpack.c.l.b16 %v48
    %v894 = vunpack.c.l.b16 %v49
    %v895 = vunpack.c.l.b16 %v50
    %v896 = vunpack.c.l.b16 %v51
    %v897 = vunpack.c.l.b16 %v52
    %v898 = vunpack.c.l.b16 %v53
    %v899 = vunpack.c.l.b16 %v54
    %v900 = vunpack.c.l.b16 %v55
    %v901 = vunpack.c.l.b16 %v56
    %v902 = vunpack.c.l.b16 %v57
    %v903 = vunpack.c.l.b16 %v58
    %v904 = vunpack.c.l.b16 %v59
    %v905 = vunpack.c.l.b16 %v60
    %v906 = vunpack.c.l.b16 %v61
    %v907 = vunpack.c.l.b16 %v62
    %v908 = vunpack.c.l.b16 %v63
    %v909 = vunpack.c.l.b16 %v64
    %v910 = vunpack.c.l.b16 %v65
    %v911 = vunpack.c.l.b16 %v66
    %v912 = vunpack.c.l.b16 %v67
    %v913 = vunpack.c.l.b16 %v68
    %v914 = vunpack.c.l.b16 %v69
    %v915 = vunpack.c.l.b16 %v70
    %v916 = vunpack.c.l.b16 %v71
    %v917 = vunpack.c.l.b16 %v72
    %v918 = vunpack.c.l.b16 %v73
    %v919 = vunpack.c.l.b16 %v74
    %v920 = vunpack.c.l.b16 %v75
    %v921 = vunpack.c.l.b16 %v76
    %v922 = vunpack.c.l.b16 %v77
    %v923 = vunpack.c.l.b16 %v78
    %v924 = vunpack.c.l.b16 %v79
    %v925 = vunpack.c.l.b16 %v80
    %v926 = vunpack.c.l.b16 %v81
    %v927 = vunpack.c.l.b16 %v82
    %v928 = vunpack.c.l.b16 %v83
    %v929 = vunpack.c.l.b16 %v84
    %v930 = vunpack.c.l.b16 %v85
    %v931 = vunpack.c.l.b16 %v86
    %v932 = vunpack.c.l.b16 %v87
    %v933 = vunpack.c.l.b16 %v88
    %v934 = vunpack.c.l.b16 %v89
    %v935 = vunpack.c.l.b16 %v90
    %v936 = vunpack.c.l.b16 %v91
    %v937 = vunpack.c.l.b16 %v92
    %v938 = vunpack.c.l.b16 %v93
    %v939 = vunpack.c.l.b16 %v94
    %v940 = vunpack.c.l.b16 %v95
    %v941 = vunpack.c.l.b16 %v96
    %v942 = vunpack.c.l.b16 %v97
    %v943 = vunpack.c.l.b16 %v98
    %v944 = vunpack.c.l.b16 %v99
    %v945 = vunpack.c.l.b16 %v100
    %v946 = vunpack.c.l.b16 %v101
    %v947 = vunpack.c.l.b16 %v102
    %v948 = vunpack.c.l.b16 %v103
    %v949 = vunpack.c.l.b16 %v104
    %v950 = vunpack.c.l.b16 %v105
    %v951 = vunpack.c.l.b16 %v106
    %v952 = vunpack.c.l.b16 %v107
    %v953 = vunpack.c.l.b16 %v108
    %v954 = vunpack.c.l.b16 %v109
    %v955 = vunpack.c.l.b16 %v110
    %v956 = vunpack.c.l.b16 %v111
    %v957 = vunpack.c.l.b16 %v112
    %v958 = vunpack.c.l.b16 %v113
    %v959 = vunpack.c.l.b16 %v114
    %v960 = vunpack.c.l.b16 %v115
    %v961 = vunpack.c.l.b16 %v116
    %v962 = vunpack.c.l.b16 %v117
    %v963 = vunpack.c.l.b16 %v118
    %v964 = vunpack.c.l.b16 %v119
    %v965 = vunpack.c.l.b16 %v120
    %v966 = vunpack.c.l.b16 %v121
    %v967 = vunpack.c.l.b16 %v122
    %v968 = vunpack.c.l.b16 %v123
    %v969 = vunpack.c.l.b16 %v124
    %v970 = vunpack.c.l.b16 %v125
    %v971 = vunpack.c.l.b16 %v126
    %v972 = vunpack.c.l.b16 %v127
    %v973 = vunpack.c.l.b16 %v128
    %v974 = vunpack.c.l.b16 %v129
    %v975 = vunpack.c.l.b16 %v130
    %v976 = vunpack.c.l.b16 %v131
    %v977 = vunpack.c.l.b16 %v132
    %v978 = vunpack.c.l.b16 %v133
    %v979 = vunpack.c.l.b16 %v134
    %v980 = vunpack.c.l.b16 %v135
    %v981 = vunpack.c.l.b16 %v136
    %v982 = vunpack.c.l.b16 %v137
    %v983 = vunpack.c.l.b16 %v138
    %v984 = vunpack.c.l.b16 %v139
    %v985 = vunpack.c.l.b16 %v140
    %v986 = vunpack.c.l.b16 %v141
    %v987 = vunpack.c.l.b16 %v142
    %v988 = vunpack.c.l.b16 %v143
    %v989 = vunpack.c.l.b16 %v144
    %v990 = vunpack.c.l.b16 %v145
    %v991 = vunpack.c.l.b16 %v146
    %v992 = vunpack.c.l.b16 %v147
    %v993 = vunpack.c.l.b16 %v148
    %v994 = vunpack.c.l.b16 %v149
    %v995 = vunpack.c.l.b16 %v150
    %v996 = vunpack.c.l.b16 %v151
    %v997 = vunpack.c.l.b16 %v152
    %v998 = vunpack.c.l.b16 %v153
    %v999 = vunpack.c.l.b16 %v154
    %v1000 = vunpack.c.l.b16 %v155
    %v1001 = vunpack.c.l.b16 %v156
    %v1002 = vunpack.c.l.b16 %v157
    %v1003 = vunpack.c.l.b16 %v158
    %v1004 = vunpack.c.l.b16 %v159
    %v1005 = vunpack.c.l.b16 %v160
    %v1006 = vunpack.c.l.b16 %v161
    %v1007 = vunpack.c.l.b16 %v162
    %v1008 = vunpack.c.l.b16 %v163
    %v1009 = vunpack.c.l.b16 %v164
    %v1010 = vunpack.c.l.b16 %v165
    %v1011 = vunpack.c.l.b16 %v166
    %v1012 = vunpack.c.l.b16 %v167
    %v1013 = vunpack.c.l.b16 %v168
    %v1014 = vunpack.c.l.b16 %v169
    %v1015 = vunpack.c.l.b16 %v170
    %v1016 = vunpack.c.l.b16 %v171
    %v1017 = vunpack.c.l.b16 %v172
    %v1018 = vunpack.c.l.b16 %v173
    %v1019 = vunpack.c.l.b16 %v174
    %v1020 = vunpack.c.l.b16 %v175
    %v1021 = vunpack.c.l.b16 %v176
    %v1022 = vunpack.c.l.b16 %v177
    %v1023 = vunpack.c.l.b16 %v178
    %v1024 = vunpack.c.l.b16 %v179
    %v1025 = vunpack.c.l.b16 %v180
    %v1026 = vunpack.c.l.b16 %v181
    %v1027 = vunpack.c.l.b16 %v182
    %v1028 = vunpack.c.l.b16 %v183
    %v1029 = vunpack.c.l.b16 %v184
    %v1030 = vunpack.c.l.b16 %v185
    %v1031 = vunpack.c.l.b16 %v186
    %v1032 = vunpack.c.l.b16 %v187
    %v1033 = vunpack.c.l.b16 %v188
    %v1034 = vunpack.c.l.b16 %v189
    %v1035 = vunpack.c.l.b16 %v190
    %v1036 = vunpack.c.l.b16 %v191
    %v1037 = vunpack.c.l.b16 %v192
    %v1038 = vunpack.c.l.b16 %v193
    %v1039 = vunpack.c.l.b16 %v194
    %v1040 = vunpack.c.l.b16 %v195
    %v1041 = vunpack.c.l.b16 %v196
    %v1042 = vunpack.c.l.b16 %v197
    %v1043 = vunpack.c.l.b16 %v198
    %v1044 = vunpack.c.l.b16 %v199
    %v1045 = vunpack.c.l.b16 %v200
    %v1046 = vunpack.c.l.b16 %v201
    %v1047 = vunpack.c.l.b16 %v202
    %v1048 = vunpack.c.l.b16 %v203
    %v1049 = vunpack.c.l.b16 %v204
    %v1050 = vunpack.c.l.b16 %v205
    %v1051 = vunpack.c.l.b16 %v206
    %v1052 = vunpack.c.l.b16 %v207
    %v1053 = vunpack.c.l.b16 %v208
    %v1054 = vunpack.c.l.b16 %v209
    %v1055 = vunpack.c.l.b16 %v210
    %v1056 = vunpack.c.l.b16 %v211
    %v1057 = vunpack.c.l.b16 %v212
    %v1058 = vunpack.c.l.b16 %v213
    %v1059 = vunpack.c.l.b16 %v214
    %v1060 = vunpack.c.l.b16 %v215
    %v1061 = vunpack.c.l.b16 %v216
    %v1062 = vunpack.c.l.b16 %v217
    %v1063 = vunpack.c.l.b16 %v218
    %v1064 = vunpack.c.l.b16 %v219
    %v1065 = vunpack.c.l.b16 %v220
    %v1066 = vunpack.c.l.b16 %v221
    %v1067 = vunpack.c.l.b16 %v222
    %v1068 = vunpack.c.l.b16 %v223
    %v1069 = vunpack.c.l.b16 %v224
    %v1070 = vunpack.c.l.b16 %v225
    %v1071 = vunpack.c.l.b16 %v226
    %v1072 = vunpack.c.l.b16 %v227
    %v1073 = vunpack.c.l.b16 %v228
    %v1074 = vunpack.c.l.b16 %v229
    %v1075 = vunpack.c.l.b16 %v230
    %v1076 = vunpack.c.l.b16 %v231
    %v1077 = vunpack.c.l.b16 %v232
    %v1078 = vunpack.c.l.b16 %v233
    %v1079 = vunpack.c.l.b16 %v234
    %v1080 = vunpack.c.l.b16 %v235
    %v1081 = vunpack.c.l.b16 %v236
    %v1082 = vunpack.c.l.b16 %v237
    %v1083 = vunpack.c.l.b16 %v238
    %v1084 = vunpack.c.l.b16 %v239
    %v1085 = vunpack.c.l.b16 %v240
    %v1086 = vunpack.c.l.b16 %v241
    %v1087 = vunpack.c.l.b16 %v242
    %v1088 = vunpack.c.l.b16 %v243
    %v1089 = vunpack.c.l.b16 %v244
    %v1090 = vunpack.c.l.b16 %v245
    %v1091 = vunpack.c.l.b16 %v246
    %v1092 = vunpack.c.l.b16 %v247
    %v1093 = vunpack.c.l.b16 %v248
    %v1094 = vunpack.c.l.b16 %v249
    %v1095 = vunpack.c.l.b16 %v250
    %v1096 = vunpack.c.l.b16 %v251
    %v1097 = vunpack.c.l.b16 %v252
    %v1098 = vunpack.c.l.b16 %v253
    %v1099 = vunpack.c.l.b16 %v254
    %v1100 = vunpack.c.l.b16 %v255
    %v1101 = vunpack.c.l.b16 %v256
    %v1102 = vunpack.c.l.b16 %v257
    %v1103 = vunpack.c.l.b16 %v258
    %v1104 = vunpack.c.l.b16 %v259
    %v1105 = vunpack.c.l.b16 %v260
    %v1106 = vunpack.c.l.b16 %v261
    %v1107 = vunpack.c.l.b16 %v262
    %v1108 = vunpack.c.l.b16 %v263
    %v1109 = vunpack.c.l.b16 %v264
    %v1110 = vunpack.c.l.b16 %v265
    %v1111 = vunpack.c.l.b16 %v266
    %v1112 = vunpack.c.l.b16 %v267
    %v1113 = vunpack.c.l.b16 %v268
    %v1114 = vunpack.c.l.b16 %v269
    %v1115 = vunpack.c.l.b16 %v270
    %v1116 = vunpack.c.l.b16 %v271
    %v1117 = vunpack.c.l.b16 %v272
    %v1118 = vunpack.c.l.b16 %v273
    %v1119 = vunpack.c.l.b16 %v274
    %v1120 = vunpack.c.l.b16 %v275
    %v1121 = vunpack.c.l.b16 %v276
    %v1122 = vunpack.c.l.b16 %v277
    %v1123 = vunpack.c.l.b16 %v278
    %v1124 = vunpack.c.l.b16 %v279
    %v1125 = vunpack.c.l.b16 %v280
    %v1126 = vunpack.c.l.b16 %v281
    %v1127 = vunpack.c.l.b16 %v282
    %v1128 = vunpack.c.l.b16 %v283
    %v1129 = vunpack.c.l.b16 %v284
    %v1130 = vunpack.c.l.b16 %v285
    %v1131 = vunpack.c.l.b16 %v286
    %v1132 = vunpack.c.l.b16 %v287
    %v1133 = vunpack.c.l.b16 %v288
    %v1134 = vunpack.c.l.b16 %v289
    %v1135 = vunpack.c.l.b16 %v290
    %v1136 = vunpack.c.l.b16 %v291
    %v1137 = vunpack.c.l.b16 %v292
    %v1138 = vunpack.c.l.b16 %v293
    %v1139 = vunpack.c.l.b16 %v294
    %v1140 = vunpack.c.l.b16 %v295
    %v1141 = vunpack.c.l.b16 %v296
    %v1142 = vunpack.c.l.b16 %v297
    %v1143 = vunpack.c.l.b16 %v298
    %v1144 = vunpack.c.l.b16 %v299
    %v1145 = vunpack.c.l.b16 %v300
    %v1146 = vunpack.c.l.b16 %v301
    %v1147 = vunpack.c.l.b16 %v302
    %v1148 = vunpack.c.l.b16 %v303
    %v1149 = vunpack.c.l.b16 %v304
    %v1150 = vunpack.c.l.b16 %v305
    %v1151 = vunpack.c.l.b16 %v306
    %v1152 = vunpack.c.l.b16 %v307
    %v1153 = vunpack.c.l.b16 %v308
    %v1154 = vunpack.c.l.b16 %v309
    %v1155 = vunpack.c.l.b16 %v310
    %v1156 = vunpack.c.l.b16 %v311
    %v1157 = vunpack.c.l.b16 %v312
    %v1158 = vunpack.c.l.b16 %v313
    %v1159 = vunpack.c.l.b16 %v314
    %v1160 = vunpack.c.l.b16 %v315
    %v1161 = vunpack.c.l.b16 %v316
    %v1162 = vunpack.c.l.b16 %v317
    %v1163 = vunpack.c.l.b16 %v318
    %v1164 = vunpack.c.l.b16 %v319
    %v1165 = vunpack.c.l.b16 %v320
    %v1166 = vunpack.c.l.b16 %v321
    %v1167 = vunpack.c.l.b16 %v322
    %v1168 = vunpack.c.l.b16 %v323
    %v1169 = vunpack.c.l.b16 %v324
    %v1170 = vunpack.c.l.b16 %v325
    %v1171 = vunpack.c.l.b16 %v326
    %v1172 = vunpack.c.l.b16 %v327
    %v1173 = vunpack.c.l.b16 %v328
    %v1174 = vunpack.c.l.b16 %v329
    %v1175 = vunpack.c.l.b16 %v330
    %v1176 = vunpack.c.l.b16 %v331
    %v1177 = vunpack.c.l.b16 %v332
    %v1178 = vunpack.c.l.b16 %v333
    %v1179 = vunpack.c.l.b16 %v334
    %v1180 = vunpack.c.l.b16 %v335
    %v1181 = vunpack.c.l.b16 %v336
    %v1182 = vunpack.c.l.b16 %v337
    %v1183 = vunpack.c.l.b16 %v338
    %v1184 = vunpack.c.l.b16 %v339
    %v1185 = vunpack.c.l.b16 %v340
    %v1186 = vunpack.c.l.b16 %v341
    %v1187 = vunpack.c.l.b16 %v342
    %v1188 = vunpack.c.l.b16 %v343
    %v1189 = vunpack.c.l.b16 %v344
    %v1190 = vunpack.c.l.b16 %v345
    %v1191 = vunpack.c.l.b16 %v346
    %v1192 = vunpack.c.l.b16 %v347
    %v1193 = vunpack.c.l.b16 %v348
    %v1194 = vunpack.c.l.b16 %v349
    %v1195 = vunpack.c.l.b16 %v350
    %v1196 = vunpack.c.l.b16 %v351
    %v1197 = vunpack.c.l.b16 %v352
    %v1198 = vunpack.c.l.b16 %v353
    %v1199 = vunpack.c.l.b16 %v354
    %v1200 = vunpack.c.l.b16 %v355
    %v1201 = vunpack.c.l.b16 %v356
    %v1202 = vunpack.c.l.b16 %v357
    %v1203 = vunpack.c.l.b16 %v358
    %v1204 = vunpack.c.l.b16 %v359
    %v1205 = vunpack.c.l.b16 %v360
    %v1206 = vunpack.c.l.b16 %v361
    %v1207 = vunpack.c.l.b16 %v362
    %v1208 = vunpack.c.l.b16 %v363
    %v1209 = vunpack.c.l.b16 %v364
    %v1210 = vunpack.c.l.b16 %v365
    %v1211 = vunpack.c.l.b16 %v366
    %v1212 = vunpack.c.l.b16 %v367
    %v1213 = vunpack.c.l.b16 %v368
    %v1214 = vunpack.c.l.b16 %v369
    %v1215 = vunpack.c.l.b16 %v370
    %v1216 = vunpack.c.l.b16 %v371
    %v1217 = vunpack.c.l.b16 %v372
    %v1218 = vunpack.c.l.b16 %v373
    %v1219 = vunpack.c.l.b16 %v374
    %v1220 = vunpack.c.l.b16 %v375
    %v1221 = vunpack.c.l.b16 %v376
    %v1222 = vunpack.c.l.b16 %v377
    %v1223 = vunpack.c.l.b16 %v378
    %v1224 = vunpack.c.l.b16 %v379
    %v1225 = vunpack.c.l.b16 %v380
    %v1226 = vunpack.c.l.b16 %v381
    %v1227 = vunpack.c.l.b16 %v382
    %v1228 = vunpack.c.l.b16 %v383
    %v1229 = vunpack.c.l.b16 %v384
    %v1230 = vunpack.c.l.b16 %v385
    %v1231 = vunpack.c.l.b16 %v386
    %v1232 = vunpack.c.l.b16 %v387
    %v1233 = vunpack.c.l.b16 %v388
    %v1234 = vunpack.c.l.b16 %v389
    %v1235 = vunpack.c.l.b16 %v390
    %v1236 = vunpack.c.l.b16 %v391
    %v1237 = vunpack.c.l.b16 %v392
    %v1238 = vunpack.c.l.b16 %v393
    %v1239 = vunpack.c.l.b16 %v394
    %v1240 = vunpack.c.l.b16 %v395
    %v1241 = vunpack.c.l.b16 %v396
    %v1242 = vunpack.c.l.b16 %v397
    %v1243 = vunpack.c.l.b16 %v398
    %v1244 = vunpack.c.l.b16 %v399
    %v1245 = vunpack.c.l.b16 %v400
    %v1246 = vunpack.c.l.b16 %v401
    %v1247 = vunpack.c.l.b16 %v402
    %v1248 = vunpack.c.l.b16 %v403
    %v1249 = vunpack.c.l.b16 %v404
    %v1250 = vunpack.c.l.b16 %v405
    %v1251 = vunpack.c.l.b16 %v406
    %v1252 = vunpack.c.l.b16 %v407
    %v1253 = vunpack.c.l.b16 %v408
    %v1254 = vunpack.c.l.b16 %v409
    %v1255 = vunpack.c.l.b16 %v410
    %v1256 = vunpack.c.l.b16 %v411
    %v1257 = vunpack.c.l.b16 %v412
    %v1258 = vunpack.c.l.b16 %v413
    %v1259 = vunpack.c.l.b16 %v414
    %v1260 = vunpack.c.l.b16 %v415
    %v1261 = vunpack.c.l.b16 %v416
    %v1262 = vunpack.c.l.b16 %v417
    %v1263 = vpack.c.b16 %v872, %v871
    %v1264 = vpack.c.b16 %v874, %v873
    %v1265 = vpack.c.b16 %v876, %v875
    %v1266 = vpack.c.b16 %v878, %v877
    %v1267 = vpack.c.b16 %v880, %v879
    %v1268 = vpack.c.b16 %v882, %v881
    %v1269 = vpack.c.b16 %v884, %v883
    %v1270 = vpack.c.b16 %v886, %v885
    %v1271 = vpack.c.b16 %v888, %v887
    %v1272 = vpack.c.b16 %v890, %v889
    %v1273 = vpack.c.b16 %v892, %v891
    %v1274 = vpack.c.b16 %v894, %v893
    %v1275 = vpack.c.b16 %v896, %v895
    %v1276 = vpack.c.b16 %v898, %v897
    %v1277 = vpack.c.b16 %v900, %v899
    %v1278 = vpack.c.b16 %v902, %v901
    %v1279 = vpack.c.b16 %v904, %v903
    %v1280 = vpack.c.b16 %v906, %v905
    %v1281 = vpack.c.b16 %v908, %v907
    %v1282 = vpack.c.b16 %v910, %v909
    %v1283 = vpack.c.b16 %v912, %v911
    %v1284 = vpack.c.b16 %v914, %v913
    %v1285 = vpack.c.b16 %v916, %v915
    %v1286 = vpack.c.b16 %v918, %v917
    %v1287 = vpack.c.b16 %v920, %v919
    %v1288 = vpack.c.b16 %v922, %v921
    %v1289 = vpack.c.b16 %v924, %v923
    %v1290 = vpack.c.b16 %v926, %v925
    %v1291 = vpack.c.b16 %v928, %v927
    %v1292 = vpack.c.b16 %v930, %v929
    %v1293 = vpack.c.b16 %v932, %v931
    %v1294 = vpack.c.b16 %v934, %v933
    %v1295 = vpack.c.b16 %v936, %v935
    %v1296 = vpack.c.b16 %v938, %v937
    %v1297 = vpack.c.b16 %v940, %v939
    %v1298 = vpack.c.b16 %v942, %v941
    %v1299 = vpack.c.b16 %v944, %v943
    %v1300 = vpack.c.b16 %v946, %v945
    %v1301 = vpack.c.b16 %v948, %v947
    %v1302 = vpack.c.b16 %v950, %v949
    %v1303 = vpack.c.b16 %v952, %v951
    %v1304 = vpack.c.b16 %v954, %v953
    %v1305 = vpack.c.b16 %v956, %v955
    %v1306 = vpack.c.b16 %v958, %v957
    %v1307 = vpack.c.b16 %v960, %v959
    %v1308 = vpack.c.b16 %v962, %v961
    %v1309 = vpack.c.b16 %v964, %v963
    %v1310 = vpack.c.b16 %v966, %v965
    %v1311 = vpack.c.b16 %v968, %v967
    %v1312 = vpack.c.b16 %v970, %v969
    %v1313 = vpack.c.b16 %v972, %v971
    %v1314 = vpack.c.b16 %v974, %v973
    %v1315 = vpack.c.b16 %v976, %v975
    %v1316 = vpack.c.b16 %v978, %v977
    %v1317 = vpack.c.b16 %v980, %v979
    %v1318 = vpack.c.b16 %v982, %v981
    %v1319 = vpack.c.b16 %v984, %v983
    %v1320 = vpack.c.b16 %v986, %v985
    %v1321 = vpack.c.b16 %v988, %v987
    %v1322 = vpack.c.b16 %v990, %v989
    %v1323 = vpack.c.b16 %v992, %v991
    %v1324 = vpack.c.b16 %v994, %v993
    %v1325 = vpack.c.b16 %v996, %v995
    %v1326 = vpack.c.b16 %v998, %v997
    %v1327 = vpack.c.b16 %v1000, %v999
    %v1328 = vpack.c.b16 %v1002, %v1001
    %v1329 = vpack.c.b16 %v1004, %v1003
    %v1330 = vpack.c.b16 %v1006, %v1005
    %v1331 = vpack.c.b16 %v1008, %v1007
    %v1332 = vpack.c.b16 %v1010, %v1009
    %v1333 = vpack.c.b16 %v1012, %v1011
    %v1334 = vpack.c.b16 %v1014, %v1013
    %v1335 = vpack.c.b16 %v1016, %v1015
    %v1336 = vpack.c.b16 %v1018, %v1017
    %v1337 = vpack.c.b16 %v1020, %v1019
    %v1338 = vpack.c.b16 %v1022, %v1021
    %v1339 = vpack.c.b16 %v1024, %v1023
    %v1340 = vpack.c.b16 %v1026, %v1025
    %v1341 = vpack.c.b16 %v1028, %v1027
    %v1342 = vpack.c.b16 %v1030, %v1029
    %v1343 = vpack.c.b16 %v1032, %v1031
    %v1344 = vpack.c.b16 %v1034, %v1033
    %v1345 = vpack.c.b16 %v1036, %v1035
    %v1346 = vpack.c.b16 %v1038, %v1037
    %v1347 = vpack.c.b16 %v1040, %v1039
    %v1348 = vpack.c.b16 %v1042, %v1041
    %v1349 = vpack.c.b16 %v1044, %v1043
    %v1350 = vpack.c.b16 %v1046, %v1045
    %v1351 = vpack.c.b16 %v1048, %v1047
    %v1352 = vpack.c.b16 %v1050, %v1049
    %v1353 = vpack.c.b16 %v1052, %v1051
    %v1354 = vpack.c.b16 %v1054, %v1053
    %v1355 = vpack.c.b16 %v1056, %v1055
    %v1356 = vpack.c.b16 %v1058, %v1057
    %v1357 = vpack.c.b16 %v1060, %v1059
    %v1358 = vpack.c.b16 %v1062, %v1061
    %v1359 = vpack.c.b16 %v1064, %v1063
    %v1360 = vpack.c.b16 %v1066, %v1065
    %v1361 = vpack.c.b16 %v1068, %v1067
    %v1362 = vpack.c.b16 %v1070, %v1069
    %v1363 = vpack.c.b16 %v1072, %v1071
    %v1364 = vpack.c.b16 %v1074, %v1073
    %v1365 = vpack.c.b16 %v1076, %v1075
    %v1366 = vpack.c.b16 %v1078, %v1077
    %v1367 = vpack.c.b16 %v1080, %v1079
    %v1368 = vpack.c.b16 %v1082, %v1081
    %v1369 = vpack.c.b16 %v1084, %v1083
    %v1370 = vpack.c.b16 %v1086, %v1085
    %v1371 = vpack.c.b16 %v1088, %v1087
    %v1372 = vpack.c.b16 %v1090, %v1089
    %v1373 = vpack.c.b16 %v1092, %v1091
    %v1374 = vpack.c.b16 %v1094, %v1093
    %v1375 = vpack.c.b16 %v1096, %v1095
    %v1376 = vpack.c.b16 %v1098, %v1097
    %v1377 = vpack.c.b16 %v1100, %v1099
    %v1378 = vpack.c.b16 %v1102, %v1101
    %v1379 = vpack.c.b16 %v1104, %v1103
    %v1380 = vpack.c.b16 %v1106, %v1105
    %v1381 = vpack.c.b16 %v1108, %v1107
    %v1382 = vpack.c.b16 %v1110, %v1109
    %v1383 = vpack.c.b16 %v1112, %v1111
    %v1384 = vpack.c.b16 %v1114, %v1113
    %v1385 = vpack.c.b16 %v1116, %v1115
    %v1386 = vpack.c.b16 %v1118, %v1117
    %v1387 = vpack.c.b16 %v1120, %v1119
    %v1388 = vpack.c.b16 %v1122, %v1121
    %v1389 = vpack.c.b16 %v1124, %v1123
    %v1390 = vpack.c.b16 %v1126, %v1125
    %v1391 = vpack.c.b16 %v1128, %v1127
    %v1392 = vpack.c.b16 %v1130, %v1129
    %v1393 = vpack.c.b16 %v1132, %v1131
    %v1394 = vpack.c.b16 %v1134, %v1133
    %v1395 = vpack.c.b16 %v1136, %v1135
    %v1396 = vpack.c.b16 %v1138, %v1137
    %v1397 = vpack.c.b16 %v1140, %v1139
    %v1398 = vpack.c.b16 %v1142, %v1141
    %v1399 = vpack.c.b16 %v1144, %v1143
    %v1400 = vpack.c.b16 %v1146, %v1145
    %v1401 = vpack.c.b16 %v1148, %v1147
    %v1402 = vpack.c.b16 %v1150, %v1149
    %v1403 = vpack.c.b16 %v1152, %v1151
    %v1404 = vpack.c.b16 %v1154, %v1153
    %v1405 = vpack.c.b16 %v1156, %v1155
    %v1406 = vpack.c.b16 %v1158, %v1157
    %v1407 = vpack.c.b16 %v1160, %v1159
    %v1408 = vpack.c.b16 %v1162, %v1161
    %v1409 = vpack.c.b16 %v1164, %v1163
    %v1410 = vpack.c.b16 %v1166, %v1165
    %v1411 = vpack.c.b16 %v1168, %v1167
    %v1412 = vpack.c.b16 %v1170, %v1169
    %v1413 = vpack.c.b16 %v1172, %v1171
    %v1414 = vpack.c.b16 %v1174, %v1173
    %v1415 = vpack.c.b16 %v1176, %v1175
    %v1416 = vpack.c.b16 %v1178, %v1177
    %v1417 = vpack.c.b16 %v1180, %v1179
    %v1418 = vpack.c.b16 %v1182, %v1181
    %v1419 = vpack.c.b16 %v1184, %v1183
    %v1420 = vpack.c.b16 %v1186, %v1185
    %v1421 = vpack.c.b16 %v1188, %v1187
    %v1422 = vpack.c.b16 %v1190, %v1189
    %v1423 = vpack.c.b16 %v1192, %v1191
    %v1424 = vpack.c.b16 %v1194, %v1193
    %v1425 = vpack.c.b16 %v1196, %v1195
    %v1426 = vpack.c.b16 %v1198, %v1197
    %v1427 = vpack.c.b16 %v1200, %v1199
    %v1428 = vpack.c.b16 %v1202, %v1201
    %v1429 = vpack.c.b16 %v1204, %v1203
    %v1430 = vpack.c.b16 %v1206, %v1205
    %v1431 = vpack.c.b16 %v1208, %v1207
    %v1432 = vpack.c.b16 %v1210, %v1209
    %v1433 = vpack.c.b16 %v1212, %v1211
    %v1434 = vpack.c.b16 %v1214, %v1213
    %v1435 = vpack.c.b16 %v1216, %v1215
    %v1436 = vpack.c.b16 %v1218, %v1217
    %v1437 = vpack.c.b16 %v1220, %v1219
    %v1438 = vpack.c.b16 %v1222, %v1221
    %v1439 = vpack.c.b16 %v1224, %v1223
    %v1440 = vpack.c.b16 %v1226, %v1225
    %v1441 = vpack.c.b16 %v1228, %v1227
    %v1442 = vpack.c.b16 %v1230, %v1229
    %v1443 = vpack.c.b16 %v1232, %v1231
    %v1444 = vpack.c.b16 %v1234, %v1233
    %v1445 = vpack.c.b16 %v1236, %v1235
    %v1446 = vpack.c.b16 %v1238, %v1237
    %v1447 = vpack.c.b16 %v1240, %v1239
    %v1448 = vpack.c.b16 %v1242, %v1241
    %v1449 = vpack.c.b16 %v1244, %v1243
    %v1450 = vpack.c.b16 %v1246, %v1245
    %v1451 = vpack.c.b16 %v1248, %v1247
    %v1452 = vpack.c.b16 %v1250, %v1249
    %v1453 = vpack.c.b16 %v1252, %v1251
    %v1454 = vpack.c.b16 %v1254, %v1253
    %v1455 = vpack.c.b16 %v1256, %v1255
    %v1456 = vpack.c.b16 %v1258, %v1257
    %v1457 = vpack.c.b16 %v1260, %v1259
    %v1458 = vpack.c.b16 %v1262, %v1261
    %vm1655 = vcmask 523264
    %v1656 = vsel %vm1655, %v454, 0
    %1658 = vmatpush.bf16.msra.mxu0 %v1270
    %1659 = vmatpush.bf16.msra.mxu0 %v1269
    %1660 = vmatpush.bf16.msra.mxu0 %v1268
    %1661 = vmatpush.bf16.msra.mxu0 %v1267
    %1662 = vmatpush.bf16.msra.mxu0 %v1266
    %1663 = vmatpush.bf16.msra.mxu0 %v1265
    %1664 = vmatpush.bf16.msra.mxu0 %v1264
    %1665 = vmatpush.bf16.msra.mxu0 %v1263
    %1666 = vmatmul.bf16.gmra.mxu0 %v424
    %v1667 = vpop.f32.mrf.mxu0
    %v1668 = vadd.f32 %v420, %v1667
    %v1669 = vpop.f32.mrf.mxu0
    %1670 = vdwg.mxu0
    %1671 = vmatpush.bf16.msra.mxu0 %v1278
    %1672 = vmatpush.bf16.msra.mxu0 %v1277
    %1673 = vmatpush.bf16.msra.mxu0 %v1276
    %1674 = vmatpush.bf16.msra.mxu0 %v1275
    %1675 = vmatpush.bf16.msra.mxu0 %v1274
    %1676 = vmatpush.bf16.msra.mxu0 %v1273
    %1677 = vmatpush.bf16.msra.mxu0 %v1272
    %1678 = vmatpush.bf16.msra.mxu0 %v1271
    %1679 = vmatmul.bf16.gmra.mxu0 %v425
    %v1680 = vpop.f32.mrf.mxu0
    %v1681 = vadd.f32 %v1668, %v1680
    %v1682 = vpop.f32.mrf.mxu0
    %1683 = vdwg.mxu0
    %1684 = vmatpush.bf16.msra.mxu0 %v1286
    %1685 = vmatpush.bf16.msra.mxu0 %v1285
    %1686 = vmatpush.bf16.msra.mxu0 %v1284
    %1687 = vmatpush.bf16.msra.mxu0 %v1283
    %1688 = vmatpush.bf16.msra.mxu0 %v1282
    %1689 = vmatpush.bf16.msra.mxu0 %v1281
    %1690 = vmatpush.bf16.msra.mxu0 %v1280
    %1691 = vmatpush.bf16.msra.mxu0 %v1279
    %1692 = vmatmul.bf16.gmra.mxu0 %v426
    %v1693 = vpop.f32.mrf.mxu0
    %v1694 = vadd.f32 %v1681, %v1693
    %v1695 = vpop.f32.mrf.mxu0
    %1696 = vdwg.mxu0
    %1697 = vmatpush.bf16.msra.mxu0 %v1294
    %1698 = vmatpush.bf16.msra.mxu0 %v1293
    %1699 = vmatpush.bf16.msra.mxu0 %v1292
    %1700 = vmatpush.bf16.msra.mxu0 %v1291
    %1701 = vmatpush.bf16.msra.mxu0 %v1290
    %1702 = vmatpush.bf16.msra.mxu0 %v1289
    %1703 = vmatpush.bf16.msra.mxu0 %v1288
    %1704 = vmatpush.bf16.msra.mxu0 %v1287
    %1705 = vmatmul.bf16.gmra.mxu0 %v427
    %v1706 = vpop.f32.mrf.mxu0
    %v1707 = vadd.f32 %v1694, %v1706
    %v1708 = vpop.f32.mrf.mxu0
    %1709 = vdwg.mxu0
    %1710 = vmatpush.bf16.msra.mxu0 %v1302
    %1711 = vmatpush.bf16.msra.mxu0 %v1301
    %1712 = vmatpush.bf16.msra.mxu0 %v1300
    %1713 = vmatpush.bf16.msra.mxu0 %v1299
    %1714 = vmatpush.bf16.msra.mxu0 %v1298
    %1715 = vmatpush.bf16.msra.mxu0 %v1297
    %1716 = vmatpush.bf16.msra.mxu0 %v1296
    %1717 = vmatpush.bf16.msra.mxu0 %v1295
    %1718 = vmatmul.bf16.gmra.mxu0 %v428
    %v1719 = vpop.f32.mrf.mxu0
    %v1720 = vadd.f32 %v1707, %v1719
    %v1721 = vpop.f32.mrf.mxu0
    %1722 = vdwg.mxu0
    %1723 = vmatpush.bf16.msra.mxu0 %v1310
    %1724 = vmatpush.bf16.msra.mxu0 %v1309
    %1725 = vmatpush.bf16.msra.mxu0 %v1308
    %1726 = vmatpush.bf16.msra.mxu0 %v1307
    %1727 = vmatpush.bf16.msra.mxu0 %v1306
    %1728 = vmatpush.bf16.msra.mxu0 %v1305
    %1729 = vmatpush.bf16.msra.mxu0 %v1304
    %1730 = vmatpush.bf16.msra.mxu0 %v1303
    %1731 = vmatmul.bf16.gmra.mxu0 %v429
    %v1732 = vpop.f32.mrf.mxu0
    %v1733 = vadd.f32 %v1720, %v1732
    %v1734 = vpop.f32.mrf.mxu0
    %1735 = vdwg.mxu0
    %1736 = vmatpush.bf16.msra.mxu0 %v1318
    %1737 = vmatpush.bf16.msra.mxu0 %v1317
    %1738 = vmatpush.bf16.msra.mxu0 %v1316
    %1739 = vmatpush.bf16.msra.mxu0 %v1315
    %1740 = vmatpush.bf16.msra.mxu0 %v1314
    %1741 = vmatpush.bf16.msra.mxu0 %v1313
    %1742 = vmatpush.bf16.msra.mxu0 %v1312
    %1743 = vmatpush.bf16.msra.mxu0 %v1311
    %1744 = vmatmul.bf16.gmra.mxu0 %v430
    %v1745 = vpop.f32.mrf.mxu0
    %v1746 = vadd.f32 %v1733, %v1745
    %v1747 = vpop.f32.mrf.mxu0
    %1748 = vdwg.mxu0
    %1749 = vmatpush.bf16.msra.mxu0 %v1326
    %1750 = vmatpush.bf16.msra.mxu0 %v1325
    %1751 = vmatpush.bf16.msra.mxu0 %v1324
    %1752 = vmatpush.bf16.msra.mxu0 %v1323
    %1753 = vmatpush.bf16.msra.mxu0 %v1322
    %1754 = vmatpush.bf16.msra.mxu0 %v1321
    %1755 = vmatpush.bf16.msra.mxu0 %v1320
    %1756 = vmatpush.bf16.msra.mxu0 %v1319
    %1757 = vmatmul.bf16.gmra.mxu0 %v431
    %v1758 = vpop.f32.mrf.mxu0
    %v1759 = vadd.f32 %v1746, %v1758
    %v1760 = vpop.f32.mrf.mxu0
    %1761 = vdwg.mxu0
    %1762 = vmatpush.bf16.msra.mxu0 %v1334
    %1763 = vmatpush.bf16.msra.mxu0 %v1333
    %1764 = vmatpush.bf16.msra.mxu0 %v1332
    %1765 = vmatpush.bf16.msra.mxu0 %v1331
    %1766 = vmatpush.bf16.msra.mxu0 %v1330
    %1767 = vmatpush.bf16.msra.mxu0 %v1329
    %1768 = vmatpush.bf16.msra.mxu0 %v1328
    %1769 = vmatpush.bf16.msra.mxu0 %v1327
    %1770 = vmatmul.bf16.gmra.mxu0 %v434
    %v1771 = vpop.f32.mrf.mxu0
    %v1772 = vadd.f32 %v1759, %v1771
    %v1773 = vpop.f32.mrf.mxu0
    %1774 = vdwg.mxu0
    %1775 = vmatpush.bf16.msra.mxu0 %v1342
    %1776 = vmatpush.bf16.msra.mxu0 %v1341
    %1777 = vmatpush.bf16.msra.mxu0 %v1340
    %1778 = vmatpush.bf16.msra.mxu0 %v1339
    %1779 = vmatpush.bf16.msra.mxu0 %v1338
    %1780 = vmatpush.bf16.msra.mxu0 %v1337
    %1781 = vmatpush.bf16.msra.mxu0 %v1336
    %1782 = vmatpush.bf16.msra.mxu0 %v1335
    %1783 = vmatmul.bf16.gmra.mxu0 %v435
    %v1784 = vpop.f32.mrf.mxu0
    %v1785 = vadd.f32 %v1772, %v1784
    %v1786 = vpop.f32.mrf.mxu0
    %1787 = vdwg.mxu0
    %1788 = vmatpush.bf16.msra.mxu0 %v1350
    %1789 = vmatpush.bf16.msra.mxu0 %v1349
    %1790 = vmatpush.bf16.msra.mxu0 %v1348
    %1791 = vmatpush.bf16.msra.mxu0 %v1347
    %1792 = vmatpush.bf16.msra.mxu0 %v1346
    %1793 = vmatpush.bf16.msra.mxu0 %v1345
    %1794 = vmatpush.bf16.msra.mxu0 %v1344
    %1795 = vmatpush.bf16.msra.mxu0 %v1343
    %1796 = vmatmul.bf16.gmra.mxu0 %v436
    %v1797 = vpop.f32.mrf.mxu0
    %v1798 = vadd.f32 %v1785, %v1797
    %v1799 = vpop.f32.mrf.mxu0
    %1800 = vdwg.mxu0
    %1801 = vmatpush.bf16.msra.mxu0 %v1358
    %1802 = vmatpush.bf16.msra.mxu0 %v1357
    %1803 = vmatpush.bf16.msra.mxu0 %v1356
    %1804 = vmatpush.bf16.msra.mxu0 %v1355
    %1805 = vmatpush.bf16.msra.mxu0 %v1354
    %1806 = vmatpush.bf16.msra.mxu0 %v1353
    %1807 = vmatpush.bf16.msra.mxu0 %v1352
    %1808 = vmatpush.bf16.msra.mxu0 %v1351
    %1809 = vmatmul.bf16.gmra.mxu0 %v437
    %v1810 = vpop.f32.mrf.mxu0
    %v1811 = vadd.f32 %v1798, %v1810
    %v1812 = vpop.f32.mrf.mxu0
    %1813 = vdwg.mxu0
    %1814 = vmatpush.bf16.msra.mxu0 %v1366
    %1815 = vmatpush.bf16.msra.mxu0 %v1365
    %1816 = vmatpush.bf16.msra.mxu0 %v1364
    %1817 = vmatpush.bf16.msra.mxu0 %v1363
    %1818 = vmatpush.bf16.msra.mxu0 %v1362
    %1819 = vmatpush.bf16.msra.mxu0 %v1361
    %1820 = vmatpush.bf16.msra.mxu0 %v1360
    %1821 = vmatpush.bf16.msra.mxu0 %v1359
    %1822 = vmatmul.bf16.gmra.mxu0 %v438
    %v1823 = vpop.f32.mrf.mxu0
    %v1824 = vadd.f32 %v1811, %v1823
    %v1825 = vpop.f32.mrf.mxu0
    %1826 = vdwg.mxu0
    %1827 = vmatpush.bf16.msra.mxu0 %v1374
    %1828 = vmatpush.bf16.msra.mxu0 %v1373
    %1829 = vmatpush.bf16.msra.mxu0 %v1372
    %1830 = vmatpush.bf16.msra.mxu0 %v1371
    %1831 = vmatpush.bf16.msra.mxu0 %v1370
    %1832 = vmatpush.bf16.msra.mxu0 %v1369
    %1833 = vmatpush.bf16.msra.mxu0 %v1368
    %1834 = vmatpush.bf16.msra.mxu0 %v1367
    %1835 = vmatmul.bf16.gmra.mxu0 %v439
    %v1836 = vpop.f32.mrf.mxu0
    %v1837 = vadd.f32 %v1824, %v1836
    %v1838 = vpop.f32.mrf.mxu0
    %1839 = vdwg.mxu0
    %1840 = vmatpush.bf16.msra.mxu0 %v1382
    %1841 = vmatpush.bf16.msra.mxu0 %v1381
    %1842 = vmatpush.bf16.msra.mxu0 %v1380
    %1843 = vmatpush.bf16.msra.mxu0 %v1379
    %1844 = vmatpush.bf16.msra.mxu0 %v1378
    %1845 = vmatpush.bf16.msra.mxu0 %v1377
    %1846 = vmatpush.bf16.msra.mxu0 %v1376
    %1847 = vmatpush.bf16.msra.mxu0 %v1375
    %1848 = vmatmul.bf16.gmra.mxu0 %v440
    %v1849 = vpop.f32.mrf.mxu0
    %v1850 = vadd.f32 %v1837, %v1849
    %v1851 = vpop.f32.mrf.mxu0
    %1852 = vdwg.mxu0
    %1853 = vmatpush.bf16.msra.mxu0 %v1390
    %1854 = vmatpush.bf16.msra.mxu0 %v1389
    %1855 = vmatpush.bf16.msra.mxu0 %v1388
    %1856 = vmatpush.bf16.msra.mxu0 %v1387
    %1857 = vmatpush.bf16.msra.mxu0 %v1386
    %1858 = vmatpush.bf16.msra.mxu0 %v1385
    %1859 = vmatpush.bf16.msra.mxu0 %v1384
    %1860 = vmatpush.bf16.msra.mxu0 %v1383
    %1861 = vmatmul.bf16.gmra.mxu0 %v441
    %v1862 = vpop.f32.mrf.mxu0
    %v1863 = vadd.f32 %v1850, %v1862
    %v1864 = vpop.f32.mrf.mxu0
    %1865 = vdwg.mxu0
    %1866 = vmatpush.bf16.msra.mxu0 %v1398
    %1867 = vmatpush.bf16.msra.mxu0 %v1397
    %1868 = vmatpush.bf16.msra.mxu0 %v1396
    %1869 = vmatpush.bf16.msra.mxu0 %v1395
    %1870 = vmatpush.bf16.msra.mxu0 %v1394
    %1871 = vmatpush.bf16.msra.mxu0 %v1393
    %1872 = vmatpush.bf16.msra.mxu0 %v1392
    %1873 = vmatpush.bf16.msra.mxu0 %v1391
    %1874 = vmatmul.bf16.gmra.mxu0 %v444
    %v1875 = vpop.f32.mrf.mxu0
    %v1876 = vadd.f32 %v1863, %v1875
    %v1877 = vpop.f32.mrf.mxu0
    %1878 = vdwg.mxu0
    %1879 = vmatpush.bf16.msra.mxu0 %v1406
    %1880 = vmatpush.bf16.msra.mxu0 %v1405
    %1881 = vmatpush.bf16.msra.mxu0 %v1404
    %1882 = vmatpush.bf16.msra.mxu0 %v1403
    %1883 = vmatpush.bf16.msra.mxu0 %v1402
    %1884 = vmatpush.bf16.msra.mxu0 %v1401
    %1885 = vmatpush.bf16.msra.mxu0 %v1400
    %1886 = vmatpush.bf16.msra.mxu0 %v1399
    %1887 = vmatmul.bf16.gmra.mxu0 %v445
    %v1888 = vpop.f32.mrf.mxu0
    %v1889 = vadd.f32 %v1876, %v1888
    %v1890 = vpop.f32.mrf.mxu0
    %1891 = vdwg.mxu0
    %1892 = vmatpush.bf16.msra.mxu0 %v1414
    %1893 = vmatpush.bf16.msra.mxu0 %v1413
    %1894 = vmatpush.bf16.msra.mxu0 %v1412
    %1895 = vmatpush.bf16.msra.mxu0 %v1411
    %1896 = vmatpush.bf16.msra.mxu0 %v1410
    %1897 = vmatpush.bf16.msra.mxu0 %v1409
    %1898 = vmatpush.bf16.msra.mxu0 %v1408
    %1899 = vmatpush.bf16.msra.mxu0 %v1407
    %1900 = vmatmul.bf16.gmra.mxu0 %v446
    %v1901 = vpop.f32.mrf.mxu0
    %v1902 = vadd.f32 %v1889, %v1901
    %v1903 = vpop.f32.mrf.mxu0
    %1904 = vdwg.mxu0
    %1905 = vmatpush.bf16.msra.mxu0 %v1422
    %1906 = vmatpush.bf16.msra.mxu0 %v1421
    %1907 = vmatpush.bf16.msra.mxu0 %v1420
    %1908 = vmatpush.bf16.msra.mxu0 %v1419
    %1909 = vmatpush.bf16.msra.mxu0 %v1418
    %1910 = vmatpush.bf16.msra.mxu0 %v1417
    %1911 = vmatpush.bf16.msra.mxu0 %v1416
    %1912 = vmatpush.bf16.msra.mxu0 %v1415
    %1913 = vmatmul.bf16.gmra.mxu0 %v447
    %v1914 = vpop.f32.mrf.mxu0
    %v1915 = vadd.f32 %v1902, %v1914
    %v1916 = vpop.f32.mrf.mxu0
    %1917 = vdwg.mxu0
    %1918 = vmatpush.bf16.msra.mxu0 %v1430
    %1919 = vmatpush.bf16.msra.mxu0 %v1429
    %1920 = vmatpush.bf16.msra.mxu0 %v1428
    %1921 = vmatpush.bf16.msra.mxu0 %v1427
    %1922 = vmatpush.bf16.msra.mxu0 %v1426
    %1923 = vmatpush.bf16.msra.mxu0 %v1425
    %1924 = vmatpush.bf16.msra.mxu0 %v1424
    %1925 = vmatpush.bf16.msra.mxu0 %v1423
    %1926 = vmatmul.bf16.gmra.mxu0 %v448
    %v1927 = vpop.f32.mrf.mxu0
    %v1928 = vadd.f32 %v1915, %v1927
    %v1929 = vpop.f32.mrf.mxu0
    %1930 = vdwg.mxu0
    %1931 = vmatpush.bf16.msra.mxu0 %v1438
    %1932 = vmatpush.bf16.msra.mxu0 %v1437
    %1933 = vmatpush.bf16.msra.mxu0 %v1436
    %1934 = vmatpush.bf16.msra.mxu0 %v1435
    %1935 = vmatpush.bf16.msra.mxu0 %v1434
    %1936 = vmatpush.bf16.msra.mxu0 %v1433
    %1937 = vmatpush.bf16.msra.mxu0 %v1432
    %1938 = vmatpush.bf16.msra.mxu0 %v1431
    %1939 = vmatmul.bf16.gmra.mxu0 %v449
    %v1940 = vpop.f32.mrf.mxu0
    %v1941 = vadd.f32 %v1928, %v1940
    %v1942 = vpop.f32.mrf.mxu0
    %1943 = vdwg.mxu0
    %1944 = vmatpush.bf16.msra.mxu0 %v1446
    %1945 = vmatpush.bf16.msra.mxu0 %v1445
    %1946 = vmatpush.bf16.msra.mxu0 %v1444
    %1947 = vmatpush.bf16.msra.mxu0 %v1443
    %1948 = vmatpush.bf16.msra.mxu0 %v1442
    %1949 = vmatpush.bf16.msra.mxu0 %v1441
    %1950 = vmatpush.bf16.msra.mxu0 %v1440
    %1951 = vmatpush.bf16.msra.mxu0 %v1439
    %1952 = vmatmul.bf16.gmra.mxu0 %v450
    %v1953 = vpop.f32.mrf.mxu0
    %v1954 = vadd.f32 %v1941, %v1953
    %v1955 = vpop.f32.mrf.mxu0
    %1956 = vdwg.mxu0
    %1957 = vmatpush.bf16.msra.mxu0 %v1454
    %1958 = vmatpush.bf16.msra.mxu0 %v1453
    %1959 = vmatpush.bf16.msra.mxu0 %v1452
    %1960 = vmatpush.bf16.msra.mxu0 %v1451
    %1961 = vmatpush.bf16.msra.mxu0 %v1450
    %1962 = vmatpush.bf16.msra.mxu0 %v1449
    %1963 = vmatpush.bf16.msra.mxu0 %v1448
    %1964 = vmatpush.bf16.msra.mxu0 %v1447
    %1965 = vmatmul.bf16.gmra.mxu0 %v451
    %v1966 = vpop.f32.mrf.mxu0
    %v1967 = vadd.f32 %v1954, %v1966
    %v1968 = vpop.f32.mrf.mxu0
    %1969 = vdwg.mxu0
    %1970 = vmatpush.bf16.msra.mxu0 0
    %1971 = vmatpush.bf16.msra.mxu0 0
    %1972 = vmatpush.bf16.msra.mxu0 0
    %1973 = vmatpush.bf16.msra.mxu0 0
    %1974 = vmatpush.bf16.msra.mxu0 %v1458
    %1975 = vmatpush.bf16.msra.mxu0 %v1457
    %1976 = vmatpush.bf16.msra.mxu0 %v1456
    %1977 = vmatpush.bf16.msra.mxu0 %v1455
    %1978 = vmatmul.bf16.gmra.mxu0 %v1656
    %v1979 = vpop.f32.mrf.mxu0
    %v1980 = vadd.f32 %v1967, %v1979
    %v1981 = vpop.f32.mrf.mxu0
    %1982 = vdwg.mxu0
    %v1983 = vmax.f32 %v1980, 0.0
    %v1984 = vpack.c.bf16 %v1983, %v1983
    %v1985 = vld [vmem:[%s3] sm:$0xf]
    %v1986 = vld [vmem:[%s3 + $0x4] sm:$0xf]
    %v1987 = vld [vmem:[%s3 + $0x8] sm:$0xf]
    %v1988 = vld [vmem:[%s3 + $0xc] sm:$0xf]
    %v1989 = vld [vmem:[%s3 + $0x10] sm:$0xf]
    %v1990 = vld [vmem:[%s3 + $0x14] sm:$0xf]
    %v1991 = vld [vmem:[%s3 + $0x18] sm:$0xf]
    %v1992 = vld [vmem:[%s3 + $0x1c] sm:$0xf]
    %v1993 = vld [vmem:[%s3 + $0x20] sm:$0xf]
    %v1994 = vld [vmem:[%s3 + $0x24] sm:$0xf]
    %v1995 = vld [vmem:[%s3 + $0x28] sm:$0xf]
    %v1996 = vld [vmem:[%s3 + $0x2c] sm:$0xf]
    %v1997 = vld [vmem:[%s3 + $0x30] sm:$0xf]
    %v1998 = vld [vmem:[%s3 + $0x34] sm:$0xf]
    %v1999 = vld [vmem:[%s3 + $0x38] sm:$0xf]
    %v2000 = vld [vmem:[%s3 + $0x3c] sm:$0xf]
    %v2001 = vld [vmem:[%s4] sm:$0x1]
    %v2003 = vperm.slane %v2001, 0
    %v2021 = vunpack.c.l.b16 %v1985
    %v2022 = vunpack.c.l.b16 %v1986
    %v2023 = vunpack.c.l.b16 %v1987
    %v2024 = vunpack.c.l.b16 %v1988
    %v2025 = vunpack.c.l.b16 %v1989
    %v2026 = vunpack.c.l.b16 %v1990
    %v2027 = vunpack.c.l.b16 %v1991
    %v2028 = vunpack.c.l.b16 %v1992
    %v2029 = vunpack.c.l.b16 %v1993
    %v2030 = vunpack.c.l.b16 %v1994
    %v2031 = vunpack.c.l.b16 %v1995
    %v2032 = vunpack.c.l.b16 %v1996
    %v2033 = vunpack.c.l.b16 %v1997
    %v2034 = vunpack.c.l.b16 %v1998
    %v2035 = vunpack.c.l.b16 %v1999
    %v2036 = vunpack.c.l.b16 %v2000
    %v2037 = vpack.c.b16 %v2022, %v2021
    %v2038 = vpack.c.b16 %v2024, %v2023
    %v2039 = vpack.c.b16 %v2026, %v2025
    %v2040 = vpack.c.b16 %v2028, %v2027
    %v2041 = vpack.c.b16 %v2030, %v2029
    %v2042 = vpack.c.b16 %v2032, %v2031
    %v2043 = vpack.c.b16 %v2034, %v2033
    %v2044 = vpack.c.b16 %v2036, %v2035
    %2053 = vmatpush.bf16.msra.mxu0 %v2044
    %2054 = vmatpush.bf16.msra.mxu0 %v2043
    %2055 = vmatpush.bf16.msra.mxu0 %v2042
    %2056 = vmatpush.bf16.msra.mxu0 %v2041
    %2057 = vmatpush.bf16.msra.mxu0 %v2040
    %2058 = vmatpush.bf16.msra.mxu0 %v2039
    %2059 = vmatpush.bf16.msra.mxu0 %v2038
    %2060 = vmatpush.bf16.msra.mxu0 %v2037
    %2061 = vmatmul.bf16.gmra.mxu0 %v1984
    %v2062 = vpop.f32.mrf.mxu0
    %v2063 = vadd.f32 %v2003, %v2062
    %v2064 = vpop.f32.mrf.mxu0
    %2065 = vdwg.mxu0
    %vm2066 = vcmask 74752
    %2067 = vst.msk [vmem:[#allocation2] sm:$0x3] %vm2066, %v2063
    // Predicated region
    $region22: #{cnn_forward.5} parent=1 // pred_check
      _
    $region23: #{cnn_forward.5} parent=1 // pred_check_branch
      %2069 = sbr.rel (0) target = $region25
    $region24: #{cnn_forward.5} parent=1 // pred_region
      %2071 = vsyncadd [#allocation3], 0
      %s2073 = sshll.u32 [#allocation2], 4
      %s2074 = int_to_ptr.vmem [resolvable:$true] %s2073
      %s2075 = sshll.u32 %s5, 4
      %s2076 = int_to_ptr.hbm [resolvable:$true] %s2075
      %2078 = dma.vmem_to_hbm [thread:$0]  %s2074, 32, %s2076, [#allocation3]
    $region25: #{cnn_forward.5} parent=1 // pred_fallthru
      _
    // Predicated region
    $region26: #{cnn_forward.5} parent=1 // pred_check
      _
    $region27: #{cnn_forward.5} parent=1 // pred_check_branch
      %2080 = sbr.rel (0) target = $region29
    $region28: #{cnn_forward.5} parent=1 // pred_region
      %2082 = dma.done [#allocation3], 32
    $region29: #{cnn_forward.5} parent=1 // pred_fallthru
      _
    %2083 = vsyncpa [#allocation3], 1

</llo_original>
